<compile_context>
chip_gen: v7x
topology: tpu7x:2x2x1
jax: 0.10.0
libtpu: 0.0.40
codegen_flags: <defaults>
</compile_context>

<pallas_src>
import functools

import jax
import jax.numpy as jnp
from jax import lax
from jax.experimental import pallas as pl
from jax.experimental.pallas import tpu as pltpu


def _psconv_kernel(x_ref, w_ref, o_ref, col_ref, *,
                   H, W, C_in, C_out, K, paths):
    """One batch element per grid step.

    x_ref  : (1, H+2*mp, W+2*mp, C_in)   single padded NHWC input
    w_ref  : (P*K*K*C_in, C_out)         stacked per-path/per-tap dense weights
    o_ref  : (1, C_out, H*W)             lane-dense, NCHW-flat output
    col_ref: (H, W, P*K*K*C_in)          im2col scratch (input dtype)
    """
    xv = x_ref[0]                                   # (Hp, Wp, Cin), no upcast
    idx = 0
    for dil, off in paths:                          # static per-path geometry
        for kh in range(K):
            r0 = off + kh * dil
            for kw in range(K):
                c0 = off + kw * dil
                col_ref[:, :, idx * C_in:(idx + 1) * C_in] = \
                    xv[r0:r0 + H, c0:c0 + W, :]
                idx += 1

    cols = col_ref[...].reshape(H * W, idx * C_in)  # contiguous collapse
    # Single deep matmul: the MXU accumulates over all paths and taps
    # internally (no per-tap VALU acc read-modify-write passes).
    acc = jnp.dot(cols, w_ref[...], preferred_element_type=jnp.float32)
    # (H*W, C_out) -> (C_out, H*W): lane-dense stores + directly NCHW-flat.
    o_ref[0] = acc.T.astype(o_ref.dtype)


def _grouped_to_dense(wg, c_in, c_out, parts):
    """(C_out, C_in//parts, K, K) grouped weight -> block-diag (C_out, C_in, K, K)."""
    cinp = c_in // parts
    coutp = c_out // parts
    K = wg.shape[-1]
    dense = jnp.zeros((c_out, c_in, K, K), wg.dtype)
    for g in range(parts):
        dense = dense.at[g * coutp:(g + 1) * coutp,
                         g * cinp:(g + 1) * cinp].set(wg[g * coutp:(g + 1) * coutp])
    return dense


def psconv2d_pallas(x_nchw, w_gw, w_shift, w_conv_masked, *,
                    kernel_size=3, stride=1, padding=1, dilation=1, parts=4):
    N, C_in, H, W = x_nchw.shape
    C_out = w_gw.shape[0]
    K = kernel_size
    d = dilation

    assert stride == 1, "only stride=1 implemented"  # TODO(synk): strided variant
    assert K == 3 and padding == 1, "PSConv2d 'same' geometry requires K=3, padding=1"
    assert C_in % parts == 0 and C_out % parts == 0 and C_in % 2 == 0

    # ---- weight prep (trace-time, zero runtime cost) ----
    wg_d = _grouped_to_dense(w_gw, C_in, C_out, parts)
    ws_d = _grouped_to_dense(w_shift, C_in, C_out, parts)
    # Fold the input half-channel rotation cat(x2, x1) into the shift weight.
    ws_d = jnp.roll(ws_d, C_in // 2, axis=1)
    wc_d = w_conv_masked                             # already dense + masked

    max_pad = 2 * d
    if d == 1:
        # gwconv (dil 1, pad 1) and masked dense conv (dil 1, pad 1) share
        # identical tap geometry -> merge into one path.
        path_ws = [wg_d + wc_d, ws_d]
        path_geom = ((1, max_pad - 1), (2 * d, 0))          # (dilation, offset)
    else:
        path_ws = [wg_d, ws_d, wc_d]
        path_geom = ((d, max_pad - d), (2 * d, 0), (1, max_pad - padding))

    # OIHW -> (K, K, Cin, Cout) -> (K*K*Cin, Cout), stacked along contraction.
    w_big = jnp.concatenate(
        [jnp.transpose(wd, (2, 3, 1, 0)).reshape(K * K * C_in, C_out)
         for wd in path_ws], axis=0).astype(x_nchw.dtype)
    n_taps = len(path_geom) * K * K

    # ---- activation prep: one padded NHWC buffer ----
    x = jnp.transpose(x_nchw, (0, 2, 3, 1))          # NCHW -> NHWC
    xp = jnp.pad(x, ((0, 0), (max_pad, max_pad), (max_pad, max_pad), (0, 0)))
    Hp, Wp = H + 2 * max_pad, W + 2 * max_pad

    kernel = functools.partial(_psconv_kernel, H=H, W=W, C_in=C_in,
                               C_out=C_out, K=K, paths=path_geom)

    out = pl.pallas_call(
        kernel,
        out_shape=jax.ShapeDtypeStruct((N, C_out, H * W), x.dtype),
        grid_spec=pltpu.PrefetchScalarGridSpec(
            num_scalar_prefetch=0,
            grid=(N,),
            in_specs=[
                pl.BlockSpec((1, Hp, Wp, C_in), lambda n: (n, 0, 0, 0)),
                pl.BlockSpec(w_big.shape, lambda n: (0, 0)),
            ],
            out_specs=pl.BlockSpec((1, C_out, H * W), lambda n: (n, 0, 0)),
            scratch_shapes=[pltpu.VMEM((H, W, n_taps * C_in), x.dtype)],
        ),
        compiler_params=pltpu.CompilerParams(
            dimension_semantics=("parallel",)),
    )(xp, w_big)

    return out.reshape(N, C_out, H, W)               # already NCHW


def _reference(x, w_gw, w_shift, w_conv, *, parts, dilation, padding):
    """Plain-JAX replica of the PyTorch forward for verification (NCHW)."""
    dn = ('NCHW', 'OIHW', 'NCHW')
    d = dilation
    gw = lax.conv_general_dilated(x, w_gw, (1, 1), [(d, d), (d, d)],
                                  rhs_dilation=(d, d), dimension_numbers=dn,
                                  feature_group_count=parts)
    half = x.shape[1] // 2
    x_rot = jnp.concatenate([x[:, half:], x[:, :half]], axis=1)
    sh = lax.conv_general_dilated(x_rot, w_shift, (1, 1),
                                  [(2 * d, 2 * d), (2 * d, 2 * d)],
                                  rhs_dilation=(2 * d, 2 * d),
                                  dimension_numbers=dn,
                                  feature_group_count=parts)
    cv = lax.conv_general_dilated(x, w_conv, (1, 1),
                                  [(padding, padding), (padding, padding)],
                                  dimension_numbers=dn)
    return gw + cv + sh


if __name__ == "__main__":
    # Small, PSConv2d-consistent shapes: channels divisible by parts=4 and even.
    N, C_in, C_out, H, W = 2, 8, 8, 16, 16
    parts, K, dilation, padding = 4, 3, 1, 1

    key = jax.random.PRNGKey(0)
    k1, k2, k3, k4 = jax.random.split(key, 4)

    x = jax.random.normal(k1, (N, C_in, H, W), jnp.float32)

    # Parameter init (deterministic, synthetic).  Shapes match nn.Conv2d:
    # grouped convs: (C_out, C_in // parts, K, K); dense conv: (C_out, C_in, K, K)
    scale = 1.0 / (C_in * K * K) ** 0.5
    w_gw = scale * jax.random.normal(k2, (C_out, C_in // parts, K, K), jnp.float32)
    w_shift = scale * jax.random.normal(k3, (C_out, C_in // parts, K, K), jnp.float32)
    w_conv = scale * jax.random.normal(k4, (C_out, C_in, K, K), jnp.float32)

    # Apply PSConv2d's __init__ mask: zero the diagonal + shifted-diagonal blocks.
    cinp, coutp = C_in // parts, C_out // parts
    mask = jnp.zeros((C_out, C_in, K, K), bool)
    for i in range(parts):
        mask = mask.at[i * coutp:(i + 1) * coutp,
                       i * cinp:(i + 1) * cinp].set(True)
        j = (i + parts // 2) % parts
        mask = mask.at[j * coutp:(j + 1) * coutp,
                       i * cinp:(i + 1) * cinp].set(True)
    w_conv = jnp.where(mask, 0.0, w_conv)

    out = psconv2d_pallas(x, w_gw, w_shift, w_conv,
                          kernel_size=K, stride=1, padding=padding,
                          dilation=dilation, parts=parts)
    out = jax.block_until_ready(out)

    ref = _reference(x, w_gw, w_shift, w_conv,
                     parts=parts, dilation=dilation, padding=padding)
    ref = jax.block_until_ready(ref)

    assert out.shape == (N, C_out, H, W), out.shape
    max_err = float(jnp.max(jnp.abs(out - ref)))
    assert max_err < 1e-4, f"mismatch vs reference, max abs err = {max_err}"

    print("KERNEL_OK")
</pallas_src>

<mosaic_0001>
module attributes {stable_mosaic.version = 11 : i64} {
  func.func @_psconv_kernel(%arg0: i32, %arg1: memref<1x20x20x8xf32, #tpu.memory_space<vmem>>, %arg2: memref<144x8xf32, #tpu.memory_space<vmem>>, %arg3: memref<1x8x256xf32, #tpu.memory_space<vmem>>, %arg4: memref<16x16x144xf32, #tpu.memory_space<vmem>>) attributes {dimension_semantics = [#tpu.dimension_semantics<parallel>], iteration_bounds = array<i64: 2>, scalar_prefetch = 0 : i64, scratch_operands = 1 : i64, tpu.core_type = #tpu.core_type<tc>, window_params = [{transform_indices = @transform_0, window_bounds = array<i64: 1, 20, 20, 8>}, {pipeline_mode = #tpu.pipeline_mode<synchronous>, transform_indices = @transform_1, window_bounds = array<i64: 144, 8>}, {transform_indices = @transform_2, window_bounds = array<i64: 1, 8, 256>}]} {
    %c0 = arith.constant 0 : index
    %c0_0 = arith.constant 0 : index
    %c0_1 = arith.constant 0 : index
    %c0_2 = arith.constant 0 : index
    %0 = vector.load %arg1[%c0, %c0_0, %c0_1, %c0_2] : memref<1x20x20x8xf32, #tpu.memory_space<vmem>>, vector<1x20x20x8xf32>
    %1 = vector.shape_cast %0 : vector<1x20x20x8xf32> to vector<20x20x8xf32>
    %2 = vector.extract_strided_slice %1 {offsets = [1, 1, 0], sizes = [16, 16, 8], strides = [1, 1, 1]} : vector<20x20x8xf32> to vector<16x16x8xf32>
    %c0_3 = arith.constant 0 : index
    %c0_4 = arith.constant 0 : index
    %c0_5 = arith.constant 0 : index
    %3 = vector.load %arg4[%c0_3, %c0_4, %c0_5] : memref<16x16x144xf32, #tpu.memory_space<vmem>>, vector<16x16x8xf32>
    tpu.vector_store %arg4[%c0_3, %c0_4, %c0_5], %2 {strides = array<i32>} : memref<16x16x144xf32, #tpu.memory_space<vmem>>, vector<16x16x8xf32>,
    %4 = vector.extract_strided_slice %1 {offsets = [1, 2, 0], sizes = [16, 16, 8], strides = [1, 1, 1]} : vector<20x20x8xf32> to vector<16x16x8xf32>
    %c0_6 = arith.constant 0 : index
    %c0_7 = arith.constant 0 : index
    %c8 = arith.constant 8 : index
    %5 = vector.load %arg4[%c0_6, %c0_7, %c8] : memref<16x16x144xf32, #tpu.memory_space<vmem>>, vector<16x16x8xf32>
    tpu.vector_store %arg4[%c0_6, %c0_7, %c8], %4 {strides = array<i32>} : memref<16x16x144xf32, #tpu.memory_space<vmem>>, vector<16x16x8xf32>,
    %6 = vector.extract_strided_slice %1 {offsets = [1, 3, 0], sizes = [16, 16, 8], strides = [1, 1, 1]} : vector<20x20x8xf32> to vector<16x16x8xf32>
    %c0_8 = arith.constant 0 : index
    %c0_9 = arith.constant 0 : index
    %c16 = arith.constant 16 : index
    %7 = vector.load %arg4[%c0_8, %c0_9, %c16] : memref<16x16x144xf32, #tpu.memory_space<vmem>>, vector<16x16x8xf32>
    tpu.vector_store %arg4[%c0_8, %c0_9, %c16], %6 {strides = array<i32>} : memref<16x16x144xf32, #tpu.memory_space<vmem>>, vector<16x16x8xf32>,
    %8 = vector.extract_strided_slice %1 {offsets = [2, 1, 0], sizes = [16, 16, 8], strides = [1, 1, 1]} : vector<20x20x8xf32> to vector<16x16x8xf32>
    %c0_10 = arith.constant 0 : index
    %c0_11 = arith.constant 0 : index
    %c24 = arith.constant 24 : index
    %9 = vector.load %arg4[%c0_10, %c0_11, %c24] : memref<16x16x144xf32, #tpu.memory_space<vmem>>, vector<16x16x8xf32>
    tpu.vector_store %arg4[%c0_10, %c0_11, %c24], %8 {strides = array<i32>} : memref<16x16x144xf32, #tpu.memory_space<vmem>>, vector<16x16x8xf32>,
    %10 = vector.extract_strided_slice %1 {offsets = [2, 2, 0], sizes = [16, 16, 8], strides = [1, 1, 1]} : vector<20x20x8xf32> to vector<16x16x8xf32>
    %c0_12 = arith.constant 0 : index
    %c0_13 = arith.constant 0 : index
    %c32 = arith.constant 32 : index
    %11 = vector.load %arg4[%c0_12, %c0_13, %c32] : memref<16x16x144xf32, #tpu.memory_space<vmem>>, vector<16x16x8xf32>
    tpu.vector_store %arg4[%c0_12, %c0_13, %c32], %10 {strides = array<i32>} : memref<16x16x144xf32, #tpu.memory_space<vmem>>, vector<16x16x8xf32>,
    %12 = vector.extract_strided_slice %1 {offsets = [2, 3, 0], sizes = [16, 16, 8], strides = [1, 1, 1]} : vector<20x20x8xf32> to vector<16x16x8xf32>
    %c0_14 = arith.constant 0 : index
    %c0_15 = arith.constant 0 : index
    %c40 = arith.constant 40 : index
    %13 = vector.load %arg4[%c0_14, %c0_15, %c40] : memref<16x16x144xf32, #tpu.memory_space<vmem>>, vector<16x16x8xf32>
    tpu.vector_store %arg4[%c0_14, %c0_15, %c40], %12 {strides = array<i32>} : memref<16x16x144xf32, #tpu.memory_space<vmem>>, vector<16x16x8xf32>,
    %14 = vector.extract_strided_slice %1 {offsets = [3, 1, 0], sizes = [16, 16, 8], strides = [1, 1, 1]} : vector<20x20x8xf32> to vector<16x16x8xf32>
    %c0_16 = arith.constant 0 : index
    %c0_17 = arith.constant 0 : index
    %c48 = arith.constant 48 : index
    %15 = vector.load %arg4[%c0_16, %c0_17, %c48] : memref<16x16x144xf32, #tpu.memory_space<vmem>>, vector<16x16x8xf32>
    tpu.vector_store %arg4[%c0_16, %c0_17, %c48], %14 {strides = array<i32>} : memref<16x16x144xf32, #tpu.memory_space<vmem>>, vector<16x16x8xf32>,
    %16 = vector.extract_strided_slice %1 {offsets = [3, 2, 0], sizes = [16, 16, 8], strides = [1, 1, 1]} : vector<20x20x8xf32> to vector<16x16x8xf32>
    %c0_18 = arith.constant 0 : index
    %c0_19 = arith.constant 0 : index
    %c56 = arith.constant 56 : index
    %17 = vector.load %arg4[%c0_18, %c0_19, %c56] : memref<16x16x144xf32, #tpu.memory_space<vmem>>, vector<16x16x8xf32>
    tpu.vector_store %arg4[%c0_18, %c0_19, %c56], %16 {strides = array<i32>} : memref<16x16x144xf32, #tpu.memory_space<vmem>>, vector<16x16x8xf32>,
    %18 = vector.extract_strided_slice %1 {offsets = [3, 3, 0], sizes = [16, 16, 8], strides = [1, 1, 1]} : vector<20x20x8xf32> to vector<16x16x8xf32>
    %c0_20 = arith.constant 0 : index
    %c0_21 = arith.constant 0 : index
    %c64 = arith.constant 64 : index
    %19 = vector.load %arg4[%c0_20, %c0_21, %c64] : memref<16x16x144xf32, #tpu.memory_space<vmem>>, vector<16x16x8xf32>
    tpu.vector_store %arg4[%c0_20, %c0_21, %c64], %18 {strides = array<i32>} : memref<16x16x144xf32, #tpu.memory_space<vmem>>, vector<16x16x8xf32>,
    %20 = vector.extract_strided_slice %1 {offsets = [0, 0, 0], sizes = [16, 16, 8], strides = [1, 1, 1]} : vector<20x20x8xf32> to vector<16x16x8xf32>
    %c0_22 = arith.constant 0 : index
    %c0_23 = arith.constant 0 : index
    %c72 = arith.constant 72 : index
    %21 = vector.load %arg4[%c0_22, %c0_23, %c72] : memref<16x16x144xf32, #tpu.memory_space<vmem>>, vector<16x16x8xf32>
    tpu.vector_store %arg4[%c0_22, %c0_23, %c72], %20 {strides = array<i32>} : memref<16x16x144xf32, #tpu.memory_space<vmem>>, vector<16x16x8xf32>,
    %22 = vector.extract_strided_slice %1 {offsets = [0, 2, 0], sizes = [16, 16, 8], strides = [1, 1, 1]} : vector<20x20x8xf32> to vector<16x16x8xf32>
    %c0_24 = arith.constant 0 : index
    %c0_25 = arith.constant 0 : index
    %c80 = arith.constant 80 : index
    %23 = vector.load %arg4[%c0_24, %c0_25, %c80] : memref<16x16x144xf32, #tpu.memory_space<vmem>>, vector<16x16x8xf32>
    tpu.vector_store %arg4[%c0_24, %c0_25, %c80], %22 {strides = array<i32>} : memref<16x16x144xf32, #tpu.memory_space<vmem>>, vector<16x16x8xf32>,
    %24 = vector.extract_strided_slice %1 {offsets = [0, 4, 0], sizes = [16, 16, 8], strides = [1, 1, 1]} : vector<20x20x8xf32> to vector<16x16x8xf32>
    %c0_26 = arith.constant 0 : index
    %c0_27 = arith.constant 0 : index
    %c88 = arith.constant 88 : index
    %25 = vector.load %arg4[%c0_26, %c0_27, %c88] : memref<16x16x144xf32, #tpu.memory_space<vmem>>, vector<16x16x8xf32>
    tpu.vector_store %arg4[%c0_26, %c0_27, %c88], %24 {strides = array<i32>} : memref<16x16x144xf32, #tpu.memory_space<vmem>>, vector<16x16x8xf32>,
    %26 = vector.extract_strided_slice %1 {offsets = [2, 0, 0], sizes = [16, 16, 8], strides = [1, 1, 1]} : vector<20x20x8xf32> to vector<16x16x8xf32>
    %c0_28 = arith.constant 0 : index
    %c0_29 = arith.constant 0 : index
    %c96 = arith.constant 96 : index
    %27 = vector.load %arg4[%c0_28, %c0_29, %c96] : memref<16x16x144xf32, #tpu.memory_space<vmem>>, vector<16x16x8xf32>
    tpu.vector_store %arg4[%c0_28, %c0_29, %c96], %26 {strides = array<i32>} : memref<16x16x144xf32, #tpu.memory_space<vmem>>, vector<16x16x8xf32>,
    %28 = vector.extract_strided_slice %1 {offsets = [2, 2, 0], sizes = [16, 16, 8], strides = [1, 1, 1]} : vector<20x20x8xf32> to vector<16x16x8xf32>
    %c0_30 = arith.constant 0 : index
    %c0_31 = arith.constant 0 : index
    %c104 = arith.constant 104 : index
    %29 = vector.load %arg4[%c0_30, %c0_31, %c104] : memref<16x16x144xf32, #tpu.memory_space<vmem>>, vector<16x16x8xf32>
    tpu.vector_store %arg4[%c0_30, %c0_31, %c104], %28 {strides = array<i32>} : memref<16x16x144xf32, #tpu.memory_space<vmem>>, vector<16x16x8xf32>,
    %30 = vector.extract_strided_slice %1 {offsets = [2, 4, 0], sizes = [16, 16, 8], strides = [1, 1, 1]} : vector<20x20x8xf32> to vector<16x16x8xf32>
    %c0_32 = arith.constant 0 : index
    %c0_33 = arith.constant 0 : index
    %c112 = arith.constant 112 : index
    %31 = vector.load %arg4[%c0_32, %c0_33, %c112] : memref<16x16x144xf32, #tpu.memory_space<vmem>>, vector<16x16x8xf32>
    tpu.vector_store %arg4[%c0_32, %c0_33, %c112], %30 {strides = array<i32>} : memref<16x16x144xf32, #tpu.memory_space<vmem>>, vector<16x16x8xf32>,
    %32 = vector.extract_strided_slice %1 {offsets = [4, 0, 0], sizes = [16, 16, 8], strides = [1, 1, 1]} : vector<20x20x8xf32> to vector<16x16x8xf32>
    %c0_34 = arith.constant 0 : index
    %c0_35 = arith.constant 0 : index
    %c120 = arith.constant 120 : index
    %33 = vector.load %arg4[%c0_34, %c0_35, %c120] : memref<16x16x144xf32, #tpu.memory_space<vmem>>, vector<16x16x8xf32>
    tpu.vector_store %arg4[%c0_34, %c0_35, %c120], %32 {strides = array<i32>} : memref<16x16x144xf32, #tpu.memory_space<vmem>>, vector<16x16x8xf32>,
    %34 = vector.extract_strided_slice %1 {offsets = [4, 2, 0], sizes = [16, 16, 8], strides = [1, 1, 1]} : vector<20x20x8xf32> to vector<16x16x8xf32>
    %c0_36 = arith.constant 0 : index
    %c0_37 = arith.constant 0 : index
    %c128 = arith.constant 128 : index
    %35 = vector.load %arg4[%c0_36, %c0_37, %c128] : memref<16x16x144xf32, #tpu.memory_space<vmem>>, vector<16x16x8xf32>
    tpu.vector_store %arg4[%c0_36, %c0_37, %c128], %34 {strides = array<i32>} : memref<16x16x144xf32, #tpu.memory_space<vmem>>, vector<16x16x8xf32>,
    %36 = vector.extract_strided_slice %1 {offsets = [4, 4, 0], sizes = [16, 16, 8], strides = [1, 1, 1]} : vector<20x20x8xf32> to vector<16x16x8xf32>
    %c0_38 = arith.constant 0 : index
    %c0_39 = arith.constant 0 : index
    %c136 = arith.constant 136 : index
    %37 = vector.load %arg4[%c0_38, %c0_39, %c136] : memref<16x16x144xf32, #tpu.memory_space<vmem>>, vector<16x16x8xf32>
    tpu.vector_store %arg4[%c0_38, %c0_39, %c136], %36 {strides = array<i32>} : memref<16x16x144xf32, #tpu.memory_space<vmem>>, vector<16x16x8xf32>,
    %c0_40 = arith.constant 0 : index
    %c0_41 = arith.constant 0 : index
    %c0_42 = arith.constant 0 : index
    %38 = vector.load %arg4[%c0_40, %c0_41, %c0_42] : memref<16x16x144xf32, #tpu.memory_space<vmem>>, vector<16x16x144xf32>
    %39 = vector.shape_cast %38 : vector<16x16x144xf32> to vector<256x144xf32>
    %c0_43 = arith.constant 0 : index
    %c0_44 = arith.constant 0 : index
    %40 = vector.load %arg2[%c0_43, %c0_44] : memref<144x8xf32, #tpu.memory_space<vmem>>, vector<144x8xf32>
    %cst = arith.constant dense<0.000000e+00> : vector<256x8xf32>
    %41 = tpu.matmul %39, %40, %cst {dimension_numbers = #tpu.dot_dimension_numbers<[1], [0], [0], [1], [0, 0, 1, 1], [], []>} : vector<256x144xf32>, vector<144x8xf32>, vector<256x8xf32> -> vector<256x8xf32>
    %42 = tpu.transpose %41, [1, 0] : vector<256x8xf32> -> vector<8x256xf32>
    %c0_45 = arith.constant 0 : index
    %c0_46 = arith.constant 0 : index
    %c0_47 = arith.constant 0 : index
    %43 = vector.load %arg3[%c0_45, %c0_46, %c0_47] : memref<1x8x256xf32, #tpu.memory_space<vmem>>, vector<1x8x256xf32>
    %44 = vector.shape_cast %43 : vector<1x8x256xf32> to vector<8x256xf32>
    %45 = vector.shape_cast %42 : vector<8x256xf32> to vector<1x8x256xf32>
    tpu.vector_store %arg3[%c0_45, %c0_46, %c0_47], %45 {strides = array<i32>} : memref<1x8x256xf32, #tpu.memory_space<vmem>>, vector<1x8x256xf32>,
    return
  }
  func.func @transform_0(%arg0: i32) -> (i32, i32, i32, i32) {
    %c0_i32 = arith.constant 0 : i32
    %c0_i32_0 = arith.constant 0 : i32
    %c0_i32_1 = arith.constant 0 : i32
    %c0_i32_2 = arith.constant 0 : i32
    return %arg0, %c0_i32, %c0_i32_0, %c0_i32_1 : i32, i32, i32, i32
  }
  func.func @transform_1(%arg0: i32) -> (i32, i32) {
    %c0_i32 = arith.constant 0 : i32
    %c0_i32_0 = arith.constant 0 : i32
    %c0_i32_1 = arith.constant 0 : i32
    return %c0_i32, %c0_i32_0 : i32, i32
  }
  func.func @transform_2(%arg0: i32) -> (i32, i32, i32) {
    %c0_i32 = arith.constant 0 : i32
    %c0_i32_0 = arith.constant 0 : i32
    %c0_i32_1 = arith.constant 0 : i32
    return %arg0, %c0_i32, %c0_i32_0 : i32, i32, i32
  }
}

</mosaic_0001>

<llo_original>
// kernel: tpu_custom_call.1
$region0: #{tpu_custom_call.1}
  #allocation0 [shape = 'u32[]', space=smem, size = 0x4, offset = 0x4, fixed_abs, tag = 'smem constant byte address 0x4 - core index']
  #allocation1 [shape = 'u32[144,128]{1,0:T(1,128)}', space=vmem, size = 0x12000, scoped, tag = 'internal scratch']
  #allocation2 [shape = 'f32[16,16,144]{2,1,0:T(8,128)}', space=vmem, size = 0x40000, scoped, tag = 'scratch operand']
  %s0 = inlined_call_operand.vmem [shape: f32[2,20,20,8], index: 0, kind: input, shape index: {}]
  %s1 = inlined_call_operand.vmem [shape: f32[144,8], index: 1, kind: input, shape index: {}]
  %s2 = inlined_call_operand.hbm [shape: f32[2,8,256], index: 2, kind: output, shape index: {}]
  %s3 = sld [smem:[#allocation0]]
  $region41: #{tpu_custom_call.1} parent=0
    _
  %s5 = ssub.s32 1, %s3
  %s6 = scalar_select 0, %s5, %s3
  $region1: #{tpu_custom_call.1} parent=0
    #allocation3 [shape = 'u8[16384]{0}', space=vmem, size = 0x4000, scoped, tag = 'output window, operand 0']
    #allocation4 [shape = 's32[2]{0}', space=sflag, size = 0x8, scoped, tag = 'scoped memory for tpu_custom_call.1']
    %7 = vsyncpa [#allocation4], 0
    %s8 = scalar_lea.sflag [#allocation4], 1
    %9 = vsyncpa %s8, 0
    loop: start=0, step=1, limit=4
    $region2: #{tpu_custom_call.1} parent=1 // loop_pre_header
      _
    $region3: #{tpu_custom_call.1} parent=1 // loop_header
      %s11 = sphi 0, %s15
      %p12 = scmp.ge.s32.totalorder %s11, 4
      %s21 = sphi 0, %s23
      %s24 = sphi 0, %s21
      %s25 = sphi 0, %s24
      %s41 = sphi 0, %s25
      %s45 = sphi 0, %s45
      %s47 = sphi 0, %s45
      %s48 = sphi 0, %s47
      %s62 = sphi 0, %s48
      %s68 = sphi 0, %s70
      %s71 = sphi 0, %s68
      %s72 = sphi 0, %s71
      %s88 = sphi 0, %s72
    $region4: #{tpu_custom_call.1} parent=1 // loop_header_branch
      %14 = sbr.rel (%p12) target = $region8
    $region5: #{tpu_custom_call.1} parent=1 // loop_body
      %s16 = ssub.s32 %s11, 1
      %s17 = ssub.s32 %s11, 2
      %s18 = sadd.s32 %s11, 1
      %s19 = ssub.s32 %s11, %s18
      %p20 = scmp.eq.s32.totalorder %s19, 0
      %s22 = sadd.s32 %s21, 1
      %s23 = scalar_select %p20, %s21, %s22
      %p26 = pneg %p20
      %p27 = scmp.eq.s32.totalorder %s11, 1
      %p28 = por %p26, %p27
      %p29 = scmp.ne.s32.totalorder %s21, %s24
      %p30 = scmp.eq.s32.totalorder %s11, 0
      %p31 = por %p29, %p30
      %p32 = scmp.ne.s32.totalorder %s21, %s24
      %p33 = scmp.eq.s32.totalorder %s16, 1
      %p34 = por %p32, %p33
      %p35 = scmp.ne.s32.totalorder %s24, %s25
      %p36 = scmp.eq.s32.totalorder %s16, 0
      %p37 = por %p35, %p36
      %p38 = scmp.ne.s32.totalorder %s24, %s25
      %p39 = scmp.eq.s32.totalorder %s17, 1
      %p40 = por %p38, %p39
      %p42 = scmp.ne.s32.totalorder %s25, %s41
      %p43 = scmp.eq.s32.totalorder %s17, 0
      %p44 = por %p42, %p43
      %s46 = sadd.s32 %s45, 1
      %p49 = scmp.eq.s32.totalorder %s11, 1
      %p50 = scmp.ne.s32.totalorder %s45, %s47
      %p51 = scmp.eq.s32.totalorder %s11, 0
      %p52 = por %p50, %p51
      %p53 = scmp.ne.s32.totalorder %s45, %s47
      %p54 = scmp.eq.s32.totalorder %s16, 1
      %p55 = por %p53, %p54
      %p56 = scmp.ne.s32.totalorder %s47, %s48
      %p57 = scmp.eq.s32.totalorder %s16, 0
      %p58 = por %p56, %p57
      %p59 = scmp.ne.s32.totalorder %s47, %s48
      %p60 = scmp.eq.s32.totalorder %s17, 1
      %p61 = por %p59, %p60
      %p63 = scmp.ne.s32.totalorder %s48, %s62
      %p64 = scmp.eq.s32.totalorder %s17, 0
      %p65 = por %p63, %p64
      %s66 = ssub.s32 %s11, %s18
      %p67 = scmp.eq.s32.totalorder %s66, 0
      %s69 = sadd.s32 %s68, 1
      %s70 = scalar_select %p67, %s68, %s69
      %p73 = pneg %p67
      %p74 = scmp.eq.s32.totalorder %s11, 1
      %p75 = por %p73, %p74
      %p76 = scmp.ne.s32.totalorder %s68, %s71
      %p77 = scmp.eq.s32.totalorder %s11, 0
      %p78 = por %p76, %p77
      %p79 = scmp.ne.s32.totalorder %s68, %s71
      %p80 = scmp.eq.s32.totalorder %s16, 1
      %p81 = por %p79, %p80
      %p82 = scmp.ne.s32.totalorder %s71, %s72
      %p83 = scmp.eq.s32.totalorder %s16, 0
      %p84 = por %p82, %p83
      %p85 = scmp.ne.s32.totalorder %s71, %s72
      %p86 = scmp.eq.s32.totalorder %s17, 1
      %p87 = por %p85, %p86
      %p89 = scmp.ne.s32.totalorder %s72, %s88
      %p90 = scmp.eq.s32.totalorder %s17, 0
      %p91 = por %p89, %p90
      %p92 = scmp.le.s32.totalorder 1, %s11
      %p93 = scmp.lt.s32.totalorder %s11, 3
      %p94 = pnand %p92, %p93
      %p95 = pneg %p94
      // Predicated region
      $region9: #{tpu_custom_call.1} parent=5 // pred_check
        _
      $region10: #{tpu_custom_call.1} parent=5 // pred_check_branch
        %97 = sbr.rel (%p94) target = $region12
      $region11: #{tpu_custom_call.1} parent=5 // pred_region
        %s98 = ssub.s32 %s11, 1
        // Predicated region
        $region13: #{tpu_custom_call.1} parent=11 // pred_check
          %p99 = pneg %p58
        $region14: #{tpu_custom_call.1} parent=11 // pred_check_branch
          %101 = sbr.rel (%p99) target = $region16
        $region15: #{tpu_custom_call.1} parent=11 // pred_region
          _
        $region16: #{tpu_custom_call.1} parent=11 // pred_fallthru
          _
      $region12: #{tpu_custom_call.1} parent=5 // pred_fallthru
        _
      %p102 = scmp.lt.s32.totalorder %s11, 2
      // Predicated region
      $region17: #{tpu_custom_call.1} parent=5 // pred_check
        %p103 = pneg %p102
      $region18: #{tpu_custom_call.1} parent=5 // pred_check_branch
        %105 = sbr.rel (%p103) target = $region20
      $region19: #{tpu_custom_call.1} parent=5 // pred_region
        // Predicated region
        $region21: #{tpu_custom_call.1} parent=19 // pred_check
          %p106 = pneg %p31
        $region22: #{tpu_custom_call.1} parent=19 // pred_check_branch
          %108 = sbr.rel (%p106) target = $region24
        $region23: #{tpu_custom_call.1} parent=19 // pred_region
          %p109 = scmp.lt.s32.totalorder %s11, 1
          %s110 = scalar_select %p109, %s11, 1
          %s111 = smul.addr %s110, 60
          %s112 = smul.addr %s111, 8
          %s113 = scalar_lea.vmem %s0, %s112
        $region24: #{tpu_custom_call.1} parent=19 // pred_fallthru
          _
      $region20: #{tpu_custom_call.1} parent=5 // pred_fallthru
        _
      %p114 = scmp.le.s32.totalorder 1, %s11
      %p115 = scmp.lt.s32.totalorder %s11, 3
      %p116 = pnand %p114, %p115
      %p117 = pneg %p116
      // Predicated region
      $region25: #{tpu_custom_call.1} parent=5 // pred_check
        _
      $region26: #{tpu_custom_call.1} parent=5 // pred_check_branch
        %119 = sbr.rel (%p116) target = $region28
      $region27: #{tpu_custom_call.1} parent=5 // pred_region
        %s120 = ssub.s32 %s11, 1
        %p121 = scmp.lt.s32.totalorder %s16, 1
        %s122 = scalar_select %p121, %s16, 1
        %s123 = smul.addr %s122, 60
        %s124 = smul.addr %s123, 8
        %s125 = scalar_lea.vmem %s0, %s124
        %p126 = pneg %p37
        %p127 = pneg %p34
        %p128 = pneg %p58
        %p129 = pneg %p55
        %p130 = pneg %p84
        %p131 = pneg %p81
        %s132 = sand.u32 %s71, 1
        %s133 = scalar_lea.sflag [#allocation4], %s132
        %s134 = sand.u32 %s71, 1
        %s135 = smul.addr %s134, 16
        %s136 = scalar_lea.vmem [#allocation3], %s135
        %p137 = scmp.lt.s32.totalorder %s16, 1
        %s138 = scalar_select %p137, %s16, 1
        %s139 = smul.addr %s138, 60
        %s140 = smul.addr %s139, 8
        %s141 = scalar_lea.vmem %s0, %s140
        %v142 = vld [vmem:[%s141] sm:$0xff]
        %v143 = vld [vmem:[%s141 + $0x8] sm:$0xff]
        %v144 = vld [vmem:[%s141 + $0x10] sm:$0xf]
        %v145 = vld [vmem:[%s141 + $0x18] sm:$0xff]
        %v146 = vld [vmem:[%s141 + $0x20] sm:$0xff]
        %v147 = vld [vmem:[%s141 + $0x28] sm:$0xf]
        %v148 = vld [vmem:[%s141 + $0x30] sm:$0xff]
        %v149 = vld [vmem:[%s141 + $0x38] sm:$0xff]
        %v150 = vld [vmem:[%s141 + $0x40] sm:$0xf]
        %v151 = vld [vmem:[%s141 + $0x48] sm:$0xff]
        %v152 = vld [vmem:[%s141 + $0x50] sm:$0xff]
        %v153 = vld [vmem:[%s141 + $0x58] sm:$0xf]
        %v154 = vld [vmem:[%s141 + $0x60] sm:$0xff]
        %v155 = vld [vmem:[%s141 + $0x68] sm:$0xff]
        %v156 = vld [vmem:[%s141 + $0x70] sm:$0xf]
        %v157 = vld [vmem:[%s141 + $0x78] sm:$0xff]
        %v158 = vld [vmem:[%s141 + $0x80] sm:$0xff]
        %v159 = vld [vmem:[%s141 + $0x88] sm:$0xf]
        %v160 = vld [vmem:[%s141 + $0x90] sm:$0xff]
        %v161 = vld [vmem:[%s141 + $0x98] sm:$0xff]
        %v162 = vld [vmem:[%s141 + $0xa0] sm:$0xf]
        %v163 = vld [vmem:[%s141 + $0xa8] sm:$0xff]
        %v164 = vld [vmem:[%s141 + $0xb0] sm:$0xff]
        %v165 = vld [vmem:[%s141 + $0xb8] sm:$0xf]
        %v166 = vld [vmem:[%s141 + $0xc0] sm:$0xff]
        %v167 = vld [vmem:[%s141 + $0xc8] sm:$0xff]
        %v168 = vld [vmem:[%s141 + $0xd0] sm:$0xf]
        %v169 = vld [vmem:[%s141 + $0xd8] sm:$0xff]
        %v170 = vld [vmem:[%s141 + $0xe0] sm:$0xff]
        %v171 = vld [vmem:[%s141 + $0xe8] sm:$0xf]
        %v172 = vld [vmem:[%s141 + $0xf0] sm:$0xff]
        %v173 = vld [vmem:[%s141 + $0xf8] sm:$0xff]
        %v174 = vld [vmem:[%s141 + $0x100] sm:$0xf]
        %v175 = vld [vmem:[%s141 + $0x108] sm:$0xff]
        %v176 = vld [vmem:[%s141 + $0x110] sm:$0xff]
        %v177 = vld [vmem:[%s141 + $0x118] sm:$0xf]
        %v178 = vld [vmem:[%s141 + $0x120] sm:$0xff]
        %v179 = vld [vmem:[%s141 + $0x128] sm:$0xff]
        %v180 = vld [vmem:[%s141 + $0x130] sm:$0xf]
        %v181 = vld [vmem:[%s141 + $0x138] sm:$0xff]
        %v182 = vld [vmem:[%s141 + $0x140] sm:$0xff]
        %v183 = vld [vmem:[%s141 + $0x148] sm:$0xf]
        %v184 = vld [vmem:[%s141 + $0x150] sm:$0xff]
        %v185 = vld [vmem:[%s141 + $0x158] sm:$0xff]
        %v186 = vld [vmem:[%s141 + $0x160] sm:$0xf]
        %v187 = vld [vmem:[%s141 + $0x168] sm:$0xff]
        %v188 = vld [vmem:[%s141 + $0x170] sm:$0xff]
        %v189 = vld [vmem:[%s141 + $0x178] sm:$0xf]
        %v190 = vld [vmem:[%s141 + $0x180] sm:$0xff]
        %v191 = vld [vmem:[%s141 + $0x188] sm:$0xff]
        %v192 = vld [vmem:[%s141 + $0x190] sm:$0xf]
        %v193 = vld [vmem:[%s141 + $0x198] sm:$0xff]
        %v194 = vld [vmem:[%s141 + $0x1a0] sm:$0xff]
        %v195 = vld [vmem:[%s141 + $0x1a8] sm:$0xf]
        %v196 = vld [vmem:[%s141 + $0x1b0] sm:$0xff]
        %v197 = vld [vmem:[%s141 + $0x1b8] sm:$0xff]
        %v198 = vld [vmem:[%s141 + $0x1c0] sm:$0xf]
        %v199 = vld [vmem:[%s141 + $0x1c8] sm:$0xff]
        %v200 = vld [vmem:[%s141 + $0x1d0] sm:$0xff]
        %v201 = vld [vmem:[%s141 + $0x1d8] sm:$0xf]
        %vm250 = vcmask 1046528
        %v251 = vrot.slane %v145, 1
        %v252 = vrot.slane %v146, 1
        %v253 = vsel %vm250, %v251, %v252
        %v254 = vrot.slane %v147, 1
        %v255 = vsel %vm250, %v252, %v254
        %v256 = vrot.slane %v148, 1
        %v257 = vrot.slane %v149, 1
        %v258 = vsel %vm250, %v256, %v257
        %v259 = vrot.slane %v150, 1
        %v260 = vsel %vm250, %v257, %v259
        %v261 = vrot.slane %v151, 1
        %v262 = vrot.slane %v152, 1
        %v263 = vsel %vm250, %v261, %v262
        %v264 = vrot.slane %v153, 1
        %v265 = vsel %vm250, %v262, %v264
        %v266 = vrot.slane %v154, 1
        %v267 = vrot.slane %v155, 1
        %v268 = vsel %vm250, %v266, %v267
        %v269 = vrot.slane %v156, 1
        %v270 = vsel %vm250, %v267, %v269
        %v271 = vrot.slane %v157, 1
        %v272 = vrot.slane %v158, 1
        %v273 = vsel %vm250, %v271, %v272
        %v274 = vrot.slane %v159, 1
        %v275 = vsel %vm250, %v272, %v274
        %v276 = vrot.slane %v160, 1
        %v277 = vrot.slane %v161, 1
        %v278 = vsel %vm250, %v276, %v277
        %v279 = vrot.slane %v162, 1
        %v280 = vsel %vm250, %v277, %v279
        %v281 = vrot.slane %v163, 1
        %v282 = vrot.slane %v164, 1
        %v283 = vsel %vm250, %v281, %v282
        %v284 = vrot.slane %v165, 1
        %v285 = vsel %vm250, %v282, %v284
        %v286 = vrot.slane %v166, 1
        %v287 = vrot.slane %v167, 1
        %v288 = vsel %vm250, %v286, %v287
        %v289 = vrot.slane %v168, 1
        %v290 = vsel %vm250, %v287, %v289
        %v291 = vrot.slane %v169, 1
        %v292 = vrot.slane %v170, 1
        %v293 = vsel %vm250, %v291, %v292
        %v294 = vrot.slane %v171, 1
        %v295 = vsel %vm250, %v292, %v294
        %v296 = vrot.slane %v172, 1
        %v297 = vrot.slane %v173, 1
        %v298 = vsel %vm250, %v296, %v297
        %v299 = vrot.slane %v174, 1
        %v300 = vsel %vm250, %v297, %v299
        %v301 = vrot.slane %v175, 1
        %v302 = vrot.slane %v176, 1
        %v303 = vsel %vm250, %v301, %v302
        %v304 = vrot.slane %v177, 1
        %v305 = vsel %vm250, %v302, %v304
        %v306 = vrot.slane %v178, 1
        %v307 = vrot.slane %v179, 1
        %v308 = vsel %vm250, %v306, %v307
        %v309 = vrot.slane %v180, 1
        %v310 = vsel %vm250, %v307, %v309
        %v311 = vrot.slane %v181, 1
        %v312 = vrot.slane %v182, 1
        %v313 = vsel %vm250, %v311, %v312
        %v314 = vrot.slane %v183, 1
        %v315 = vsel %vm250, %v312, %v314
        %v316 = vrot.slane %v184, 1
        %v317 = vrot.slane %v185, 1
        %v318 = vsel %vm250, %v316, %v317
        %v319 = vrot.slane %v186, 1
        %v320 = vsel %vm250, %v317, %v319
        %v321 = vrot.slane %v187, 1
        %v322 = vrot.slane %v188, 1
        %v323 = vsel %vm250, %v321, %v322
        %v324 = vrot.slane %v189, 1
        %v325 = vsel %vm250, %v322, %v324
        %v326 = vrot.slane %v190, 1
        %v327 = vrot.slane %v191, 1
        %v328 = vsel %vm250, %v326, %v327
        %v329 = vrot.slane %v192, 1
        %v330 = vsel %vm250, %v327, %v329
        %vm363 = vcmask 64512
        %364 = vst.msk [vmem:[#allocation2] sm:$0xff] %vm363, %v253
        %365 = vst.msk [vmem:[#allocation2 + $0x10] sm:$0xff] %vm363, %v255
        %366 = vst.msk [vmem:[#allocation2 + $0x20] sm:$0xff] %vm363, %v258
        %367 = vst.msk [vmem:[#allocation2 + $0x30] sm:$0xff] %vm363, %v260
        %368 = vst.msk [vmem:[#allocation2 + $0x40] sm:$0xff] %vm363, %v263
        %369 = vst.msk [vmem:[#allocation2 + $0x50] sm:$0xff] %vm363, %v265
        %370 = vst.msk [vmem:[#allocation2 + $0x60] sm:$0xff] %vm363, %v268
        %371 = vst.msk [vmem:[#allocation2 + $0x70] sm:$0xff] %vm363, %v270
        %372 = vst.msk [vmem:[#allocation2 + $0x80] sm:$0xff] %vm363, %v273
        %373 = vst.msk [vmem:[#allocation2 + $0x90] sm:$0xff] %vm363, %v275
        %374 = vst.msk [vmem:[#allocation2 + $0xa0] sm:$0xff] %vm363, %v278
        %375 = vst.msk [vmem:[#allocation2 + $0xb0] sm:$0xff] %vm363, %v280
        %376 = vst.msk [vmem:[#allocation2 + $0xc0] sm:$0xff] %vm363, %v283
        %377 = vst.msk [vmem:[#allocation2 + $0xd0] sm:$0xff] %vm363, %v285
        %378 = vst.msk [vmem:[#allocation2 + $0xe0] sm:$0xff] %vm363, %v288
        %379 = vst.msk [vmem:[#allocation2 + $0xf0] sm:$0xff] %vm363, %v290
        %380 = vst.msk [vmem:[#allocation2 + $0x100] sm:$0xff] %vm363, %v293
        %381 = vst.msk [vmem:[#allocation2 + $0x110] sm:$0xff] %vm363, %v295
        %382 = vst.msk [vmem:[#allocation2 + $0x120] sm:$0xff] %vm363, %v298
        %383 = vst.msk [vmem:[#allocation2 + $0x130] sm:$0xff] %vm363, %v300
        %384 = vst.msk [vmem:[#allocation2 + $0x140] sm:$0xff] %vm363, %v303
        %385 = vst.msk [vmem:[#allocation2 + $0x150] sm:$0xff] %vm363, %v305
        %386 = vst.msk [vmem:[#allocation2 + $0x160] sm:$0xff] %vm363, %v308
        %387 = vst.msk [vmem:[#allocation2 + $0x170] sm:$0xff] %vm363, %v310
        %388 = vst.msk [vmem:[#allocation2 + $0x180] sm:$0xff] %vm363, %v313
        %389 = vst.msk [vmem:[#allocation2 + $0x190] sm:$0xff] %vm363, %v315
        %390 = vst.msk [vmem:[#allocation2 + $0x1a0] sm:$0xff] %vm363, %v318
        %391 = vst.msk [vmem:[#allocation2 + $0x1b0] sm:$0xff] %vm363, %v320
        %392 = vst.msk [vmem:[#allocation2 + $0x1c0] sm:$0xff] %vm363, %v323
        %393 = vst.msk [vmem:[#allocation2 + $0x1d0] sm:$0xff] %vm363, %v325
        %394 = vst.msk [vmem:[#allocation2 + $0x1e0] sm:$0xff] %vm363, %v328
        %395 = vst.msk [vmem:[#allocation2 + $0x1f0] sm:$0xff] %vm363, %v330
        %vm396 = vcmask 1045504
        %v397 = vrot.slane %v145, 2
        %v398 = vrot.slane %v146, 2
        %v399 = vsel %vm396, %v397, %v398
        %v400 = vrot.slane %v147, 2
        %v401 = vsel %vm396, %v398, %v400
        %v402 = vrot.slane %v148, 2
        %v403 = vrot.slane %v149, 2
        %v404 = vsel %vm396, %v402, %v403
        %v405 = vrot.slane %v150, 2
        %v406 = vsel %vm396, %v403, %v405
        %v407 = vrot.slane %v151, 2
        %v408 = vrot.slane %v152, 2
        %v409 = vsel %vm396, %v407, %v408
        %v410 = vrot.slane %v153, 2
        %v411 = vsel %vm396, %v408, %v410
        %v412 = vrot.slane %v154, 2
        %v413 = vrot.slane %v155, 2
        %v414 = vsel %vm396, %v412, %v413
        %v415 = vrot.slane %v156, 2
        %v416 = vsel %vm396, %v413, %v415
        %v417 = vrot.slane %v157, 2
        %v418 = vrot.slane %v158, 2
        %v419 = vsel %vm396, %v417, %v418
        %v420 = vrot.slane %v159, 2
        %v421 = vsel %vm396, %v418, %v420
        %v422 = vrot.slane %v160, 2
        %v423 = vrot.slane %v161, 2
        %v424 = vsel %vm396, %v422, %v423
        %v425 = vrot.slane %v162, 2
        %v426 = vsel %vm396, %v423, %v425
        %v427 = vrot.slane %v163, 2
        %v428 = vrot.slane %v164, 2
        %v429 = vsel %vm396, %v427, %v428
        %v430 = vrot.slane %v165, 2
        %v431 = vsel %vm396, %v428, %v430
        %v432 = vrot.slane %v166, 2
        %v433 = vrot.slane %v167, 2
        %v434 = vsel %vm396, %v432, %v433
        %v435 = vrot.slane %v168, 2
        %v436 = vsel %vm396, %v433, %v435
        %v437 = vrot.slane %v169, 2
        %v438 = vrot.slane %v170, 2
        %v439 = vsel %vm396, %v437, %v438
        %v440 = vrot.slane %v171, 2
        %v441 = vsel %vm396, %v438, %v440
        %v442 = vrot.slane %v172, 2
        %v443 = vrot.slane %v173, 2
        %v444 = vsel %vm396, %v442, %v443
        %v445 = vrot.slane %v174, 2
        %v446 = vsel %vm396, %v443, %v445
        %v447 = vrot.slane %v175, 2
        %v448 = vrot.slane %v176, 2
        %v449 = vsel %vm396, %v447, %v448
        %v450 = vrot.slane %v177, 2
        %v451 = vsel %vm396, %v448, %v450
        %v452 = vrot.slane %v178, 2
        %v453 = vrot.slane %v179, 2
        %v454 = vsel %vm396, %v452, %v453
        %v455 = vrot.slane %v180, 2
        %v456 = vsel %vm396, %v453, %v455
        %v457 = vrot.slane %v181, 2
        %v458 = vrot.slane %v182, 2
        %v459 = vsel %vm396, %v457, %v458
        %v460 = vrot.slane %v183, 2
        %v461 = vsel %vm396, %v458, %v460
        %v462 = vrot.slane %v184, 2
        %v463 = vrot.slane %v185, 2
        %v464 = vsel %vm396, %v462, %v463
        %v465 = vrot.slane %v186, 2
        %v466 = vsel %vm396, %v463, %v465
        %v467 = vrot.slane %v187, 2
        %v468 = vrot.slane %v188, 2
        %v469 = vsel %vm396, %v467, %v468
        %v470 = vrot.slane %v189, 2
        %v471 = vsel %vm396, %v468, %v470
        %v472 = vrot.slane %v190, 2
        %v473 = vrot.slane %v191, 2
        %v474 = vsel %vm396, %v472, %v473
        %v475 = vrot.slane %v192, 2
        %v476 = vsel %vm396, %v473, %v475
        %477 = vrot.lane.b32.xlu0 %v399, 8
        %v478 = vpop.permute.xlu0 %477
        %479 = vrot.lane.b32.xlu0 %v401, 8
        %v480 = vpop.permute.xlu0 %479
        %481 = vrot.lane.b32.xlu0 %v404, 8
        %v482 = vpop.permute.xlu0 %481
        %483 = vrot.lane.b32.xlu0 %v406, 8
        %v484 = vpop.permute.xlu0 %483
        %485 = vrot.lane.b32.xlu0 %v409, 8
        %v486 = vpop.permute.xlu0 %485
        %487 = vrot.lane.b32.xlu0 %v411, 8
        %v488 = vpop.permute.xlu0 %487
        %489 = vrot.lane.b32.xlu0 %v414, 8
        %v490 = vpop.permute.xlu0 %489
        %491 = vrot.lane.b32.xlu0 %v416, 8
        %v492 = vpop.permute.xlu0 %491
        %493 = vrot.lane.b32.xlu0 %v419, 8
        %v494 = vpop.permute.xlu0 %493
        %495 = vrot.lane.b32.xlu0 %v421, 8
        %v496 = vpop.permute.xlu0 %495
        %497 = vrot.lane.b32.xlu0 %v424, 8
        %v498 = vpop.permute.xlu0 %497
        %499 = vrot.lane.b32.xlu0 %v426, 8
        %v500 = vpop.permute.xlu0 %499
        %501 = vrot.lane.b32.xlu0 %v429, 8
        %v502 = vpop.permute.xlu0 %501
        %503 = vrot.lane.b32.xlu0 %v431, 8
        %v504 = vpop.permute.xlu0 %503
        %505 = vrot.lane.b32.xlu0 %v434, 8
        %v506 = vpop.permute.xlu0 %505
        %507 = vrot.lane.b32.xlu0 %v436, 8
        %v508 = vpop.permute.xlu0 %507
        %509 = vrot.lane.b32.xlu0 %v439, 8
        %v510 = vpop.permute.xlu0 %509
        %511 = vrot.lane.b32.xlu0 %v441, 8
        %v512 = vpop.permute.xlu0 %511
        %513 = vrot.lane.b32.xlu0 %v444, 8
        %v514 = vpop.permute.xlu0 %513
        %515 = vrot.lane.b32.xlu0 %v446, 8
        %v516 = vpop.permute.xlu0 %515
        %517 = vrot.lane.b32.xlu0 %v449, 8
        %v518 = vpop.permute.xlu0 %517
        %519 = vrot.lane.b32.xlu0 %v451, 8
        %v520 = vpop.permute.xlu0 %519
        %521 = vrot.lane.b32.xlu0 %v454, 8
        %v522 = vpop.permute.xlu0 %521
        %523 = vrot.lane.b32.xlu0 %v456, 8
        %v524 = vpop.permute.xlu0 %523
        %525 = vrot.lane.b32.xlu0 %v459, 8
        %v526 = vpop.permute.xlu0 %525
        %527 = vrot.lane.b32.xlu0 %v461, 8
        %v528 = vpop.permute.xlu0 %527
        %529 = vrot.lane.b32.xlu0 %v464, 8
        %v530 = vpop.permute.xlu0 %529
        %531 = vrot.lane.b32.xlu0 %v466, 8
        %v532 = vpop.permute.xlu0 %531
        %533 = vrot.lane.b32.xlu0 %v469, 8
        %v534 = vpop.permute.xlu0 %533
        %535 = vrot.lane.b32.xlu0 %v471, 8
        %v536 = vpop.permute.xlu0 %535
        %537 = vrot.lane.b32.xlu0 %v474, 8
        %v538 = vpop.permute.xlu0 %537
        %539 = vrot.lane.b32.xlu0 %v476, 8
        %v540 = vpop.permute.xlu0 %539
        %vm573 = vcmask 130112
        %574 = vst.msk [vmem:[#allocation2] sm:$0xff] %vm573, %v478
        %575 = vst.msk [vmem:[#allocation2 + $0x10] sm:$0xff] %vm573, %v480
        %576 = vst.msk [vmem:[#allocation2 + $0x20] sm:$0xff] %vm573, %v482
        %577 = vst.msk [vmem:[#allocation2 + $0x30] sm:$0xff] %vm573, %v484
        %578 = vst.msk [vmem:[#allocation2 + $0x40] sm:$0xff] %vm573, %v486
        %579 = vst.msk [vmem:[#allocation2 + $0x50] sm:$0xff] %vm573, %v488
        %580 = vst.msk [vmem:[#allocation2 + $0x60] sm:$0xff] %vm573, %v490
        %581 = vst.msk [vmem:[#allocation2 + $0x70] sm:$0xff] %vm573, %v492
        %582 = vst.msk [vmem:[#allocation2 + $0x80] sm:$0xff] %vm573, %v494
        %583 = vst.msk [vmem:[#allocation2 + $0x90] sm:$0xff] %vm573, %v496
        %584 = vst.msk [vmem:[#allocation2 + $0xa0] sm:$0xff] %vm573, %v498
        %585 = vst.msk [vmem:[#allocation2 + $0xb0] sm:$0xff] %vm573, %v500
        %586 = vst.msk [vmem:[#allocation2 + $0xc0] sm:$0xff] %vm573, %v502
        %587 = vst.msk [vmem:[#allocation2 + $0xd0] sm:$0xff] %vm573, %v504
        %588 = vst.msk [vmem:[#allocation2 + $0xe0] sm:$0xff] %vm573, %v506
        %589 = vst.msk [vmem:[#allocation2 + $0xf0] sm:$0xff] %vm573, %v508
        %590 = vst.msk [vmem:[#allocation2 + $0x100] sm:$0xff] %vm573, %v510
        %591 = vst.msk [vmem:[#allocation2 + $0x110] sm:$0xff] %vm573, %v512
        %592 = vst.msk [vmem:[#allocation2 + $0x120] sm:$0xff] %vm573, %v514
        %593 = vst.msk [vmem:[#allocation2 + $0x130] sm:$0xff] %vm573, %v516
        %594 = vst.msk [vmem:[#allocation2 + $0x140] sm:$0xff] %vm573, %v518
        %595 = vst.msk [vmem:[#allocation2 + $0x150] sm:$0xff] %vm573, %v520
        %596 = vst.msk [vmem:[#allocation2 + $0x160] sm:$0xff] %vm573, %v522
        %597 = vst.msk [vmem:[#allocation2 + $0x170] sm:$0xff] %vm573, %v524
        %598 = vst.msk [vmem:[#allocation2 + $0x180] sm:$0xff] %vm573, %v526
        %599 = vst.msk [vmem:[#allocation2 + $0x190] sm:$0xff] %vm573, %v528
        %600 = vst.msk [vmem:[#allocation2 + $0x1a0] sm:$0xff] %vm573, %v530
        %601 = vst.msk [vmem:[#allocation2 + $0x1b0] sm:$0xff] %vm573, %v532
        %602 = vst.msk [vmem:[#allocation2 + $0x1c0] sm:$0xff] %vm573, %v534
        %603 = vst.msk [vmem:[#allocation2 + $0x1d0] sm:$0xff] %vm573, %v536
        %604 = vst.msk [vmem:[#allocation2 + $0x1e0] sm:$0xff] %vm573, %v538
        %605 = vst.msk [vmem:[#allocation2 + $0x1f0] sm:$0xff] %vm573, %v540
        %vm606 = vcmask 1044480
        %v607 = vrot.slane %v145, 3
        %v608 = vrot.slane %v146, 3
        %v609 = vsel %vm606, %v607, %v608
        %v610 = vrot.slane %v147, 3
        %v611 = vsel %vm606, %v608, %v610
        %v612 = vrot.slane %v148, 3
        %v613 = vrot.slane %v149, 3
        %v614 = vsel %vm606, %v612, %v613
        %v615 = vrot.slane %v150, 3
        %v616 = vsel %vm606, %v613, %v615
        %v617 = vrot.slane %v151, 3
        %v618 = vrot.slane %v152, 3
        %v619 = vsel %vm606, %v617, %v618
        %v620 = vrot.slane %v153, 3
        %v621 = vsel %vm606, %v618, %v620
        %v622 = vrot.slane %v154, 3
        %v623 = vrot.slane %v155, 3
        %v624 = vsel %vm606, %v622, %v623
        %v625 = vrot.slane %v156, 3
        %v626 = vsel %vm606, %v623, %v625
        %v627 = vrot.slane %v157, 3
        %v628 = vrot.slane %v158, 3
        %v629 = vsel %vm606, %v627, %v628
        %v630 = vrot.slane %v159, 3
        %v631 = vsel %vm606, %v628, %v630
        %v632 = vrot.slane %v160, 3
        %v633 = vrot.slane %v161, 3
        %v634 = vsel %vm606, %v632, %v633
        %v635 = vrot.slane %v162, 3
        %v636 = vsel %vm606, %v633, %v635
        %v637 = vrot.slane %v163, 3
        %v638 = vrot.slane %v164, 3
        %v639 = vsel %vm606, %v637, %v638
        %v640 = vrot.slane %v165, 3
        %v641 = vsel %vm606, %v638, %v640
        %v642 = vrot.slane %v166, 3
        %v643 = vrot.slane %v167, 3
        %v644 = vsel %vm606, %v642, %v643
        %v645 = vrot.slane %v168, 3
        %v646 = vsel %vm606, %v643, %v645
        %v647 = vrot.slane %v169, 3
        %v648 = vrot.slane %v170, 3
        %v649 = vsel %vm606, %v647, %v648
        %v650 = vrot.slane %v171, 3
        %v651 = vsel %vm606, %v648, %v650
        %v652 = vrot.slane %v172, 3
        %v653 = vrot.slane %v173, 3
        %v654 = vsel %vm606, %v652, %v653
        %v655 = vrot.slane %v174, 3
        %v656 = vsel %vm606, %v653, %v655
        %v657 = vrot.slane %v175, 3
        %v658 = vrot.slane %v176, 3
        %v659 = vsel %vm606, %v657, %v658
        %v660 = vrot.slane %v177, 3
        %v661 = vsel %vm606, %v658, %v660
        %v662 = vrot.slane %v178, 3
        %v663 = vrot.slane %v179, 3
        %v664 = vsel %vm606, %v662, %v663
        %v665 = vrot.slane %v180, 3
        %v666 = vsel %vm606, %v663, %v665
        %v667 = vrot.slane %v181, 3
        %v668 = vrot.slane %v182, 3
        %v669 = vsel %vm606, %v667, %v668
        %v670 = vrot.slane %v183, 3
        %v671 = vsel %vm606, %v668, %v670
        %v672 = vrot.slane %v184, 3
        %v673 = vrot.slane %v185, 3
        %v674 = vsel %vm606, %v672, %v673
        %v675 = vrot.slane %v186, 3
        %v676 = vsel %vm606, %v673, %v675
        %v677 = vrot.slane %v187, 3
        %v678 = vrot.slane %v188, 3
        %v679 = vsel %vm606, %v677, %v678
        %v680 = vrot.slane %v189, 3
        %v681 = vsel %vm606, %v678, %v680
        %v682 = vrot.slane %v190, 3
        %v683 = vrot.slane %v191, 3
        %v684 = vsel %vm606, %v682, %v683
        %v685 = vrot.slane %v192, 3
        %v686 = vsel %vm606, %v683, %v685
        %687 = vrot.lane.b32.xlu0 %v609, 16
        %v688 = vpop.permute.xlu0 %687
        %689 = vrot.lane.b32.xlu0 %v611, 16
        %v690 = vpop.permute.xlu0 %689
        %691 = vrot.lane.b32.xlu0 %v614, 16
        %v692 = vpop.permute.xlu0 %691
        %693 = vrot.lane.b32.xlu0 %v616, 16
        %v694 = vpop.permute.xlu0 %693
        %695 = vrot.lane.b32.xlu0 %v619, 16
        %v696 = vpop.permute.xlu0 %695
        %697 = vrot.lane.b32.xlu0 %v621, 16
        %v698 = vpop.permute.xlu0 %697
        %699 = vrot.lane.b32.xlu0 %v624, 16
        %v700 = vpop.permute.xlu0 %699
        %701 = vrot.lane.b32.xlu0 %v626, 16
        %v702 = vpop.permute.xlu0 %701
        %703 = vrot.lane.b32.xlu0 %v629, 16
        %v704 = vpop.permute.xlu0 %703
        %705 = vrot.lane.b32.xlu0 %v631, 16
        %v706 = vpop.permute.xlu0 %705
        %707 = vrot.lane.b32.xlu0 %v634, 16
        %v708 = vpop.permute.xlu0 %707
        %709 = vrot.lane.b32.xlu0 %v636, 16
        %v710 = vpop.permute.xlu0 %709
        %711 = vrot.lane.b32.xlu0 %v639, 16
        %v712 = vpop.permute.xlu0 %711
        %713 = vrot.lane.b32.xlu0 %v641, 16
        %v714 = vpop.permute.xlu0 %713
        %715 = vrot.lane.b32.xlu0 %v644, 16
        %v716 = vpop.permute.xlu0 %715
        %717 = vrot.lane.b32.xlu0 %v646, 16
        %v718 = vpop.permute.xlu0 %717
        %719 = vrot.lane.b32.xlu0 %v649, 16
        %v720 = vpop.permute.xlu0 %719
        %721 = vrot.lane.b32.xlu0 %v651, 16
        %v722 = vpop.permute.xlu0 %721
        %723 = vrot.lane.b32.xlu0 %v654, 16
        %v724 = vpop.permute.xlu0 %723
        %725 = vrot.lane.b32.xlu0 %v656, 16
        %v726 = vpop.permute.xlu0 %725
        %727 = vrot.lane.b32.xlu0 %v659, 16
        %v728 = vpop.permute.xlu0 %727
        %729 = vrot.lane.b32.xlu0 %v661, 16
        %v730 = vpop.permute.xlu0 %729
        %731 = vrot.lane.b32.xlu0 %v664, 16
        %v732 = vpop.permute.xlu0 %731
        %733 = vrot.lane.b32.xlu0 %v666, 16
        %v734 = vpop.permute.xlu0 %733
        %735 = vrot.lane.b32.xlu0 %v669, 16
        %v736 = vpop.permute.xlu0 %735
        %737 = vrot.lane.b32.xlu0 %v671, 16
        %v738 = vpop.permute.xlu0 %737
        %739 = vrot.lane.b32.xlu0 %v674, 16
        %v740 = vpop.permute.xlu0 %739
        %741 = vrot.lane.b32.xlu0 %v676, 16
        %v742 = vpop.permute.xlu0 %741
        %743 = vrot.lane.b32.xlu0 %v679, 16
        %v744 = vpop.permute.xlu0 %743
        %745 = vrot.lane.b32.xlu0 %v681, 16
        %v746 = vpop.permute.xlu0 %745
        %747 = vrot.lane.b32.xlu0 %v684, 16
        %v748 = vpop.permute.xlu0 %747
        %749 = vrot.lane.b32.xlu0 %v686, 16
        %v750 = vpop.permute.xlu0 %749
        %vm783 = vcmask 195712
        %784 = vst.msk [vmem:[#allocation2] sm:$0xff] %vm783, %v688
        %785 = vst.msk [vmem:[#allocation2 + $0x10] sm:$0xff] %vm783, %v690
        %786 = vst.msk [vmem:[#allocation2 + $0x20] sm:$0xff] %vm783, %v692
        %787 = vst.msk [vmem:[#allocation2 + $0x30] sm:$0xff] %vm783, %v694
        %788 = vst.msk [vmem:[#allocation2 + $0x40] sm:$0xff] %vm783, %v696
        %789 = vst.msk [vmem:[#allocation2 + $0x50] sm:$0xff] %vm783, %v698
        %790 = vst.msk [vmem:[#allocation2 + $0x60] sm:$0xff] %vm783, %v700
        %791 = vst.msk [vmem:[#allocation2 + $0x70] sm:$0xff] %vm783, %v702
        %792 = vst.msk [vmem:[#allocation2 + $0x80] sm:$0xff] %vm783, %v704
        %793 = vst.msk [vmem:[#allocation2 + $0x90] sm:$0xff] %vm783, %v706
        %794 = vst.msk [vmem:[#allocation2 + $0xa0] sm:$0xff] %vm783, %v708
        %795 = vst.msk [vmem:[#allocation2 + $0xb0] sm:$0xff] %vm783, %v710
        %796 = vst.msk [vmem:[#allocation2 + $0xc0] sm:$0xff] %vm783, %v712
        %797 = vst.msk [vmem:[#allocation2 + $0xd0] sm:$0xff] %vm783, %v714
        %798 = vst.msk [vmem:[#allocation2 + $0xe0] sm:$0xff] %vm783, %v716
        %799 = vst.msk [vmem:[#allocation2 + $0xf0] sm:$0xff] %vm783, %v718
        %800 = vst.msk [vmem:[#allocation2 + $0x100] sm:$0xff] %vm783, %v720
        %801 = vst.msk [vmem:[#allocation2 + $0x110] sm:$0xff] %vm783, %v722
        %802 = vst.msk [vmem:[#allocation2 + $0x120] sm:$0xff] %vm783, %v724
        %803 = vst.msk [vmem:[#allocation2 + $0x130] sm:$0xff] %vm783, %v726
        %804 = vst.msk [vmem:[#allocation2 + $0x140] sm:$0xff] %vm783, %v728
        %805 = vst.msk [vmem:[#allocation2 + $0x150] sm:$0xff] %vm783, %v730
        %806 = vst.msk [vmem:[#allocation2 + $0x160] sm:$0xff] %vm783, %v732
        %807 = vst.msk [vmem:[#allocation2 + $0x170] sm:$0xff] %vm783, %v734
        %808 = vst.msk [vmem:[#allocation2 + $0x180] sm:$0xff] %vm783, %v736
        %809 = vst.msk [vmem:[#allocation2 + $0x190] sm:$0xff] %vm783, %v738
        %810 = vst.msk [vmem:[#allocation2 + $0x1a0] sm:$0xff] %vm783, %v740
        %811 = vst.msk [vmem:[#allocation2 + $0x1b0] sm:$0xff] %vm783, %v742
        %812 = vst.msk [vmem:[#allocation2 + $0x1c0] sm:$0xff] %vm783, %v744
        %813 = vst.msk [vmem:[#allocation2 + $0x1d0] sm:$0xff] %vm783, %v746
        %814 = vst.msk [vmem:[#allocation2 + $0x1e0] sm:$0xff] %vm783, %v748
        %815 = vst.msk [vmem:[#allocation2 + $0x1f0] sm:$0xff] %vm783, %v750
        %v819 = vrot.slane %v193, 1
        %v820 = vrot.slane %v194, 1
        %v821 = vsel %vm250, %v819, %v820
        %v822 = vrot.slane %v195, 1
        %v823 = vsel %vm250, %v820, %v822
        %824 = vrot.lane.b32.xlu0 %v258, 24
        %v825 = vpop.permute.xlu0 %824
        %826 = vrot.lane.b32.xlu0 %v260, 24
        %v827 = vpop.permute.xlu0 %826
        %828 = vrot.lane.b32.xlu0 %v263, 24
        %v829 = vpop.permute.xlu0 %828
        %830 = vrot.lane.b32.xlu0 %v265, 24
        %v831 = vpop.permute.xlu0 %830
        %832 = vrot.lane.b32.xlu0 %v268, 24
        %v833 = vpop.permute.xlu0 %832
        %834 = vrot.lane.b32.xlu0 %v270, 24
        %v835 = vpop.permute.xlu0 %834
        %836 = vrot.lane.b32.xlu0 %v273, 24
        %v837 = vpop.permute.xlu0 %836
        %838 = vrot.lane.b32.xlu0 %v275, 24
        %v839 = vpop.permute.xlu0 %838
        %840 = vrot.lane.b32.xlu0 %v278, 24
        %v841 = vpop.permute.xlu0 %840
        %842 = vrot.lane.b32.xlu0 %v280, 24
        %v843 = vpop.permute.xlu0 %842
        %844 = vrot.lane.b32.xlu0 %v283, 24
        %v845 = vpop.permute.xlu0 %844
        %846 = vrot.lane.b32.xlu0 %v285, 24
        %v847 = vpop.permute.xlu0 %846
        %848 = vrot.lane.b32.xlu0 %v288, 24
        %v849 = vpop.permute.xlu0 %848
        %850 = vrot.lane.b32.xlu0 %v290, 24
        %v851 = vpop.permute.xlu0 %850
        %852 = vrot.lane.b32.xlu0 %v293, 24
        %v853 = vpop.permute.xlu0 %852
        %854 = vrot.lane.b32.xlu0 %v295, 24
        %v855 = vpop.permute.xlu0 %854
        %856 = vrot.lane.b32.xlu0 %v298, 24
        %v857 = vpop.permute.xlu0 %856
        %858 = vrot.lane.b32.xlu0 %v300, 24
        %v859 = vpop.permute.xlu0 %858
        %860 = vrot.lane.b32.xlu0 %v303, 24
        %v861 = vpop.permute.xlu0 %860
        %862 = vrot.lane.b32.xlu0 %v305, 24
        %v863 = vpop.permute.xlu0 %862
        %864 = vrot.lane.b32.xlu0 %v308, 24
        %v865 = vpop.permute.xlu0 %864
        %866 = vrot.lane.b32.xlu0 %v310, 24
        %v867 = vpop.permute.xlu0 %866
        %868 = vrot.lane.b32.xlu0 %v313, 24
        %v869 = vpop.permute.xlu0 %868
        %870 = vrot.lane.b32.xlu0 %v315, 24
        %v871 = vpop.permute.xlu0 %870
        %872 = vrot.lane.b32.xlu0 %v318, 24
        %v873 = vpop.permute.xlu0 %872
        %874 = vrot.lane.b32.xlu0 %v320, 24
        %v875 = vpop.permute.xlu0 %874
        %876 = vrot.lane.b32.xlu0 %v323, 24
        %v877 = vpop.permute.xlu0 %876
        %878 = vrot.lane.b32.xlu0 %v325, 24
        %v879 = vpop.permute.xlu0 %878
        %880 = vrot.lane.b32.xlu0 %v328, 24
        %v881 = vpop.permute.xlu0 %880
        %882 = vrot.lane.b32.xlu0 %v330, 24
        %v883 = vpop.permute.xlu0 %882
        %884 = vrot.lane.b32.xlu0 %v821, 24
        %v885 = vpop.permute.xlu0 %884
        %886 = vrot.lane.b32.xlu0 %v823, 24
        %v887 = vpop.permute.xlu0 %886
        %vm920 = vcmask 261312
        %921 = vst.msk [vmem:[#allocation2] sm:$0xff] %vm920, %v825
        %922 = vst.msk [vmem:[#allocation2 + $0x10] sm:$0xff] %vm920, %v827
        %923 = vst.msk [vmem:[#allocation2 + $0x20] sm:$0xff] %vm920, %v829
        %924 = vst.msk [vmem:[#allocation2 + $0x30] sm:$0xff] %vm920, %v831
        %925 = vst.msk [vmem:[#allocation2 + $0x40] sm:$0xff] %vm920, %v833
        %926 = vst.msk [vmem:[#allocation2 + $0x50] sm:$0xff] %vm920, %v835
        %927 = vst.msk [vmem:[#allocation2 + $0x60] sm:$0xff] %vm920, %v837
        %928 = vst.msk [vmem:[#allocation2 + $0x70] sm:$0xff] %vm920, %v839
        %929 = vst.msk [vmem:[#allocation2 + $0x80] sm:$0xff] %vm920, %v841
        %930 = vst.msk [vmem:[#allocation2 + $0x90] sm:$0xff] %vm920, %v843
        %931 = vst.msk [vmem:[#allocation2 + $0xa0] sm:$0xff] %vm920, %v845
        %932 = vst.msk [vmem:[#allocation2 + $0xb0] sm:$0xff] %vm920, %v847
        %933 = vst.msk [vmem:[#allocation2 + $0xc0] sm:$0xff] %vm920, %v849
        %934 = vst.msk [vmem:[#allocation2 + $0xd0] sm:$0xff] %vm920, %v851
        %935 = vst.msk [vmem:[#allocation2 + $0xe0] sm:$0xff] %vm920, %v853
        %936 = vst.msk [vmem:[#allocation2 + $0xf0] sm:$0xff] %vm920, %v855
        %937 = vst.msk [vmem:[#allocation2 + $0x100] sm:$0xff] %vm920, %v857
        %938 = vst.msk [vmem:[#allocation2 + $0x110] sm:$0xff] %vm920, %v859
        %939 = vst.msk [vmem:[#allocation2 + $0x120] sm:$0xff] %vm920, %v861
        %940 = vst.msk [vmem:[#allocation2 + $0x130] sm:$0xff] %vm920, %v863
        %941 = vst.msk [vmem:[#allocation2 + $0x140] sm:$0xff] %vm920, %v865
        %942 = vst.msk [vmem:[#allocation2 + $0x150] sm:$0xff] %vm920, %v867
        %943 = vst.msk [vmem:[#allocation2 + $0x160] sm:$0xff] %vm920, %v869
        %944 = vst.msk [vmem:[#allocation2 + $0x170] sm:$0xff] %vm920, %v871
        %945 = vst.msk [vmem:[#allocation2 + $0x180] sm:$0xff] %vm920, %v873
        %946 = vst.msk [vmem:[#allocation2 + $0x190] sm:$0xff] %vm920, %v875
        %947 = vst.msk [vmem:[#allocation2 + $0x1a0] sm:$0xff] %vm920, %v877
        %948 = vst.msk [vmem:[#allocation2 + $0x1b0] sm:$0xff] %vm920, %v879
        %949 = vst.msk [vmem:[#allocation2 + $0x1c0] sm:$0xff] %vm920, %v881
        %950 = vst.msk [vmem:[#allocation2 + $0x1d0] sm:$0xff] %vm920, %v883
        %951 = vst.msk [vmem:[#allocation2 + $0x1e0] sm:$0xff] %vm920, %v885
        %952 = vst.msk [vmem:[#allocation2 + $0x1f0] sm:$0xff] %vm920, %v887
        %v953 = vrot.slane %v193, 2
        %v954 = vrot.slane %v194, 2
        %v955 = vsel %vm396, %v953, %v954
        %v956 = vrot.slane %v195, 2
        %v957 = vsel %vm396, %v954, %v956
        %958 = vrot.lane.b32.xlu0 %v404, 32
        %v959 = vpop.permute.xlu0 %958
        %960 = vrot.lane.b32.xlu0 %v406, 32
        %v961 = vpop.permute.xlu0 %960
        %962 = vrot.lane.b32.xlu0 %v409, 32
        %v963 = vpop.permute.xlu0 %962
        %964 = vrot.lane.b32.xlu0 %v411, 32
        %v965 = vpop.permute.xlu0 %964
        %966 = vrot.lane.b32.xlu0 %v414, 32
        %v967 = vpop.permute.xlu0 %966
        %968 = vrot.lane.b32.xlu0 %v416, 32
        %v969 = vpop.permute.xlu0 %968
        %970 = vrot.lane.b32.xlu0 %v419, 32
        %v971 = vpop.permute.xlu0 %970
        %972 = vrot.lane.b32.xlu0 %v421, 32
        %v973 = vpop.permute.xlu0 %972
        %974 = vrot.lane.b32.xlu0 %v424, 32
        %v975 = vpop.permute.xlu0 %974
        %976 = vrot.lane.b32.xlu0 %v426, 32
        %v977 = vpop.permute.xlu0 %976
        %978 = vrot.lane.b32.xlu0 %v429, 32
        %v979 = vpop.permute.xlu0 %978
        %980 = vrot.lane.b32.xlu0 %v431, 32
        %v981 = vpop.permute.xlu0 %980
        %982 = vrot.lane.b32.xlu0 %v434, 32
        %v983 = vpop.permute.xlu0 %982
        %984 = vrot.lane.b32.xlu0 %v436, 32
        %v985 = vpop.permute.xlu0 %984
        %986 = vrot.lane.b32.xlu0 %v439, 32
        %v987 = vpop.permute.xlu0 %986
        %988 = vrot.lane.b32.xlu0 %v441, 32
        %v989 = vpop.permute.xlu0 %988
        %990 = vrot.lane.b32.xlu0 %v444, 32
        %v991 = vpop.permute.xlu0 %990
        %992 = vrot.lane.b32.xlu0 %v446, 32
        %v993 = vpop.permute.xlu0 %992
        %994 = vrot.lane.b32.xlu0 %v449, 32
        %v995 = vpop.permute.xlu0 %994
        %996 = vrot.lane.b32.xlu0 %v451, 32
        %v997 = vpop.permute.xlu0 %996
        %998 = vrot.lane.b32.xlu0 %v454, 32
        %v999 = vpop.permute.xlu0 %998
        %1000 = vrot.lane.b32.xlu0 %v456, 32
        %v1001 = vpop.permute.xlu0 %1000
        %1002 = vrot.lane.b32.xlu0 %v459, 32
        %v1003 = vpop.permute.xlu0 %1002
        %1004 = vrot.lane.b32.xlu0 %v461, 32
        %v1005 = vpop.permute.xlu0 %1004
        %1006 = vrot.lane.b32.xlu0 %v464, 32
        %v1007 = vpop.permute.xlu0 %1006
        %1008 = vrot.lane.b32.xlu0 %v466, 32
        %v1009 = vpop.permute.xlu0 %1008
        %1010 = vrot.lane.b32.xlu0 %v469, 32
        %v1011 = vpop.permute.xlu0 %1010
        %1012 = vrot.lane.b32.xlu0 %v471, 32
        %v1013 = vpop.permute.xlu0 %1012
        %1014 = vrot.lane.b32.xlu0 %v474, 32
        %v1015 = vpop.permute.xlu0 %1014
        %1016 = vrot.lane.b32.xlu0 %v476, 32
        %v1017 = vpop.permute.xlu0 %1016
        %1018 = vrot.lane.b32.xlu0 %v955, 32
        %v1019 = vpop.permute.xlu0 %1018
        %1020 = vrot.lane.b32.xlu0 %v957, 32
        %v1021 = vpop.permute.xlu0 %1020
        %vm1054 = vcmask 326912
        %1055 = vst.msk [vmem:[#allocation2] sm:$0xff] %vm1054, %v959
        %1056 = vst.msk [vmem:[#allocation2 + $0x10] sm:$0xff] %vm1054, %v961
        %1057 = vst.msk [vmem:[#allocation2 + $0x20] sm:$0xff] %vm1054, %v963
        %1058 = vst.msk [vmem:[#allocation2 + $0x30] sm:$0xff] %vm1054, %v965
        %1059 = vst.msk [vmem:[#allocation2 + $0x40] sm:$0xff] %vm1054, %v967
        %1060 = vst.msk [vmem:[#allocation2 + $0x50] sm:$0xff] %vm1054, %v969
        %1061 = vst.msk [vmem:[#allocation2 + $0x60] sm:$0xff] %vm1054, %v971
        %1062 = vst.msk [vmem:[#allocation2 + $0x70] sm:$0xff] %vm1054, %v973
        %1063 = vst.msk [vmem:[#allocation2 + $0x80] sm:$0xff] %vm1054, %v975
        %1064 = vst.msk [vmem:[#allocation2 + $0x90] sm:$0xff] %vm1054, %v977
        %1065 = vst.msk [vmem:[#allocation2 + $0xa0] sm:$0xff] %vm1054, %v979
        %1066 = vst.msk [vmem:[#allocation2 + $0xb0] sm:$0xff] %vm1054, %v981
        %1067 = vst.msk [vmem:[#allocation2 + $0xc0] sm:$0xff] %vm1054, %v983
        %1068 = vst.msk [vmem:[#allocation2 + $0xd0] sm:$0xff] %vm1054, %v985
        %1069 = vst.msk [vmem:[#allocation2 + $0xe0] sm:$0xff] %vm1054, %v987
        %1070 = vst.msk [vmem:[#allocation2 + $0xf0] sm:$0xff] %vm1054, %v989
        %1071 = vst.msk [vmem:[#allocation2 + $0x100] sm:$0xff] %vm1054, %v991
        %1072 = vst.msk [vmem:[#allocation2 + $0x110] sm:$0xff] %vm1054, %v993
        %1073 = vst.msk [vmem:[#allocation2 + $0x120] sm:$0xff] %vm1054, %v995
        %1074 = vst.msk [vmem:[#allocation2 + $0x130] sm:$0xff] %vm1054, %v997
        %1075 = vst.msk [vmem:[#allocation2 + $0x140] sm:$0xff] %vm1054, %v999
        %1076 = vst.msk [vmem:[#allocation2 + $0x150] sm:$0xff] %vm1054, %v1001
        %1077 = vst.msk [vmem:[#allocation2 + $0x160] sm:$0xff] %vm1054, %v1003
        %1078 = vst.msk [vmem:[#allocation2 + $0x170] sm:$0xff] %vm1054, %v1005
        %1079 = vst.msk [vmem:[#allocation2 + $0x180] sm:$0xff] %vm1054, %v1007
        %1080 = vst.msk [vmem:[#allocation2 + $0x190] sm:$0xff] %vm1054, %v1009
        %1081 = vst.msk [vmem:[#allocation2 + $0x1a0] sm:$0xff] %vm1054, %v1011
        %1082 = vst.msk [vmem:[#allocation2 + $0x1b0] sm:$0xff] %vm1054, %v1013
        %1083 = vst.msk [vmem:[#allocation2 + $0x1c0] sm:$0xff] %vm1054, %v1015
        %1084 = vst.msk [vmem:[#allocation2 + $0x1d0] sm:$0xff] %vm1054, %v1017
        %1085 = vst.msk [vmem:[#allocation2 + $0x1e0] sm:$0xff] %vm1054, %v1019
        %1086 = vst.msk [vmem:[#allocation2 + $0x1f0] sm:$0xff] %vm1054, %v1021
        %v1087 = vrot.slane %v193, 3
        %v1088 = vrot.slane %v194, 3
        %v1089 = vsel %vm606, %v1087, %v1088
        %v1090 = vrot.slane %v195, 3
        %v1091 = vsel %vm606, %v1088, %v1090
        %1092 = vrot.lane.b32.xlu0 %v614, 40
        %v1093 = vpop.permute.xlu0 %1092
        %1094 = vrot.lane.b32.xlu0 %v616, 40
        %v1095 = vpop.permute.xlu0 %1094
        %1096 = vrot.lane.b32.xlu0 %v619, 40
        %v1097 = vpop.permute.xlu0 %1096
        %1098 = vrot.lane.b32.xlu0 %v621, 40
        %v1099 = vpop.permute.xlu0 %1098
        %1100 = vrot.lane.b32.xlu0 %v624, 40
        %v1101 = vpop.permute.xlu0 %1100
        %1102 = vrot.lane.b32.xlu0 %v626, 40
        %v1103 = vpop.permute.xlu0 %1102
        %1104 = vrot.lane.b32.xlu0 %v629, 40
        %v1105 = vpop.permute.xlu0 %1104
        %1106 = vrot.lane.b32.xlu0 %v631, 40
        %v1107 = vpop.permute.xlu0 %1106
        %1108 = vrot.lane.b32.xlu0 %v634, 40
        %v1109 = vpop.permute.xlu0 %1108
        %1110 = vrot.lane.b32.xlu0 %v636, 40
        %v1111 = vpop.permute.xlu0 %1110
        %1112 = vrot.lane.b32.xlu0 %v639, 40
        %v1113 = vpop.permute.xlu0 %1112
        %1114 = vrot.lane.b32.xlu0 %v641, 40
        %v1115 = vpop.permute.xlu0 %1114
        %1116 = vrot.lane.b32.xlu0 %v644, 40
        %v1117 = vpop.permute.xlu0 %1116
        %1118 = vrot.lane.b32.xlu0 %v646, 40
        %v1119 = vpop.permute.xlu0 %1118
        %1120 = vrot.lane.b32.xlu0 %v649, 40
        %v1121 = vpop.permute.xlu0 %1120
        %1122 = vrot.lane.b32.xlu0 %v651, 40
        %v1123 = vpop.permute.xlu0 %1122
        %1124 = vrot.lane.b32.xlu0 %v654, 40
        %v1125 = vpop.permute.xlu0 %1124
        %1126 = vrot.lane.b32.xlu0 %v656, 40
        %v1127 = vpop.permute.xlu0 %1126
        %1128 = vrot.lane.b32.xlu0 %v659, 40
        %v1129 = vpop.permute.xlu0 %1128
        %1130 = vrot.lane.b32.xlu0 %v661, 40
        %v1131 = vpop.permute.xlu0 %1130
        %1132 = vrot.lane.b32.xlu0 %v664, 40
        %v1133 = vpop.permute.xlu0 %1132
        %1134 = vrot.lane.b32.xlu0 %v666, 40
        %v1135 = vpop.permute.xlu0 %1134
        %1136 = vrot.lane.b32.xlu0 %v669, 40
        %v1137 = vpop.permute.xlu0 %1136
        %1138 = vrot.lane.b32.xlu0 %v671, 40
        %v1139 = vpop.permute.xlu0 %1138
        %1140 = vrot.lane.b32.xlu0 %v674, 40
        %v1141 = vpop.permute.xlu0 %1140
        %1142 = vrot.lane.b32.xlu0 %v676, 40
        %v1143 = vpop.permute.xlu0 %1142
        %1144 = vrot.lane.b32.xlu0 %v679, 40
        %v1145 = vpop.permute.xlu0 %1144
        %1146 = vrot.lane.b32.xlu0 %v681, 40
        %v1147 = vpop.permute.xlu0 %1146
        %1148 = vrot.lane.b32.xlu0 %v684, 40
        %v1149 = vpop.permute.xlu0 %1148
        %1150 = vrot.lane.b32.xlu0 %v686, 40
        %v1151 = vpop.permute.xlu0 %1150
        %1152 = vrot.lane.b32.xlu0 %v1089, 40
        %v1153 = vpop.permute.xlu0 %1152
        %1154 = vrot.lane.b32.xlu0 %v1091, 40
        %v1155 = vpop.permute.xlu0 %1154
        %vm1188 = vcmask 392512
        %1189 = vst.msk [vmem:[#allocation2] sm:$0xff] %vm1188, %v1093
        %1190 = vst.msk [vmem:[#allocation2 + $0x10] sm:$0xff] %vm1188, %v1095
        %1191 = vst.msk [vmem:[#allocation2 + $0x20] sm:$0xff] %vm1188, %v1097
        %1192 = vst.msk [vmem:[#allocation2 + $0x30] sm:$0xff] %vm1188, %v1099
        %1193 = vst.msk [vmem:[#allocation2 + $0x40] sm:$0xff] %vm1188, %v1101
        %1194 = vst.msk [vmem:[#allocation2 + $0x50] sm:$0xff] %vm1188, %v1103
        %1195 = vst.msk [vmem:[#allocation2 + $0x60] sm:$0xff] %vm1188, %v1105
        %1196 = vst.msk [vmem:[#allocation2 + $0x70] sm:$0xff] %vm1188, %v1107
        %1197 = vst.msk [vmem:[#allocation2 + $0x80] sm:$0xff] %vm1188, %v1109
        %1198 = vst.msk [vmem:[#allocation2 + $0x90] sm:$0xff] %vm1188, %v1111
        %1199 = vst.msk [vmem:[#allocation2 + $0xa0] sm:$0xff] %vm1188, %v1113
        %1200 = vst.msk [vmem:[#allocation2 + $0xb0] sm:$0xff] %vm1188, %v1115
        %1201 = vst.msk [vmem:[#allocation2 + $0xc0] sm:$0xff] %vm1188, %v1117
        %1202 = vst.msk [vmem:[#allocation2 + $0xd0] sm:$0xff] %vm1188, %v1119
        %1203 = vst.msk [vmem:[#allocation2 + $0xe0] sm:$0xff] %vm1188, %v1121
        %1204 = vst.msk [vmem:[#allocation2 + $0xf0] sm:$0xff] %vm1188, %v1123
        %1205 = vst.msk [vmem:[#allocation2 + $0x100] sm:$0xff] %vm1188, %v1125
        %1206 = vst.msk [vmem:[#allocation2 + $0x110] sm:$0xff] %vm1188, %v1127
        %1207 = vst.msk [vmem:[#allocation2 + $0x120] sm:$0xff] %vm1188, %v1129
        %1208 = vst.msk [vmem:[#allocation2 + $0x130] sm:$0xff] %vm1188, %v1131
        %1209 = vst.msk [vmem:[#allocation2 + $0x140] sm:$0xff] %vm1188, %v1133
        %1210 = vst.msk [vmem:[#allocation2 + $0x150] sm:$0xff] %vm1188, %v1135
        %1211 = vst.msk [vmem:[#allocation2 + $0x160] sm:$0xff] %vm1188, %v1137
        %1212 = vst.msk [vmem:[#allocation2 + $0x170] sm:$0xff] %vm1188, %v1139
        %1213 = vst.msk [vmem:[#allocation2 + $0x180] sm:$0xff] %vm1188, %v1141
        %1214 = vst.msk [vmem:[#allocation2 + $0x190] sm:$0xff] %vm1188, %v1143
        %1215 = vst.msk [vmem:[#allocation2 + $0x1a0] sm:$0xff] %vm1188, %v1145
        %1216 = vst.msk [vmem:[#allocation2 + $0x1b0] sm:$0xff] %vm1188, %v1147
        %1217 = vst.msk [vmem:[#allocation2 + $0x1c0] sm:$0xff] %vm1188, %v1149
        %1218 = vst.msk [vmem:[#allocation2 + $0x1d0] sm:$0xff] %vm1188, %v1151
        %1219 = vst.msk [vmem:[#allocation2 + $0x1e0] sm:$0xff] %vm1188, %v1153
        %1220 = vst.msk [vmem:[#allocation2 + $0x1f0] sm:$0xff] %vm1188, %v1155
        %v1224 = vrot.slane %v196, 1
        %v1225 = vrot.slane %v197, 1
        %v1226 = vsel %vm250, %v1224, %v1225
        %v1227 = vrot.slane %v198, 1
        %v1228 = vsel %vm250, %v1225, %v1227
        %1229 = vrot.lane.b32.xlu0 %v263, 48
        %v1230 = vpop.permute.xlu0 %1229
        %1231 = vrot.lane.b32.xlu0 %v265, 48
        %v1232 = vpop.permute.xlu0 %1231
        %1233 = vrot.lane.b32.xlu0 %v268, 48
        %v1234 = vpop.permute.xlu0 %1233
        %1235 = vrot.lane.b32.xlu0 %v270, 48
        %v1236 = vpop.permute.xlu0 %1235
        %1237 = vrot.lane.b32.xlu0 %v273, 48
        %v1238 = vpop.permute.xlu0 %1237
        %1239 = vrot.lane.b32.xlu0 %v275, 48
        %v1240 = vpop.permute.xlu0 %1239
        %1241 = vrot.lane.b32.xlu0 %v278, 48
        %v1242 = vpop.permute.xlu0 %1241
        %1243 = vrot.lane.b32.xlu0 %v280, 48
        %v1244 = vpop.permute.xlu0 %1243
        %1245 = vrot.lane.b32.xlu0 %v283, 48
        %v1246 = vpop.permute.xlu0 %1245
        %1247 = vrot.lane.b32.xlu0 %v285, 48
        %v1248 = vpop.permute.xlu0 %1247
        %1249 = vrot.lane.b32.xlu0 %v288, 48
        %v1250 = vpop.permute.xlu0 %1249
        %1251 = vrot.lane.b32.xlu0 %v290, 48
        %v1252 = vpop.permute.xlu0 %1251
        %1253 = vrot.lane.b32.xlu0 %v293, 48
        %v1254 = vpop.permute.xlu0 %1253
        %1255 = vrot.lane.b32.xlu0 %v295, 48
        %v1256 = vpop.permute.xlu0 %1255
        %1257 = vrot.lane.b32.xlu0 %v298, 48
        %v1258 = vpop.permute.xlu0 %1257
        %1259 = vrot.lane.b32.xlu0 %v300, 48
        %v1260 = vpop.permute.xlu0 %1259
        %1261 = vrot.lane.b32.xlu0 %v303, 48
        %v1262 = vpop.permute.xlu0 %1261
        %1263 = vrot.lane.b32.xlu0 %v305, 48
        %v1264 = vpop.permute.xlu0 %1263
        %1265 = vrot.lane.b32.xlu0 %v308, 48
        %v1266 = vpop.permute.xlu0 %1265
        %1267 = vrot.lane.b32.xlu0 %v310, 48
        %v1268 = vpop.permute.xlu0 %1267
        %1269 = vrot.lane.b32.xlu0 %v313, 48
        %v1270 = vpop.permute.xlu0 %1269
        %1271 = vrot.lane.b32.xlu0 %v315, 48
        %v1272 = vpop.permute.xlu0 %1271
        %1273 = vrot.lane.b32.xlu0 %v318, 48
        %v1274 = vpop.permute.xlu0 %1273
        %1275 = vrot.lane.b32.xlu0 %v320, 48
        %v1276 = vpop.permute.xlu0 %1275
        %1277 = vrot.lane.b32.xlu0 %v323, 48
        %v1278 = vpop.permute.xlu0 %1277
        %1279 = vrot.lane.b32.xlu0 %v325, 48
        %v1280 = vpop.permute.xlu0 %1279
        %1281 = vrot.lane.b32.xlu0 %v328, 48
        %v1282 = vpop.permute.xlu0 %1281
        %1283 = vrot.lane.b32.xlu0 %v330, 48
        %v1284 = vpop.permute.xlu0 %1283
        %1285 = vrot.lane.b32.xlu0 %v821, 48
        %v1286 = vpop.permute.xlu0 %1285
        %1287 = vrot.lane.b32.xlu0 %v823, 48
        %v1288 = vpop.permute.xlu0 %1287
        %1289 = vrot.lane.b32.xlu0 %v1226, 48
        %v1290 = vpop.permute.xlu0 %1289
        %1291 = vrot.lane.b32.xlu0 %v1228, 48
        %v1292 = vpop.permute.xlu0 %1291
        %vm1325 = vcmask 458112
        %1326 = vst.msk [vmem:[#allocation2] sm:$0xff] %vm1325, %v1230
        %1327 = vst.msk [vmem:[#allocation2 + $0x10] sm:$0xff] %vm1325, %v1232
        %1328 = vst.msk [vmem:[#allocation2 + $0x20] sm:$0xff] %vm1325, %v1234
        %1329 = vst.msk [vmem:[#allocation2 + $0x30] sm:$0xff] %vm1325, %v1236
        %1330 = vst.msk [vmem:[#allocation2 + $0x40] sm:$0xff] %vm1325, %v1238
        %1331 = vst.msk [vmem:[#allocation2 + $0x50] sm:$0xff] %vm1325, %v1240
        %1332 = vst.msk [vmem:[#allocation2 + $0x60] sm:$0xff] %vm1325, %v1242
        %1333 = vst.msk [vmem:[#allocation2 + $0x70] sm:$0xff] %vm1325, %v1244
        %1334 = vst.msk [vmem:[#allocation2 + $0x80] sm:$0xff] %vm1325, %v1246
        %1335 = vst.msk [vmem:[#allocation2 + $0x90] sm:$0xff] %vm1325, %v1248
        %1336 = vst.msk [vmem:[#allocation2 + $0xa0] sm:$0xff] %vm1325, %v1250
        %1337 = vst.msk [vmem:[#allocation2 + $0xb0] sm:$0xff] %vm1325, %v1252
        %1338 = vst.msk [vmem:[#allocation2 + $0xc0] sm:$0xff] %vm1325, %v1254
        %1339 = vst.msk [vmem:[#allocation2 + $0xd0] sm:$0xff] %vm1325, %v1256
        %1340 = vst.msk [vmem:[#allocation2 + $0xe0] sm:$0xff] %vm1325, %v1258
        %1341 = vst.msk [vmem:[#allocation2 + $0xf0] sm:$0xff] %vm1325, %v1260
        %1342 = vst.msk [vmem:[#allocation2 + $0x100] sm:$0xff] %vm1325, %v1262
        %1343 = vst.msk [vmem:[#allocation2 + $0x110] sm:$0xff] %vm1325, %v1264
        %1344 = vst.msk [vmem:[#allocation2 + $0x120] sm:$0xff] %vm1325, %v1266
        %1345 = vst.msk [vmem:[#allocation2 + $0x130] sm:$0xff] %vm1325, %v1268
        %1346 = vst.msk [vmem:[#allocation2 + $0x140] sm:$0xff] %vm1325, %v1270
        %1347 = vst.msk [vmem:[#allocation2 + $0x150] sm:$0xff] %vm1325, %v1272
        %1348 = vst.msk [vmem:[#allocation2 + $0x160] sm:$0xff] %vm1325, %v1274
        %1349 = vst.msk [vmem:[#allocation2 + $0x170] sm:$0xff] %vm1325, %v1276
        %1350 = vst.msk [vmem:[#allocation2 + $0x180] sm:$0xff] %vm1325, %v1278
        %1351 = vst.msk [vmem:[#allocation2 + $0x190] sm:$0xff] %vm1325, %v1280
        %1352 = vst.msk [vmem:[#allocation2 + $0x1a0] sm:$0xff] %vm1325, %v1282
        %1353 = vst.msk [vmem:[#allocation2 + $0x1b0] sm:$0xff] %vm1325, %v1284
        %1354 = vst.msk [vmem:[#allocation2 + $0x1c0] sm:$0xff] %vm1325, %v1286
        %1355 = vst.msk [vmem:[#allocation2 + $0x1d0] sm:$0xff] %vm1325, %v1288
        %1356 = vst.msk [vmem:[#allocation2 + $0x1e0] sm:$0xff] %vm1325, %v1290
        %1357 = vst.msk [vmem:[#allocation2 + $0x1f0] sm:$0xff] %vm1325, %v1292
        %v1358 = vrot.slane %v196, 2
        %v1359 = vrot.slane %v197, 2
        %v1360 = vsel %vm396, %v1358, %v1359
        %v1361 = vrot.slane %v198, 2
        %v1362 = vsel %vm396, %v1359, %v1361
        %1363 = vrot.lane.b32.xlu0 %v409, 56
        %v1364 = vpop.permute.xlu0 %1363
        %1365 = vrot.lane.b32.xlu0 %v411, 56
        %v1366 = vpop.permute.xlu0 %1365
        %1367 = vrot.lane.b32.xlu0 %v414, 56
        %v1368 = vpop.permute.xlu0 %1367
        %1369 = vrot.lane.b32.xlu0 %v416, 56
        %v1370 = vpop.permute.xlu0 %1369
        %1371 = vrot.lane.b32.xlu0 %v419, 56
        %v1372 = vpop.permute.xlu0 %1371
        %1373 = vrot.lane.b32.xlu0 %v421, 56
        %v1374 = vpop.permute.xlu0 %1373
        %1375 = vrot.lane.b32.xlu0 %v424, 56
        %v1376 = vpop.permute.xlu0 %1375
        %1377 = vrot.lane.b32.xlu0 %v426, 56
        %v1378 = vpop.permute.xlu0 %1377
        %1379 = vrot.lane.b32.xlu0 %v429, 56
        %v1380 = vpop.permute.xlu0 %1379
        %1381 = vrot.lane.b32.xlu0 %v431, 56
        %v1382 = vpop.permute.xlu0 %1381
        %1383 = vrot.lane.b32.xlu0 %v434, 56
        %v1384 = vpop.permute.xlu0 %1383
        %1385 = vrot.lane.b32.xlu0 %v436, 56
        %v1386 = vpop.permute.xlu0 %1385
        %1387 = vrot.lane.b32.xlu0 %v439, 56
        %v1388 = vpop.permute.xlu0 %1387
        %1389 = vrot.lane.b32.xlu0 %v441, 56
        %v1390 = vpop.permute.xlu0 %1389
        %1391 = vrot.lane.b32.xlu0 %v444, 56
        %v1392 = vpop.permute.xlu0 %1391
        %1393 = vrot.lane.b32.xlu0 %v446, 56
        %v1394 = vpop.permute.xlu0 %1393
        %1395 = vrot.lane.b32.xlu0 %v449, 56
        %v1396 = vpop.permute.xlu0 %1395
        %1397 = vrot.lane.b32.xlu0 %v451, 56
        %v1398 = vpop.permute.xlu0 %1397
        %1399 = vrot.lane.b32.xlu0 %v454, 56
        %v1400 = vpop.permute.xlu0 %1399
        %1401 = vrot.lane.b32.xlu0 %v456, 56
        %v1402 = vpop.permute.xlu0 %1401
        %1403 = vrot.lane.b32.xlu0 %v459, 56
        %v1404 = vpop.permute.xlu0 %1403
        %1405 = vrot.lane.b32.xlu0 %v461, 56
        %v1406 = vpop.permute.xlu0 %1405
        %1407 = vrot.lane.b32.xlu0 %v464, 56
        %v1408 = vpop.permute.xlu0 %1407
        %1409 = vrot.lane.b32.xlu0 %v466, 56
        %v1410 = vpop.permute.xlu0 %1409
        %1411 = vrot.lane.b32.xlu0 %v469, 56
        %v1412 = vpop.permute.xlu0 %1411
        %1413 = vrot.lane.b32.xlu0 %v471, 56
        %v1414 = vpop.permute.xlu0 %1413
        %1415 = vrot.lane.b32.xlu0 %v474, 56
        %v1416 = vpop.permute.xlu0 %1415
        %1417 = vrot.lane.b32.xlu0 %v476, 56
        %v1418 = vpop.permute.xlu0 %1417
        %1419 = vrot.lane.b32.xlu0 %v955, 56
        %v1420 = vpop.permute.xlu0 %1419
        %1421 = vrot.lane.b32.xlu0 %v957, 56
        %v1422 = vpop.permute.xlu0 %1421
        %1423 = vrot.lane.b32.xlu0 %v1360, 56
        %v1424 = vpop.permute.xlu0 %1423
        %1425 = vrot.lane.b32.xlu0 %v1362, 56
        %v1426 = vpop.permute.xlu0 %1425
        %vm1459 = vcmask 523712
        %1460 = vst.msk [vmem:[#allocation2] sm:$0xff] %vm1459, %v1364
        %1461 = vst.msk [vmem:[#allocation2 + $0x10] sm:$0xff] %vm1459, %v1366
        %1462 = vst.msk [vmem:[#allocation2 + $0x20] sm:$0xff] %vm1459, %v1368
        %1463 = vst.msk [vmem:[#allocation2 + $0x30] sm:$0xff] %vm1459, %v1370
        %1464 = vst.msk [vmem:[#allocation2 + $0x40] sm:$0xff] %vm1459, %v1372
        %1465 = vst.msk [vmem:[#allocation2 + $0x50] sm:$0xff] %vm1459, %v1374
        %1466 = vst.msk [vmem:[#allocation2 + $0x60] sm:$0xff] %vm1459, %v1376
        %1467 = vst.msk [vmem:[#allocation2 + $0x70] sm:$0xff] %vm1459, %v1378
        %1468 = vst.msk [vmem:[#allocation2 + $0x80] sm:$0xff] %vm1459, %v1380
        %1469 = vst.msk [vmem:[#allocation2 + $0x90] sm:$0xff] %vm1459, %v1382
        %1470 = vst.msk [vmem:[#allocation2 + $0xa0] sm:$0xff] %vm1459, %v1384
        %1471 = vst.msk [vmem:[#allocation2 + $0xb0] sm:$0xff] %vm1459, %v1386
        %1472 = vst.msk [vmem:[#allocation2 + $0xc0] sm:$0xff] %vm1459, %v1388
        %1473 = vst.msk [vmem:[#allocation2 + $0xd0] sm:$0xff] %vm1459, %v1390
        %1474 = vst.msk [vmem:[#allocation2 + $0xe0] sm:$0xff] %vm1459, %v1392
        %1475 = vst.msk [vmem:[#allocation2 + $0xf0] sm:$0xff] %vm1459, %v1394
        %1476 = vst.msk [vmem:[#allocation2 + $0x100] sm:$0xff] %vm1459, %v1396
        %1477 = vst.msk [vmem:[#allocation2 + $0x110] sm:$0xff] %vm1459, %v1398
        %1478 = vst.msk [vmem:[#allocation2 + $0x120] sm:$0xff] %vm1459, %v1400
        %1479 = vst.msk [vmem:[#allocation2 + $0x130] sm:$0xff] %vm1459, %v1402
        %1480 = vst.msk [vmem:[#allocation2 + $0x140] sm:$0xff] %vm1459, %v1404
        %1481 = vst.msk [vmem:[#allocation2 + $0x150] sm:$0xff] %vm1459, %v1406
        %1482 = vst.msk [vmem:[#allocation2 + $0x160] sm:$0xff] %vm1459, %v1408
        %1483 = vst.msk [vmem:[#allocation2 + $0x170] sm:$0xff] %vm1459, %v1410
        %1484 = vst.msk [vmem:[#allocation2 + $0x180] sm:$0xff] %vm1459, %v1412
        %1485 = vst.msk [vmem:[#allocation2 + $0x190] sm:$0xff] %vm1459, %v1414
        %1486 = vst.msk [vmem:[#allocation2 + $0x1a0] sm:$0xff] %vm1459, %v1416
        %1487 = vst.msk [vmem:[#allocation2 + $0x1b0] sm:$0xff] %vm1459, %v1418
        %1488 = vst.msk [vmem:[#allocation2 + $0x1c0] sm:$0xff] %vm1459, %v1420
        %1489 = vst.msk [vmem:[#allocation2 + $0x1d0] sm:$0xff] %vm1459, %v1422
        %1490 = vst.msk [vmem:[#allocation2 + $0x1e0] sm:$0xff] %vm1459, %v1424
        %1491 = vst.msk [vmem:[#allocation2 + $0x1f0] sm:$0xff] %vm1459, %v1426
        %v1492 = vrot.slane %v196, 3
        %v1493 = vrot.slane %v197, 3
        %v1494 = vsel %vm606, %v1492, %v1493
        %v1495 = vrot.slane %v198, 3
        %v1496 = vsel %vm606, %v1493, %v1495
        %1497 = vrot.lane.b32.xlu0 %v619, 64
        %v1498 = vpop.permute.xlu0 %1497
        %1499 = vrot.lane.b32.xlu0 %v621, 64
        %v1500 = vpop.permute.xlu0 %1499
        %1501 = vrot.lane.b32.xlu0 %v624, 64
        %v1502 = vpop.permute.xlu0 %1501
        %1503 = vrot.lane.b32.xlu0 %v626, 64
        %v1504 = vpop.permute.xlu0 %1503
        %1505 = vrot.lane.b32.xlu0 %v629, 64
        %v1506 = vpop.permute.xlu0 %1505
        %1507 = vrot.lane.b32.xlu0 %v631, 64
        %v1508 = vpop.permute.xlu0 %1507
        %1509 = vrot.lane.b32.xlu0 %v634, 64
        %v1510 = vpop.permute.xlu0 %1509
        %1511 = vrot.lane.b32.xlu0 %v636, 64
        %v1512 = vpop.permute.xlu0 %1511
        %1513 = vrot.lane.b32.xlu0 %v639, 64
        %v1514 = vpop.permute.xlu0 %1513
        %1515 = vrot.lane.b32.xlu0 %v641, 64
        %v1516 = vpop.permute.xlu0 %1515
        %1517 = vrot.lane.b32.xlu0 %v644, 64
        %v1518 = vpop.permute.xlu0 %1517
        %1519 = vrot.lane.b32.xlu0 %v646, 64
        %v1520 = vpop.permute.xlu0 %1519
        %1521 = vrot.lane.b32.xlu0 %v649, 64
        %v1522 = vpop.permute.xlu0 %1521
        %1523 = vrot.lane.b32.xlu0 %v651, 64
        %v1524 = vpop.permute.xlu0 %1523
        %1525 = vrot.lane.b32.xlu0 %v654, 64
        %v1526 = vpop.permute.xlu0 %1525
        %1527 = vrot.lane.b32.xlu0 %v656, 64
        %v1528 = vpop.permute.xlu0 %1527
        %1529 = vrot.lane.b32.xlu0 %v659, 64
        %v1530 = vpop.permute.xlu0 %1529
        %1531 = vrot.lane.b32.xlu0 %v661, 64
        %v1532 = vpop.permute.xlu0 %1531
        %1533 = vrot.lane.b32.xlu0 %v664, 64
        %v1534 = vpop.permute.xlu0 %1533
        %1535 = vrot.lane.b32.xlu0 %v666, 64
        %v1536 = vpop.permute.xlu0 %1535
        %1537 = vrot.lane.b32.xlu0 %v669, 64
        %v1538 = vpop.permute.xlu0 %1537
        %1539 = vrot.lane.b32.xlu0 %v671, 64
        %v1540 = vpop.permute.xlu0 %1539
        %1541 = vrot.lane.b32.xlu0 %v674, 64
        %v1542 = vpop.permute.xlu0 %1541
        %1543 = vrot.lane.b32.xlu0 %v676, 64
        %v1544 = vpop.permute.xlu0 %1543
        %1545 = vrot.lane.b32.xlu0 %v679, 64
        %v1546 = vpop.permute.xlu0 %1545
        %1547 = vrot.lane.b32.xlu0 %v681, 64
        %v1548 = vpop.permute.xlu0 %1547
        %1549 = vrot.lane.b32.xlu0 %v684, 64
        %v1550 = vpop.permute.xlu0 %1549
        %1551 = vrot.lane.b32.xlu0 %v686, 64
        %v1552 = vpop.permute.xlu0 %1551
        %1553 = vrot.lane.b32.xlu0 %v1089, 64
        %v1554 = vpop.permute.xlu0 %1553
        %1555 = vrot.lane.b32.xlu0 %v1091, 64
        %v1556 = vpop.permute.xlu0 %1555
        %1557 = vrot.lane.b32.xlu0 %v1494, 64
        %v1558 = vpop.permute.xlu0 %1557
        %1559 = vrot.lane.b32.xlu0 %v1496, 64
        %v1560 = vpop.permute.xlu0 %1559
        %vm1593 = vcmask 589312
        %1594 = vst.msk [vmem:[#allocation2] sm:$0xff] %vm1593, %v1498
        %1595 = vst.msk [vmem:[#allocation2 + $0x10] sm:$0xff] %vm1593, %v1500
        %1596 = vst.msk [vmem:[#allocation2 + $0x20] sm:$0xff] %vm1593, %v1502
        %1597 = vst.msk [vmem:[#allocation2 + $0x30] sm:$0xff] %vm1593, %v1504
        %1598 = vst.msk [vmem:[#allocation2 + $0x40] sm:$0xff] %vm1593, %v1506
        %1599 = vst.msk [vmem:[#allocation2 + $0x50] sm:$0xff] %vm1593, %v1508
        %1600 = vst.msk [vmem:[#allocation2 + $0x60] sm:$0xff] %vm1593, %v1510
        %1601 = vst.msk [vmem:[#allocation2 + $0x70] sm:$0xff] %vm1593, %v1512
        %1602 = vst.msk [vmem:[#allocation2 + $0x80] sm:$0xff] %vm1593, %v1514
        %1603 = vst.msk [vmem:[#allocation2 + $0x90] sm:$0xff] %vm1593, %v1516
        %1604 = vst.msk [vmem:[#allocation2 + $0xa0] sm:$0xff] %vm1593, %v1518
        %1605 = vst.msk [vmem:[#allocation2 + $0xb0] sm:$0xff] %vm1593, %v1520
        %1606 = vst.msk [vmem:[#allocation2 + $0xc0] sm:$0xff] %vm1593, %v1522
        %1607 = vst.msk [vmem:[#allocation2 + $0xd0] sm:$0xff] %vm1593, %v1524
        %1608 = vst.msk [vmem:[#allocation2 + $0xe0] sm:$0xff] %vm1593, %v1526
        %1609 = vst.msk [vmem:[#allocation2 + $0xf0] sm:$0xff] %vm1593, %v1528
        %1610 = vst.msk [vmem:[#allocation2 + $0x100] sm:$0xff] %vm1593, %v1530
        %1611 = vst.msk [vmem:[#allocation2 + $0x110] sm:$0xff] %vm1593, %v1532
        %1612 = vst.msk [vmem:[#allocation2 + $0x120] sm:$0xff] %vm1593, %v1534
        %1613 = vst.msk [vmem:[#allocation2 + $0x130] sm:$0xff] %vm1593, %v1536
        %1614 = vst.msk [vmem:[#allocation2 + $0x140] sm:$0xff] %vm1593, %v1538
        %1615 = vst.msk [vmem:[#allocation2 + $0x150] sm:$0xff] %vm1593, %v1540
        %1616 = vst.msk [vmem:[#allocation2 + $0x160] sm:$0xff] %vm1593, %v1542
        %1617 = vst.msk [vmem:[#allocation2 + $0x170] sm:$0xff] %vm1593, %v1544
        %1618 = vst.msk [vmem:[#allocation2 + $0x180] sm:$0xff] %vm1593, %v1546
        %1619 = vst.msk [vmem:[#allocation2 + $0x190] sm:$0xff] %vm1593, %v1548
        %1620 = vst.msk [vmem:[#allocation2 + $0x1a0] sm:$0xff] %vm1593, %v1550
        %1621 = vst.msk [vmem:[#allocation2 + $0x1b0] sm:$0xff] %vm1593, %v1552
        %1622 = vst.msk [vmem:[#allocation2 + $0x1c0] sm:$0xff] %vm1593, %v1554
        %1623 = vst.msk [vmem:[#allocation2 + $0x1d0] sm:$0xff] %vm1593, %v1556
        %1624 = vst.msk [vmem:[#allocation2 + $0x1e0] sm:$0xff] %vm1593, %v1558
        %1625 = vst.msk [vmem:[#allocation2 + $0x1f0] sm:$0xff] %vm1593, %v1560
        %1628 = vrot.lane.b32.xlu0 %v142, 72
        %v1629 = vpop.permute.xlu0 %1628
        %1630 = vrot.lane.b32.xlu0 %v143, 72
        %v1631 = vpop.permute.xlu0 %1630
        %1632 = vrot.lane.b32.xlu0 %v145, 72
        %v1633 = vpop.permute.xlu0 %1632
        %1634 = vrot.lane.b32.xlu0 %v146, 72
        %v1635 = vpop.permute.xlu0 %1634
        %1636 = vrot.lane.b32.xlu0 %v148, 72
        %v1637 = vpop.permute.xlu0 %1636
        %1638 = vrot.lane.b32.xlu0 %v149, 72
        %v1639 = vpop.permute.xlu0 %1638
        %1640 = vrot.lane.b32.xlu0 %v151, 72
        %v1641 = vpop.permute.xlu0 %1640
        %1642 = vrot.lane.b32.xlu0 %v152, 72
        %v1643 = vpop.permute.xlu0 %1642
        %1644 = vrot.lane.b32.xlu0 %v154, 72
        %v1645 = vpop.permute.xlu0 %1644
        %1646 = vrot.lane.b32.xlu0 %v155, 72
        %v1647 = vpop.permute.xlu0 %1646
        %1648 = vrot.lane.b32.xlu0 %v157, 72
        %v1649 = vpop.permute.xlu0 %1648
        %1650 = vrot.lane.b32.xlu0 %v158, 72
        %v1651 = vpop.permute.xlu0 %1650
        %1652 = vrot.lane.b32.xlu0 %v160, 72
        %v1653 = vpop.permute.xlu0 %1652
        %1654 = vrot.lane.b32.xlu0 %v161, 72
        %v1655 = vpop.permute.xlu0 %1654
        %1656 = vrot.lane.b32.xlu0 %v163, 72
        %v1657 = vpop.permute.xlu0 %1656
        %1658 = vrot.lane.b32.xlu0 %v164, 72
        %v1659 = vpop.permute.xlu0 %1658
        %1660 = vrot.lane.b32.xlu0 %v166, 72
        %v1661 = vpop.permute.xlu0 %1660
        %1662 = vrot.lane.b32.xlu0 %v167, 72
        %v1663 = vpop.permute.xlu0 %1662
        %1664 = vrot.lane.b32.xlu0 %v169, 72
        %v1665 = vpop.permute.xlu0 %1664
        %1666 = vrot.lane.b32.xlu0 %v170, 72
        %v1667 = vpop.permute.xlu0 %1666
        %1668 = vrot.lane.b32.xlu0 %v172, 72
        %v1669 = vpop.permute.xlu0 %1668
        %1670 = vrot.lane.b32.xlu0 %v173, 72
        %v1671 = vpop.permute.xlu0 %1670
        %1672 = vrot.lane.b32.xlu0 %v175, 72
        %v1673 = vpop.permute.xlu0 %1672
        %1674 = vrot.lane.b32.xlu0 %v176, 72
        %v1675 = vpop.permute.xlu0 %1674
        %1676 = vrot.lane.b32.xlu0 %v178, 72
        %v1677 = vpop.permute.xlu0 %1676
        %1678 = vrot.lane.b32.xlu0 %v179, 72
        %v1679 = vpop.permute.xlu0 %1678
        %1680 = vrot.lane.b32.xlu0 %v181, 72
        %v1681 = vpop.permute.xlu0 %1680
        %1682 = vrot.lane.b32.xlu0 %v182, 72
        %v1683 = vpop.permute.xlu0 %1682
        %1684 = vrot.lane.b32.xlu0 %v184, 72
        %v1685 = vpop.permute.xlu0 %1684
        %1686 = vrot.lane.b32.xlu0 %v185, 72
        %v1687 = vpop.permute.xlu0 %1686
        %1688 = vrot.lane.b32.xlu0 %v187, 72
        %v1689 = vpop.permute.xlu0 %1688
        %1690 = vrot.lane.b32.xlu0 %v188, 72
        %v1691 = vpop.permute.xlu0 %1690
        %vm1724 = vcmask 654912
        %1725 = vst.msk [vmem:[#allocation2] sm:$0xff] %vm1724, %v1629
        %1726 = vst.msk [vmem:[#allocation2 + $0x10] sm:$0xff] %vm1724, %v1631
        %1727 = vst.msk [vmem:[#allocation2 + $0x20] sm:$0xff] %vm1724, %v1633
        %1728 = vst.msk [vmem:[#allocation2 + $0x30] sm:$0xff] %vm1724, %v1635
        %1729 = vst.msk [vmem:[#allocation2 + $0x40] sm:$0xff] %vm1724, %v1637
        %1730 = vst.msk [vmem:[#allocation2 + $0x50] sm:$0xff] %vm1724, %v1639
        %1731 = vst.msk [vmem:[#allocation2 + $0x60] sm:$0xff] %vm1724, %v1641
        %1732 = vst.msk [vmem:[#allocation2 + $0x70] sm:$0xff] %vm1724, %v1643
        %1733 = vst.msk [vmem:[#allocation2 + $0x80] sm:$0xff] %vm1724, %v1645
        %1734 = vst.msk [vmem:[#allocation2 + $0x90] sm:$0xff] %vm1724, %v1647
        %1735 = vst.msk [vmem:[#allocation2 + $0xa0] sm:$0xff] %vm1724, %v1649
        %1736 = vst.msk [vmem:[#allocation2 + $0xb0] sm:$0xff] %vm1724, %v1651
        %1737 = vst.msk [vmem:[#allocation2 + $0xc0] sm:$0xff] %vm1724, %v1653
        %1738 = vst.msk [vmem:[#allocation2 + $0xd0] sm:$0xff] %vm1724, %v1655
        %1739 = vst.msk [vmem:[#allocation2 + $0xe0] sm:$0xff] %vm1724, %v1657
        %1740 = vst.msk [vmem:[#allocation2 + $0xf0] sm:$0xff] %vm1724, %v1659
        %1741 = vst.msk [vmem:[#allocation2 + $0x100] sm:$0xff] %vm1724, %v1661
        %1742 = vst.msk [vmem:[#allocation2 + $0x110] sm:$0xff] %vm1724, %v1663
        %1743 = vst.msk [vmem:[#allocation2 + $0x120] sm:$0xff] %vm1724, %v1665
        %1744 = vst.msk [vmem:[#allocation2 + $0x130] sm:$0xff] %vm1724, %v1667
        %1745 = vst.msk [vmem:[#allocation2 + $0x140] sm:$0xff] %vm1724, %v1669
        %1746 = vst.msk [vmem:[#allocation2 + $0x150] sm:$0xff] %vm1724, %v1671
        %1747 = vst.msk [vmem:[#allocation2 + $0x160] sm:$0xff] %vm1724, %v1673
        %1748 = vst.msk [vmem:[#allocation2 + $0x170] sm:$0xff] %vm1724, %v1675
        %1749 = vst.msk [vmem:[#allocation2 + $0x180] sm:$0xff] %vm1724, %v1677
        %1750 = vst.msk [vmem:[#allocation2 + $0x190] sm:$0xff] %vm1724, %v1679
        %1751 = vst.msk [vmem:[#allocation2 + $0x1a0] sm:$0xff] %vm1724, %v1681
        %1752 = vst.msk [vmem:[#allocation2 + $0x1b0] sm:$0xff] %vm1724, %v1683
        %1753 = vst.msk [vmem:[#allocation2 + $0x1c0] sm:$0xff] %vm1724, %v1685
        %1754 = vst.msk [vmem:[#allocation2 + $0x1d0] sm:$0xff] %vm1724, %v1687
        %1755 = vst.msk [vmem:[#allocation2 + $0x1e0] sm:$0xff] %vm1724, %v1689
        %1756 = vst.msk [vmem:[#allocation2 + $0x1f0] sm:$0xff] %vm1724, %v1691
        %v1758 = vrot.slane %v142, 2
        %v1759 = vrot.slane %v143, 2
        %v1760 = vsel %vm396, %v1758, %v1759
        %v1761 = vrot.slane %v144, 2
        %v1762 = vsel %vm396, %v1759, %v1761
        %1763 = vrot.lane.b32.xlu0 %v1760, 80
        %v1764 = vpop.permute.xlu0 %1763
        %1765 = vrot.lane.b32.xlu0 %v1762, 80
        %v1766 = vpop.permute.xlu0 %1765
        %1767 = vrot.lane.b32.xlu0 %v399, 80
        %v1768 = vpop.permute.xlu0 %1767
        %1769 = vrot.lane.b32.xlu0 %v401, 80
        %v1770 = vpop.permute.xlu0 %1769
        %1771 = vrot.lane.b32.xlu0 %v404, 80
        %v1772 = vpop.permute.xlu0 %1771
        %1773 = vrot.lane.b32.xlu0 %v406, 80
        %v1774 = vpop.permute.xlu0 %1773
        %1775 = vrot.lane.b32.xlu0 %v409, 80
        %v1776 = vpop.permute.xlu0 %1775
        %1777 = vrot.lane.b32.xlu0 %v411, 80
        %v1778 = vpop.permute.xlu0 %1777
        %1779 = vrot.lane.b32.xlu0 %v414, 80
        %v1780 = vpop.permute.xlu0 %1779
        %1781 = vrot.lane.b32.xlu0 %v416, 80
        %v1782 = vpop.permute.xlu0 %1781
        %1783 = vrot.lane.b32.xlu0 %v419, 80
        %v1784 = vpop.permute.xlu0 %1783
        %1785 = vrot.lane.b32.xlu0 %v421, 80
        %v1786 = vpop.permute.xlu0 %1785
        %1787 = vrot.lane.b32.xlu0 %v424, 80
        %v1788 = vpop.permute.xlu0 %1787
        %1789 = vrot.lane.b32.xlu0 %v426, 80
        %v1790 = vpop.permute.xlu0 %1789
        %1791 = vrot.lane.b32.xlu0 %v429, 80
        %v1792 = vpop.permute.xlu0 %1791
        %1793 = vrot.lane.b32.xlu0 %v431, 80
        %v1794 = vpop.permute.xlu0 %1793
        %1795 = vrot.lane.b32.xlu0 %v434, 80
        %v1796 = vpop.permute.xlu0 %1795
        %1797 = vrot.lane.b32.xlu0 %v436, 80
        %v1798 = vpop.permute.xlu0 %1797
        %1799 = vrot.lane.b32.xlu0 %v439, 80
        %v1800 = vpop.permute.xlu0 %1799
        %1801 = vrot.lane.b32.xlu0 %v441, 80
        %v1802 = vpop.permute.xlu0 %1801
        %1803 = vrot.lane.b32.xlu0 %v444, 80
        %v1804 = vpop.permute.xlu0 %1803
        %1805 = vrot.lane.b32.xlu0 %v446, 80
        %v1806 = vpop.permute.xlu0 %1805
        %1807 = vrot.lane.b32.xlu0 %v449, 80
        %v1808 = vpop.permute.xlu0 %1807
        %1809 = vrot.lane.b32.xlu0 %v451, 80
        %v1810 = vpop.permute.xlu0 %1809
        %1811 = vrot.lane.b32.xlu0 %v454, 80
        %v1812 = vpop.permute.xlu0 %1811
        %1813 = vrot.lane.b32.xlu0 %v456, 80
        %v1814 = vpop.permute.xlu0 %1813
        %1815 = vrot.lane.b32.xlu0 %v459, 80
        %v1816 = vpop.permute.xlu0 %1815
        %1817 = vrot.lane.b32.xlu0 %v461, 80
        %v1818 = vpop.permute.xlu0 %1817
        %1819 = vrot.lane.b32.xlu0 %v464, 80
        %v1820 = vpop.permute.xlu0 %1819
        %1821 = vrot.lane.b32.xlu0 %v466, 80
        %v1822 = vpop.permute.xlu0 %1821
        %1823 = vrot.lane.b32.xlu0 %v469, 80
        %v1824 = vpop.permute.xlu0 %1823
        %1825 = vrot.lane.b32.xlu0 %v471, 80
        %v1826 = vpop.permute.xlu0 %1825
        %vm1859 = vcmask 720512
        %1860 = vst.msk [vmem:[#allocation2] sm:$0xff] %vm1859, %v1764
        %1861 = vst.msk [vmem:[#allocation2 + $0x10] sm:$0xff] %vm1859, %v1766
        %1862 = vst.msk [vmem:[#allocation2 + $0x20] sm:$0xff] %vm1859, %v1768
        %1863 = vst.msk [vmem:[#allocation2 + $0x30] sm:$0xff] %vm1859, %v1770
        %1864 = vst.msk [vmem:[#allocation2 + $0x40] sm:$0xff] %vm1859, %v1772
        %1865 = vst.msk [vmem:[#allocation2 + $0x50] sm:$0xff] %vm1859, %v1774
        %1866 = vst.msk [vmem:[#allocation2 + $0x60] sm:$0xff] %vm1859, %v1776
        %1867 = vst.msk [vmem:[#allocation2 + $0x70] sm:$0xff] %vm1859, %v1778
        %1868 = vst.msk [vmem:[#allocation2 + $0x80] sm:$0xff] %vm1859, %v1780
        %1869 = vst.msk [vmem:[#allocation2 + $0x90] sm:$0xff] %vm1859, %v1782
        %1870 = vst.msk [vmem:[#allocation2 + $0xa0] sm:$0xff] %vm1859, %v1784
        %1871 = vst.msk [vmem:[#allocation2 + $0xb0] sm:$0xff] %vm1859, %v1786
        %1872 = vst.msk [vmem:[#allocation2 + $0xc0] sm:$0xff] %vm1859, %v1788
        %1873 = vst.msk [vmem:[#allocation2 + $0xd0] sm:$0xff] %vm1859, %v1790
        %1874 = vst.msk [vmem:[#allocation2 + $0xe0] sm:$0xff] %vm1859, %v1792
        %1875 = vst.msk [vmem:[#allocation2 + $0xf0] sm:$0xff] %vm1859, %v1794
        %1876 = vst.msk [vmem:[#allocation2 + $0x100] sm:$0xff] %vm1859, %v1796
        %1877 = vst.msk [vmem:[#allocation2 + $0x110] sm:$0xff] %vm1859, %v1798
        %1878 = vst.msk [vmem:[#allocation2 + $0x120] sm:$0xff] %vm1859, %v1800
        %1879 = vst.msk [vmem:[#allocation2 + $0x130] sm:$0xff] %vm1859, %v1802
        %1880 = vst.msk [vmem:[#allocation2 + $0x140] sm:$0xff] %vm1859, %v1804
        %1881 = vst.msk [vmem:[#allocation2 + $0x150] sm:$0xff] %vm1859, %v1806
        %1882 = vst.msk [vmem:[#allocation2 + $0x160] sm:$0xff] %vm1859, %v1808
        %1883 = vst.msk [vmem:[#allocation2 + $0x170] sm:$0xff] %vm1859, %v1810
        %1884 = vst.msk [vmem:[#allocation2 + $0x180] sm:$0xff] %vm1859, %v1812
        %1885 = vst.msk [vmem:[#allocation2 + $0x190] sm:$0xff] %vm1859, %v1814
        %1886 = vst.msk [vmem:[#allocation2 + $0x1a0] sm:$0xff] %vm1859, %v1816
        %1887 = vst.msk [vmem:[#allocation2 + $0x1b0] sm:$0xff] %vm1859, %v1818
        %1888 = vst.msk [vmem:[#allocation2 + $0x1c0] sm:$0xff] %vm1859, %v1820
        %1889 = vst.msk [vmem:[#allocation2 + $0x1d0] sm:$0xff] %vm1859, %v1822
        %1890 = vst.msk [vmem:[#allocation2 + $0x1e0] sm:$0xff] %vm1859, %v1824
        %1891 = vst.msk [vmem:[#allocation2 + $0x1f0] sm:$0xff] %vm1859, %v1826
        %vm1892 = vcmask 1043456
        %v1893 = vrot.slane %v142, 4
        %v1894 = vrot.slane %v143, 4
        %v1895 = vsel %vm1892, %v1893, %v1894
        %v1896 = vrot.slane %v144, 4
        %v1897 = vsel %vm1892, %v1894, %v1896
        %v1898 = vrot.slane %v145, 4
        %v1899 = vrot.slane %v146, 4
        %v1900 = vsel %vm1892, %v1898, %v1899
        %v1901 = vrot.slane %v147, 4
        %v1902 = vsel %vm1892, %v1899, %v1901
        %v1903 = vrot.slane %v148, 4
        %v1904 = vrot.slane %v149, 4
        %v1905 = vsel %vm1892, %v1903, %v1904
        %v1906 = vrot.slane %v150, 4
        %v1907 = vsel %vm1892, %v1904, %v1906
        %v1908 = vrot.slane %v151, 4
        %v1909 = vrot.slane %v152, 4
        %v1910 = vsel %vm1892, %v1908, %v1909
        %v1911 = vrot.slane %v153, 4
        %v1912 = vsel %vm1892, %v1909, %v1911
        %v1913 = vrot.slane %v154, 4
        %v1914 = vrot.slane %v155, 4
        %v1915 = vsel %vm1892, %v1913, %v1914
        %v1916 = vrot.slane %v156, 4
        %v1917 = vsel %vm1892, %v1914, %v1916
        %v1918 = vrot.slane %v157, 4
        %v1919 = vrot.slane %v158, 4
        %v1920 = vsel %vm1892, %v1918, %v1919
        %v1921 = vrot.slane %v159, 4
        %v1922 = vsel %vm1892, %v1919, %v1921
        %v1923 = vrot.slane %v160, 4
        %v1924 = vrot.slane %v161, 4
        %v1925 = vsel %vm1892, %v1923, %v1924
        %v1926 = vrot.slane %v162, 4
        %v1927 = vsel %vm1892, %v1924, %v1926
        %v1928 = vrot.slane %v163, 4
        %v1929 = vrot.slane %v164, 4
        %v1930 = vsel %vm1892, %v1928, %v1929
        %v1931 = vrot.slane %v165, 4
        %v1932 = vsel %vm1892, %v1929, %v1931
        %v1933 = vrot.slane %v166, 4
        %v1934 = vrot.slane %v167, 4
        %v1935 = vsel %vm1892, %v1933, %v1934
        %v1936 = vrot.slane %v168, 4
        %v1937 = vsel %vm1892, %v1934, %v1936
        %v1938 = vrot.slane %v169, 4
        %v1939 = vrot.slane %v170, 4
        %v1940 = vsel %vm1892, %v1938, %v1939
        %v1941 = vrot.slane %v171, 4
        %v1942 = vsel %vm1892, %v1939, %v1941
        %v1943 = vrot.slane %v172, 4
        %v1944 = vrot.slane %v173, 4
        %v1945 = vsel %vm1892, %v1943, %v1944
        %v1946 = vrot.slane %v174, 4
        %v1947 = vsel %vm1892, %v1944, %v1946
        %v1948 = vrot.slane %v175, 4
        %v1949 = vrot.slane %v176, 4
        %v1950 = vsel %vm1892, %v1948, %v1949
        %v1951 = vrot.slane %v177, 4
        %v1952 = vsel %vm1892, %v1949, %v1951
        %v1953 = vrot.slane %v178, 4
        %v1954 = vrot.slane %v179, 4
        %v1955 = vsel %vm1892, %v1953, %v1954
        %v1956 = vrot.slane %v180, 4
        %v1957 = vsel %vm1892, %v1954, %v1956
        %v1958 = vrot.slane %v181, 4
        %v1959 = vrot.slane %v182, 4
        %v1960 = vsel %vm1892, %v1958, %v1959
        %v1961 = vrot.slane %v183, 4
        %v1962 = vsel %vm1892, %v1959, %v1961
        %v1963 = vrot.slane %v184, 4
        %v1964 = vrot.slane %v185, 4
        %v1965 = vsel %vm1892, %v1963, %v1964
        %v1966 = vrot.slane %v186, 4
        %v1967 = vsel %vm1892, %v1964, %v1966
        %v1968 = vrot.slane %v187, 4
        %v1969 = vrot.slane %v188, 4
        %v1970 = vsel %vm1892, %v1968, %v1969
        %v1971 = vrot.slane %v189, 4
        %v1972 = vsel %vm1892, %v1969, %v1971
        %1973 = vrot.lane.b32.xlu0 %v1895, 88
        %v1974 = vpop.permute.xlu0 %1973
        %1975 = vrot.lane.b32.xlu0 %v1897, 88
        %v1976 = vpop.permute.xlu0 %1975
        %1977 = vrot.lane.b32.xlu0 %v1900, 88
        %v1978 = vpop.permute.xlu0 %1977
        %1979 = vrot.lane.b32.xlu0 %v1902, 88
        %v1980 = vpop.permute.xlu0 %1979
        %1981 = vrot.lane.b32.xlu0 %v1905, 88
        %v1982 = vpop.permute.xlu0 %1981
        %1983 = vrot.lane.b32.xlu0 %v1907, 88
        %v1984 = vpop.permute.xlu0 %1983
        %1985 = vrot.lane.b32.xlu0 %v1910, 88
        %v1986 = vpop.permute.xlu0 %1985
        %1987 = vrot.lane.b32.xlu0 %v1912, 88
        %v1988 = vpop.permute.xlu0 %1987
        %1989 = vrot.lane.b32.xlu0 %v1915, 88
        %v1990 = vpop.permute.xlu0 %1989
        %1991 = vrot.lane.b32.xlu0 %v1917, 88
        %v1992 = vpop.permute.xlu0 %1991
        %1993 = vrot.lane.b32.xlu0 %v1920, 88
        %v1994 = vpop.permute.xlu0 %1993
        %1995 = vrot.lane.b32.xlu0 %v1922, 88
        %v1996 = vpop.permute.xlu0 %1995
        %1997 = vrot.lane.b32.xlu0 %v1925, 88
        %v1998 = vpop.permute.xlu0 %1997
        %1999 = vrot.lane.b32.xlu0 %v1927, 88
        %v2000 = vpop.permute.xlu0 %1999
        %2001 = vrot.lane.b32.xlu0 %v1930, 88
        %v2002 = vpop.permute.xlu0 %2001
        %2003 = vrot.lane.b32.xlu0 %v1932, 88
        %v2004 = vpop.permute.xlu0 %2003
        %2005 = vrot.lane.b32.xlu0 %v1935, 88
        %v2006 = vpop.permute.xlu0 %2005
        %2007 = vrot.lane.b32.xlu0 %v1937, 88
        %v2008 = vpop.permute.xlu0 %2007
        %2009 = vrot.lane.b32.xlu0 %v1940, 88
        %v2010 = vpop.permute.xlu0 %2009
        %2011 = vrot.lane.b32.xlu0 %v1942, 88
        %v2012 = vpop.permute.xlu0 %2011
        %2013 = vrot.lane.b32.xlu0 %v1945, 88
        %v2014 = vpop.permute.xlu0 %2013
        %2015 = vrot.lane.b32.xlu0 %v1947, 88
        %v2016 = vpop.permute.xlu0 %2015
        %2017 = vrot.lane.b32.xlu0 %v1950, 88
        %v2018 = vpop.permute.xlu0 %2017
        %2019 = vrot.lane.b32.xlu0 %v1952, 88
        %v2020 = vpop.permute.xlu0 %2019
        %2021 = vrot.lane.b32.xlu0 %v1955, 88
        %v2022 = vpop.permute.xlu0 %2021
        %2023 = vrot.lane.b32.xlu0 %v1957, 88
        %v2024 = vpop.permute.xlu0 %2023
        %2025 = vrot.lane.b32.xlu0 %v1960, 88
        %v2026 = vpop.permute.xlu0 %2025
        %2027 = vrot.lane.b32.xlu0 %v1962, 88
        %v2028 = vpop.permute.xlu0 %2027
        %2029 = vrot.lane.b32.xlu0 %v1965, 88
        %v2030 = vpop.permute.xlu0 %2029
        %2031 = vrot.lane.b32.xlu0 %v1967, 88
        %v2032 = vpop.permute.xlu0 %2031
        %2033 = vrot.lane.b32.xlu0 %v1970, 88
        %v2034 = vpop.permute.xlu0 %2033
        %2035 = vrot.lane.b32.xlu0 %v1972, 88
        %v2036 = vpop.permute.xlu0 %2035
        %vm2069 = vcmask 786112
        %2070 = vst.msk [vmem:[#allocation2] sm:$0xff] %vm2069, %v1974
        %2071 = vst.msk [vmem:[#allocation2 + $0x10] sm:$0xff] %vm2069, %v1976
        %2072 = vst.msk [vmem:[#allocation2 + $0x20] sm:$0xff] %vm2069, %v1978
        %2073 = vst.msk [vmem:[#allocation2 + $0x30] sm:$0xff] %vm2069, %v1980
        %2074 = vst.msk [vmem:[#allocation2 + $0x40] sm:$0xff] %vm2069, %v1982
        %2075 = vst.msk [vmem:[#allocation2 + $0x50] sm:$0xff] %vm2069, %v1984
        %2076 = vst.msk [vmem:[#allocation2 + $0x60] sm:$0xff] %vm2069, %v1986
        %2077 = vst.msk [vmem:[#allocation2 + $0x70] sm:$0xff] %vm2069, %v1988
        %2078 = vst.msk [vmem:[#allocation2 + $0x80] sm:$0xff] %vm2069, %v1990
        %2079 = vst.msk [vmem:[#allocation2 + $0x90] sm:$0xff] %vm2069, %v1992
        %2080 = vst.msk [vmem:[#allocation2 + $0xa0] sm:$0xff] %vm2069, %v1994
        %2081 = vst.msk [vmem:[#allocation2 + $0xb0] sm:$0xff] %vm2069, %v1996
        %2082 = vst.msk [vmem:[#allocation2 + $0xc0] sm:$0xff] %vm2069, %v1998
        %2083 = vst.msk [vmem:[#allocation2 + $0xd0] sm:$0xff] %vm2069, %v2000
        %2084 = vst.msk [vmem:[#allocation2 + $0xe0] sm:$0xff] %vm2069, %v2002
        %2085 = vst.msk [vmem:[#allocation2 + $0xf0] sm:$0xff] %vm2069, %v2004
        %2086 = vst.msk [vmem:[#allocation2 + $0x100] sm:$0xff] %vm2069, %v2006
        %2087 = vst.msk [vmem:[#allocation2 + $0x110] sm:$0xff] %vm2069, %v2008
        %2088 = vst.msk [vmem:[#allocation2 + $0x120] sm:$0xff] %vm2069, %v2010
        %2089 = vst.msk [vmem:[#allocation2 + $0x130] sm:$0xff] %vm2069, %v2012
        %2090 = vst.msk [vmem:[#allocation2 + $0x140] sm:$0xff] %vm2069, %v2014
        %2091 = vst.msk [vmem:[#allocation2 + $0x150] sm:$0xff] %vm2069, %v2016
        %2092 = vst.msk [vmem:[#allocation2 + $0x160] sm:$0xff] %vm2069, %v2018
        %2093 = vst.msk [vmem:[#allocation2 + $0x170] sm:$0xff] %vm2069, %v2020
        %2094 = vst.msk [vmem:[#allocation2 + $0x180] sm:$0xff] %vm2069, %v2022
        %2095 = vst.msk [vmem:[#allocation2 + $0x190] sm:$0xff] %vm2069, %v2024
        %2096 = vst.msk [vmem:[#allocation2 + $0x1a0] sm:$0xff] %vm2069, %v2026
        %2097 = vst.msk [vmem:[#allocation2 + $0x1b0] sm:$0xff] %vm2069, %v2028
        %2098 = vst.msk [vmem:[#allocation2 + $0x1c0] sm:$0xff] %vm2069, %v2030
        %2099 = vst.msk [vmem:[#allocation2 + $0x1d0] sm:$0xff] %vm2069, %v2032
        %2100 = vst.msk [vmem:[#allocation2 + $0x1e0] sm:$0xff] %vm2069, %v2034
        %2101 = vst.msk [vmem:[#allocation2 + $0x1f0] sm:$0xff] %vm2069, %v2036
        %2102 = vrot.lane.b32.xlu0 %v148, 96
        %v2103 = vpop.permute.xlu0 %2102
        %2104 = vrot.lane.b32.xlu0 %v149, 96
        %v2105 = vpop.permute.xlu0 %2104
        %2106 = vrot.lane.b32.xlu0 %v151, 96
        %v2107 = vpop.permute.xlu0 %2106
        %2108 = vrot.lane.b32.xlu0 %v152, 96
        %v2109 = vpop.permute.xlu0 %2108
        %2110 = vrot.lane.b32.xlu0 %v154, 96
        %v2111 = vpop.permute.xlu0 %2110
        %2112 = vrot.lane.b32.xlu0 %v155, 96
        %v2113 = vpop.permute.xlu0 %2112
        %2114 = vrot.lane.b32.xlu0 %v157, 96
        %v2115 = vpop.permute.xlu0 %2114
        %2116 = vrot.lane.b32.xlu0 %v158, 96
        %v2117 = vpop.permute.xlu0 %2116
        %2118 = vrot.lane.b32.xlu0 %v160, 96
        %v2119 = vpop.permute.xlu0 %2118
        %2120 = vrot.lane.b32.xlu0 %v161, 96
        %v2121 = vpop.permute.xlu0 %2120
        %2122 = vrot.lane.b32.xlu0 %v163, 96
        %v2123 = vpop.permute.xlu0 %2122
        %2124 = vrot.lane.b32.xlu0 %v164, 96
        %v2125 = vpop.permute.xlu0 %2124
        %2126 = vrot.lane.b32.xlu0 %v166, 96
        %v2127 = vpop.permute.xlu0 %2126
        %2128 = vrot.lane.b32.xlu0 %v167, 96
        %v2129 = vpop.permute.xlu0 %2128
        %2130 = vrot.lane.b32.xlu0 %v169, 96
        %v2131 = vpop.permute.xlu0 %2130
        %2132 = vrot.lane.b32.xlu0 %v170, 96
        %v2133 = vpop.permute.xlu0 %2132
        %2134 = vrot.lane.b32.xlu0 %v172, 96
        %v2135 = vpop.permute.xlu0 %2134
        %2136 = vrot.lane.b32.xlu0 %v173, 96
        %v2137 = vpop.permute.xlu0 %2136
        %2138 = vrot.lane.b32.xlu0 %v175, 96
        %v2139 = vpop.permute.xlu0 %2138
        %2140 = vrot.lane.b32.xlu0 %v176, 96
        %v2141 = vpop.permute.xlu0 %2140
        %2142 = vrot.lane.b32.xlu0 %v178, 96
        %v2143 = vpop.permute.xlu0 %2142
        %2144 = vrot.lane.b32.xlu0 %v179, 96
        %v2145 = vpop.permute.xlu0 %2144
        %2146 = vrot.lane.b32.xlu0 %v181, 96
        %v2147 = vpop.permute.xlu0 %2146
        %2148 = vrot.lane.b32.xlu0 %v182, 96
        %v2149 = vpop.permute.xlu0 %2148
        %2150 = vrot.lane.b32.xlu0 %v184, 96
        %v2151 = vpop.permute.xlu0 %2150
        %2152 = vrot.lane.b32.xlu0 %v185, 96
        %v2153 = vpop.permute.xlu0 %2152
        %2154 = vrot.lane.b32.xlu0 %v187, 96
        %v2155 = vpop.permute.xlu0 %2154
        %2156 = vrot.lane.b32.xlu0 %v188, 96
        %v2157 = vpop.permute.xlu0 %2156
        %2158 = vrot.lane.b32.xlu0 %v190, 96
        %v2159 = vpop.permute.xlu0 %2158
        %2160 = vrot.lane.b32.xlu0 %v191, 96
        %v2161 = vpop.permute.xlu0 %2160
        %2162 = vrot.lane.b32.xlu0 %v193, 96
        %v2163 = vpop.permute.xlu0 %2162
        %2164 = vrot.lane.b32.xlu0 %v194, 96
        %v2165 = vpop.permute.xlu0 %2164
        %vm2198 = vcmask 851712
        %2199 = vst.msk [vmem:[#allocation2] sm:$0xff] %vm2198, %v2103
        %2200 = vst.msk [vmem:[#allocation2 + $0x10] sm:$0xff] %vm2198, %v2105
        %2201 = vst.msk [vmem:[#allocation2 + $0x20] sm:$0xff] %vm2198, %v2107
        %2202 = vst.msk [vmem:[#allocation2 + $0x30] sm:$0xff] %vm2198, %v2109
        %2203 = vst.msk [vmem:[#allocation2 + $0x40] sm:$0xff] %vm2198, %v2111
        %2204 = vst.msk [vmem:[#allocation2 + $0x50] sm:$0xff] %vm2198, %v2113
        %2205 = vst.msk [vmem:[#allocation2 + $0x60] sm:$0xff] %vm2198, %v2115
        %2206 = vst.msk [vmem:[#allocation2 + $0x70] sm:$0xff] %vm2198, %v2117
        %2207 = vst.msk [vmem:[#allocation2 + $0x80] sm:$0xff] %vm2198, %v2119
        %2208 = vst.msk [vmem:[#allocation2 + $0x90] sm:$0xff] %vm2198, %v2121
        %2209 = vst.msk [vmem:[#allocation2 + $0xa0] sm:$0xff] %vm2198, %v2123
        %2210 = vst.msk [vmem:[#allocation2 + $0xb0] sm:$0xff] %vm2198, %v2125
        %2211 = vst.msk [vmem:[#allocation2 + $0xc0] sm:$0xff] %vm2198, %v2127
        %2212 = vst.msk [vmem:[#allocation2 + $0xd0] sm:$0xff] %vm2198, %v2129
        %2213 = vst.msk [vmem:[#allocation2 + $0xe0] sm:$0xff] %vm2198, %v2131
        %2214 = vst.msk [vmem:[#allocation2 + $0xf0] sm:$0xff] %vm2198, %v2133
        %2215 = vst.msk [vmem:[#allocation2 + $0x100] sm:$0xff] %vm2198, %v2135
        %2216 = vst.msk [vmem:[#allocation2 + $0x110] sm:$0xff] %vm2198, %v2137
        %2217 = vst.msk [vmem:[#allocation2 + $0x120] sm:$0xff] %vm2198, %v2139
        %2218 = vst.msk [vmem:[#allocation2 + $0x130] sm:$0xff] %vm2198, %v2141
        %2219 = vst.msk [vmem:[#allocation2 + $0x140] sm:$0xff] %vm2198, %v2143
        %2220 = vst.msk [vmem:[#allocation2 + $0x150] sm:$0xff] %vm2198, %v2145
        %2221 = vst.msk [vmem:[#allocation2 + $0x160] sm:$0xff] %vm2198, %v2147
        %2222 = vst.msk [vmem:[#allocation2 + $0x170] sm:$0xff] %vm2198, %v2149
        %2223 = vst.msk [vmem:[#allocation2 + $0x180] sm:$0xff] %vm2198, %v2151
        %2224 = vst.msk [vmem:[#allocation2 + $0x190] sm:$0xff] %vm2198, %v2153
        %2225 = vst.msk [vmem:[#allocation2 + $0x1a0] sm:$0xff] %vm2198, %v2155
        %2226 = vst.msk [vmem:[#allocation2 + $0x1b0] sm:$0xff] %vm2198, %v2157
        %2227 = vst.msk [vmem:[#allocation2 + $0x1c0] sm:$0xff] %vm2198, %v2159
        %2228 = vst.msk [vmem:[#allocation2 + $0x1d0] sm:$0xff] %vm2198, %v2161
        %2229 = vst.msk [vmem:[#allocation2 + $0x1e0] sm:$0xff] %vm2198, %v2163
        %2230 = vst.msk [vmem:[#allocation2 + $0x1f0] sm:$0xff] %vm2198, %v2165
        %2231 = vrot.lane.b32.xlu0 %v404, 104
        %v2232 = vpop.permute.xlu0 %2231
        %2233 = vrot.lane.b32.xlu0 %v406, 104
        %v2234 = vpop.permute.xlu0 %2233
        %2235 = vrot.lane.b32.xlu0 %v409, 104
        %v2236 = vpop.permute.xlu0 %2235
        %2237 = vrot.lane.b32.xlu0 %v411, 104
        %v2238 = vpop.permute.xlu0 %2237
        %2239 = vrot.lane.b32.xlu0 %v414, 104
        %v2240 = vpop.permute.xlu0 %2239
        %2241 = vrot.lane.b32.xlu0 %v416, 104
        %v2242 = vpop.permute.xlu0 %2241
        %2243 = vrot.lane.b32.xlu0 %v419, 104
        %v2244 = vpop.permute.xlu0 %2243
        %2245 = vrot.lane.b32.xlu0 %v421, 104
        %v2246 = vpop.permute.xlu0 %2245
        %2247 = vrot.lane.b32.xlu0 %v424, 104
        %v2248 = vpop.permute.xlu0 %2247
        %2249 = vrot.lane.b32.xlu0 %v426, 104
        %v2250 = vpop.permute.xlu0 %2249
        %2251 = vrot.lane.b32.xlu0 %v429, 104
        %v2252 = vpop.permute.xlu0 %2251
        %2253 = vrot.lane.b32.xlu0 %v431, 104
        %v2254 = vpop.permute.xlu0 %2253
        %2255 = vrot.lane.b32.xlu0 %v434, 104
        %v2256 = vpop.permute.xlu0 %2255
        %2257 = vrot.lane.b32.xlu0 %v436, 104
        %v2258 = vpop.permute.xlu0 %2257
        %2259 = vrot.lane.b32.xlu0 %v439, 104
        %v2260 = vpop.permute.xlu0 %2259
        %2261 = vrot.lane.b32.xlu0 %v441, 104
        %v2262 = vpop.permute.xlu0 %2261
        %2263 = vrot.lane.b32.xlu0 %v444, 104
        %v2264 = vpop.permute.xlu0 %2263
        %2265 = vrot.lane.b32.xlu0 %v446, 104
        %v2266 = vpop.permute.xlu0 %2265
        %2267 = vrot.lane.b32.xlu0 %v449, 104
        %v2268 = vpop.permute.xlu0 %2267
        %2269 = vrot.lane.b32.xlu0 %v451, 104
        %v2270 = vpop.permute.xlu0 %2269
        %2271 = vrot.lane.b32.xlu0 %v454, 104
        %v2272 = vpop.permute.xlu0 %2271
        %2273 = vrot.lane.b32.xlu0 %v456, 104
        %v2274 = vpop.permute.xlu0 %2273
        %2275 = vrot.lane.b32.xlu0 %v459, 104
        %v2276 = vpop.permute.xlu0 %2275
        %2277 = vrot.lane.b32.xlu0 %v461, 104
        %v2278 = vpop.permute.xlu0 %2277
        %2279 = vrot.lane.b32.xlu0 %v464, 104
        %v2280 = vpop.permute.xlu0 %2279
        %2281 = vrot.lane.b32.xlu0 %v466, 104
        %v2282 = vpop.permute.xlu0 %2281
        %2283 = vrot.lane.b32.xlu0 %v469, 104
        %v2284 = vpop.permute.xlu0 %2283
        %2285 = vrot.lane.b32.xlu0 %v471, 104
        %v2286 = vpop.permute.xlu0 %2285
        %2287 = vrot.lane.b32.xlu0 %v474, 104
        %v2288 = vpop.permute.xlu0 %2287
        %2289 = vrot.lane.b32.xlu0 %v476, 104
        %v2290 = vpop.permute.xlu0 %2289
        %2291 = vrot.lane.b32.xlu0 %v955, 104
        %v2292 = vpop.permute.xlu0 %2291
        %2293 = vrot.lane.b32.xlu0 %v957, 104
        %v2294 = vpop.permute.xlu0 %2293
        %vm2327 = vcmask 917312
        %2328 = vst.msk [vmem:[#allocation2] sm:$0xff] %vm2327, %v2232
        %2329 = vst.msk [vmem:[#allocation2 + $0x10] sm:$0xff] %vm2327, %v2234
        %2330 = vst.msk [vmem:[#allocation2 + $0x20] sm:$0xff] %vm2327, %v2236
        %2331 = vst.msk [vmem:[#allocation2 + $0x30] sm:$0xff] %vm2327, %v2238
        %2332 = vst.msk [vmem:[#allocation2 + $0x40] sm:$0xff] %vm2327, %v2240
        %2333 = vst.msk [vmem:[#allocation2 + $0x50] sm:$0xff] %vm2327, %v2242
        %2334 = vst.msk [vmem:[#allocation2 + $0x60] sm:$0xff] %vm2327, %v2244
        %2335 = vst.msk [vmem:[#allocation2 + $0x70] sm:$0xff] %vm2327, %v2246
        %2336 = vst.msk [vmem:[#allocation2 + $0x80] sm:$0xff] %vm2327, %v2248
        %2337 = vst.msk [vmem:[#allocation2 + $0x90] sm:$0xff] %vm2327, %v2250
        %2338 = vst.msk [vmem:[#allocation2 + $0xa0] sm:$0xff] %vm2327, %v2252
        %2339 = vst.msk [vmem:[#allocation2 + $0xb0] sm:$0xff] %vm2327, %v2254
        %2340 = vst.msk [vmem:[#allocation2 + $0xc0] sm:$0xff] %vm2327, %v2256
        %2341 = vst.msk [vmem:[#allocation2 + $0xd0] sm:$0xff] %vm2327, %v2258
        %2342 = vst.msk [vmem:[#allocation2 + $0xe0] sm:$0xff] %vm2327, %v2260
        %2343 = vst.msk [vmem:[#allocation2 + $0xf0] sm:$0xff] %vm2327, %v2262
        %2344 = vst.msk [vmem:[#allocation2 + $0x100] sm:$0xff] %vm2327, %v2264
        %2345 = vst.msk [vmem:[#allocation2 + $0x110] sm:$0xff] %vm2327, %v2266
        %2346 = vst.msk [vmem:[#allocation2 + $0x120] sm:$0xff] %vm2327, %v2268
        %2347 = vst.msk [vmem:[#allocation2 + $0x130] sm:$0xff] %vm2327, %v2270
        %2348 = vst.msk [vmem:[#allocation2 + $0x140] sm:$0xff] %vm2327, %v2272
        %2349 = vst.msk [vmem:[#allocation2 + $0x150] sm:$0xff] %vm2327, %v2274
        %2350 = vst.msk [vmem:[#allocation2 + $0x160] sm:$0xff] %vm2327, %v2276
        %2351 = vst.msk [vmem:[#allocation2 + $0x170] sm:$0xff] %vm2327, %v2278
        %2352 = vst.msk [vmem:[#allocation2 + $0x180] sm:$0xff] %vm2327, %v2280
        %2353 = vst.msk [vmem:[#allocation2 + $0x190] sm:$0xff] %vm2327, %v2282
        %2354 = vst.msk [vmem:[#allocation2 + $0x1a0] sm:$0xff] %vm2327, %v2284
        %2355 = vst.msk [vmem:[#allocation2 + $0x1b0] sm:$0xff] %vm2327, %v2286
        %2356 = vst.msk [vmem:[#allocation2 + $0x1c0] sm:$0xff] %vm2327, %v2288
        %2357 = vst.msk [vmem:[#allocation2 + $0x1d0] sm:$0xff] %vm2327, %v2290
        %2358 = vst.msk [vmem:[#allocation2 + $0x1e0] sm:$0xff] %vm2327, %v2292
        %2359 = vst.msk [vmem:[#allocation2 + $0x1f0] sm:$0xff] %vm2327, %v2294
        %v2360 = vrot.slane %v190, 4
        %v2361 = vrot.slane %v191, 4
        %v2362 = vsel %vm1892, %v2360, %v2361
        %v2363 = vrot.slane %v192, 4
        %v2364 = vsel %vm1892, %v2361, %v2363
        %v2365 = vrot.slane %v193, 4
        %v2366 = vrot.slane %v194, 4
        %v2367 = vsel %vm1892, %v2365, %v2366
        %v2368 = vrot.slane %v195, 4
        %v2369 = vsel %vm1892, %v2366, %v2368
        %2370 = vrot.lane.b32.xlu0 %v1905, 112
        %v2371 = vpop.permute.xlu0 %2370
        %2372 = vrot.lane.b32.xlu0 %v1907, 112
        %v2373 = vpop.permute.xlu0 %2372
        %2374 = vrot.lane.b32.xlu0 %v1910, 112
        %v2375 = vpop.permute.xlu0 %2374
        %2376 = vrot.lane.b32.xlu0 %v1912, 112
        %v2377 = vpop.permute.xlu0 %2376
        %2378 = vrot.lane.b32.xlu0 %v1915, 112
        %v2379 = vpop.permute.xlu0 %2378
        %2380 = vrot.lane.b32.xlu0 %v1917, 112
        %v2381 = vpop.permute.xlu0 %2380
        %2382 = vrot.lane.b32.xlu0 %v1920, 112
        %v2383 = vpop.permute.xlu0 %2382
        %2384 = vrot.lane.b32.xlu0 %v1922, 112
        %v2385 = vpop.permute.xlu0 %2384
        %2386 = vrot.lane.b32.xlu0 %v1925, 112
        %v2387 = vpop.permute.xlu0 %2386
        %2388 = vrot.lane.b32.xlu0 %v1927, 112
        %v2389 = vpop.permute.xlu0 %2388
        %2390 = vrot.lane.b32.xlu0 %v1930, 112
        %v2391 = vpop.permute.xlu0 %2390
        %2392 = vrot.lane.b32.xlu0 %v1932, 112
        %v2393 = vpop.permute.xlu0 %2392
        %2394 = vrot.lane.b32.xlu0 %v1935, 112
        %v2395 = vpop.permute.xlu0 %2394
        %2396 = vrot.lane.b32.xlu0 %v1937, 112
        %v2397 = vpop.permute.xlu0 %2396
        %2398 = vrot.lane.b32.xlu0 %v1940, 112
        %v2399 = vpop.permute.xlu0 %2398
        %2400 = vrot.lane.b32.xlu0 %v1942, 112
        %v2401 = vpop.permute.xlu0 %2400
        %2402 = vrot.lane.b32.xlu0 %v1945, 112
        %v2403 = vpop.permute.xlu0 %2402
        %2404 = vrot.lane.b32.xlu0 %v1947, 112
        %v2405 = vpop.permute.xlu0 %2404
        %2406 = vrot.lane.b32.xlu0 %v1950, 112
        %v2407 = vpop.permute.xlu0 %2406
        %2408 = vrot.lane.b32.xlu0 %v1952, 112
        %v2409 = vpop.permute.xlu0 %2408
        %2410 = vrot.lane.b32.xlu0 %v1955, 112
        %v2411 = vpop.permute.xlu0 %2410
        %2412 = vrot.lane.b32.xlu0 %v1957, 112
        %v2413 = vpop.permute.xlu0 %2412
        %2414 = vrot.lane.b32.xlu0 %v1960, 112
        %v2415 = vpop.permute.xlu0 %2414
        %2416 = vrot.lane.b32.xlu0 %v1962, 112
        %v2417 = vpop.permute.xlu0 %2416
        %2418 = vrot.lane.b32.xlu0 %v1965, 112
        %v2419 = vpop.permute.xlu0 %2418
        %2420 = vrot.lane.b32.xlu0 %v1967, 112
        %v2421 = vpop.permute.xlu0 %2420
        %2422 = vrot.lane.b32.xlu0 %v1970, 112
        %v2423 = vpop.permute.xlu0 %2422
        %2424 = vrot.lane.b32.xlu0 %v1972, 112
        %v2425 = vpop.permute.xlu0 %2424
        %2426 = vrot.lane.b32.xlu0 %v2362, 112
        %v2427 = vpop.permute.xlu0 %2426
        %2428 = vrot.lane.b32.xlu0 %v2364, 112
        %v2429 = vpop.permute.xlu0 %2428
        %2430 = vrot.lane.b32.xlu0 %v2367, 112
        %v2431 = vpop.permute.xlu0 %2430
        %2432 = vrot.lane.b32.xlu0 %v2369, 112
        %v2433 = vpop.permute.xlu0 %2432
        %vm2466 = vcmask 982912
        %2467 = vst.msk [vmem:[#allocation2] sm:$0xff] %vm2466, %v2371
        %2468 = vst.msk [vmem:[#allocation2 + $0x10] sm:$0xff] %vm2466, %v2373
        %2469 = vst.msk [vmem:[#allocation2 + $0x20] sm:$0xff] %vm2466, %v2375
        %2470 = vst.msk [vmem:[#allocation2 + $0x30] sm:$0xff] %vm2466, %v2377
        %2471 = vst.msk [vmem:[#allocation2 + $0x40] sm:$0xff] %vm2466, %v2379
        %2472 = vst.msk [vmem:[#allocation2 + $0x50] sm:$0xff] %vm2466, %v2381
        %2473 = vst.msk [vmem:[#allocation2 + $0x60] sm:$0xff] %vm2466, %v2383
        %2474 = vst.msk [vmem:[#allocation2 + $0x70] sm:$0xff] %vm2466, %v2385
        %2475 = vst.msk [vmem:[#allocation2 + $0x80] sm:$0xff] %vm2466, %v2387
        %2476 = vst.msk [vmem:[#allocation2 + $0x90] sm:$0xff] %vm2466, %v2389
        %2477 = vst.msk [vmem:[#allocation2 + $0xa0] sm:$0xff] %vm2466, %v2391
        %2478 = vst.msk [vmem:[#allocation2 + $0xb0] sm:$0xff] %vm2466, %v2393
        %2479 = vst.msk [vmem:[#allocation2 + $0xc0] sm:$0xff] %vm2466, %v2395
        %2480 = vst.msk [vmem:[#allocation2 + $0xd0] sm:$0xff] %vm2466, %v2397
        %2481 = vst.msk [vmem:[#allocation2 + $0xe0] sm:$0xff] %vm2466, %v2399
        %2482 = vst.msk [vmem:[#allocation2 + $0xf0] sm:$0xff] %vm2466, %v2401
        %2483 = vst.msk [vmem:[#allocation2 + $0x100] sm:$0xff] %vm2466, %v2403
        %2484 = vst.msk [vmem:[#allocation2 + $0x110] sm:$0xff] %vm2466, %v2405
        %2485 = vst.msk [vmem:[#allocation2 + $0x120] sm:$0xff] %vm2466, %v2407
        %2486 = vst.msk [vmem:[#allocation2 + $0x130] sm:$0xff] %vm2466, %v2409
        %2487 = vst.msk [vmem:[#allocation2 + $0x140] sm:$0xff] %vm2466, %v2411
        %2488 = vst.msk [vmem:[#allocation2 + $0x150] sm:$0xff] %vm2466, %v2413
        %2489 = vst.msk [vmem:[#allocation2 + $0x160] sm:$0xff] %vm2466, %v2415
        %2490 = vst.msk [vmem:[#allocation2 + $0x170] sm:$0xff] %vm2466, %v2417
        %2491 = vst.msk [vmem:[#allocation2 + $0x180] sm:$0xff] %vm2466, %v2419
        %2492 = vst.msk [vmem:[#allocation2 + $0x190] sm:$0xff] %vm2466, %v2421
        %2493 = vst.msk [vmem:[#allocation2 + $0x1a0] sm:$0xff] %vm2466, %v2423
        %2494 = vst.msk [vmem:[#allocation2 + $0x1b0] sm:$0xff] %vm2466, %v2425
        %2495 = vst.msk [vmem:[#allocation2 + $0x1c0] sm:$0xff] %vm2466, %v2427
        %2496 = vst.msk [vmem:[#allocation2 + $0x1d0] sm:$0xff] %vm2466, %v2429
        %2497 = vst.msk [vmem:[#allocation2 + $0x1e0] sm:$0xff] %vm2466, %v2431
        %2498 = vst.msk [vmem:[#allocation2 + $0x1f0] sm:$0xff] %vm2466, %v2433
        %2501 = vrot.lane.b32.xlu0 %v154, 120
        %v2502 = vpop.permute.xlu0 %2501
        %2503 = vrot.lane.b32.xlu0 %v155, 120
        %v2504 = vpop.permute.xlu0 %2503
        %2505 = vrot.lane.b32.xlu0 %v157, 120
        %v2506 = vpop.permute.xlu0 %2505
        %2507 = vrot.lane.b32.xlu0 %v158, 120
        %v2508 = vpop.permute.xlu0 %2507
        %2509 = vrot.lane.b32.xlu0 %v160, 120
        %v2510 = vpop.permute.xlu0 %2509
        %2511 = vrot.lane.b32.xlu0 %v161, 120
        %v2512 = vpop.permute.xlu0 %2511
        %2513 = vrot.lane.b32.xlu0 %v163, 120
        %v2514 = vpop.permute.xlu0 %2513
        %2515 = vrot.lane.b32.xlu0 %v164, 120
        %v2516 = vpop.permute.xlu0 %2515
        %2517 = vrot.lane.b32.xlu0 %v166, 120
        %v2518 = vpop.permute.xlu0 %2517
        %2519 = vrot.lane.b32.xlu0 %v167, 120
        %v2520 = vpop.permute.xlu0 %2519
        %2521 = vrot.lane.b32.xlu0 %v169, 120
        %v2522 = vpop.permute.xlu0 %2521
        %2523 = vrot.lane.b32.xlu0 %v170, 120
        %v2524 = vpop.permute.xlu0 %2523
        %2525 = vrot.lane.b32.xlu0 %v172, 120
        %v2526 = vpop.permute.xlu0 %2525
        %2527 = vrot.lane.b32.xlu0 %v173, 120
        %v2528 = vpop.permute.xlu0 %2527
        %2529 = vrot.lane.b32.xlu0 %v175, 120
        %v2530 = vpop.permute.xlu0 %2529
        %2531 = vrot.lane.b32.xlu0 %v176, 120
        %v2532 = vpop.permute.xlu0 %2531
        %2533 = vrot.lane.b32.xlu0 %v178, 120
        %v2534 = vpop.permute.xlu0 %2533
        %2535 = vrot.lane.b32.xlu0 %v179, 120
        %v2536 = vpop.permute.xlu0 %2535
        %2537 = vrot.lane.b32.xlu0 %v181, 120
        %v2538 = vpop.permute.xlu0 %2537
        %2539 = vrot.lane.b32.xlu0 %v182, 120
        %v2540 = vpop.permute.xlu0 %2539
        %2541 = vrot.lane.b32.xlu0 %v184, 120
        %v2542 = vpop.permute.xlu0 %2541
        %2543 = vrot.lane.b32.xlu0 %v185, 120
        %v2544 = vpop.permute.xlu0 %2543
        %2545 = vrot.lane.b32.xlu0 %v187, 120
        %v2546 = vpop.permute.xlu0 %2545
        %2547 = vrot.lane.b32.xlu0 %v188, 120
        %v2548 = vpop.permute.xlu0 %2547
        %2549 = vrot.lane.b32.xlu0 %v190, 120
        %v2550 = vpop.permute.xlu0 %2549
        %2551 = vrot.lane.b32.xlu0 %v191, 120
        %v2552 = vpop.permute.xlu0 %2551
        %2553 = vrot.lane.b32.xlu0 %v193, 120
        %v2554 = vpop.permute.xlu0 %2553
        %2555 = vrot.lane.b32.xlu0 %v194, 120
        %v2556 = vpop.permute.xlu0 %2555
        %2557 = vrot.lane.b32.xlu0 %v196, 120
        %v2558 = vpop.permute.xlu0 %2557
        %2559 = vrot.lane.b32.xlu0 %v197, 120
        %v2560 = vpop.permute.xlu0 %2559
        %2561 = vrot.lane.b32.xlu0 %v199, 120
        %v2562 = vpop.permute.xlu0 %2561
        %2563 = vrot.lane.b32.xlu0 %v200, 120
        %v2564 = vpop.permute.xlu0 %2563
        %vm2597 = vcmask 1048512
        %2598 = vst.msk [vmem:[#allocation2] sm:$0xff] %vm2597, %v2502
        %2599 = vst.msk [vmem:[#allocation2 + $0x10] sm:$0xff] %vm2597, %v2504
        %2600 = vst.msk [vmem:[#allocation2 + $0x20] sm:$0xff] %vm2597, %v2506
        %2601 = vst.msk [vmem:[#allocation2 + $0x30] sm:$0xff] %vm2597, %v2508
        %2602 = vst.msk [vmem:[#allocation2 + $0x40] sm:$0xff] %vm2597, %v2510
        %2603 = vst.msk [vmem:[#allocation2 + $0x50] sm:$0xff] %vm2597, %v2512
        %2604 = vst.msk [vmem:[#allocation2 + $0x60] sm:$0xff] %vm2597, %v2514
        %2605 = vst.msk [vmem:[#allocation2 + $0x70] sm:$0xff] %vm2597, %v2516
        %2606 = vst.msk [vmem:[#allocation2 + $0x80] sm:$0xff] %vm2597, %v2518
        %2607 = vst.msk [vmem:[#allocation2 + $0x90] sm:$0xff] %vm2597, %v2520
        %2608 = vst.msk [vmem:[#allocation2 + $0xa0] sm:$0xff] %vm2597, %v2522
        %2609 = vst.msk [vmem:[#allocation2 + $0xb0] sm:$0xff] %vm2597, %v2524
        %2610 = vst.msk [vmem:[#allocation2 + $0xc0] sm:$0xff] %vm2597, %v2526
        %2611 = vst.msk [vmem:[#allocation2 + $0xd0] sm:$0xff] %vm2597, %v2528
        %2612 = vst.msk [vmem:[#allocation2 + $0xe0] sm:$0xff] %vm2597, %v2530
        %2613 = vst.msk [vmem:[#allocation2 + $0xf0] sm:$0xff] %vm2597, %v2532
        %2614 = vst.msk [vmem:[#allocation2 + $0x100] sm:$0xff] %vm2597, %v2534
        %2615 = vst.msk [vmem:[#allocation2 + $0x110] sm:$0xff] %vm2597, %v2536
        %2616 = vst.msk [vmem:[#allocation2 + $0x120] sm:$0xff] %vm2597, %v2538
        %2617 = vst.msk [vmem:[#allocation2 + $0x130] sm:$0xff] %vm2597, %v2540
        %2618 = vst.msk [vmem:[#allocation2 + $0x140] sm:$0xff] %vm2597, %v2542
        %2619 = vst.msk [vmem:[#allocation2 + $0x150] sm:$0xff] %vm2597, %v2544
        %2620 = vst.msk [vmem:[#allocation2 + $0x160] sm:$0xff] %vm2597, %v2546
        %2621 = vst.msk [vmem:[#allocation2 + $0x170] sm:$0xff] %vm2597, %v2548
        %2622 = vst.msk [vmem:[#allocation2 + $0x180] sm:$0xff] %vm2597, %v2550
        %2623 = vst.msk [vmem:[#allocation2 + $0x190] sm:$0xff] %vm2597, %v2552
        %2624 = vst.msk [vmem:[#allocation2 + $0x1a0] sm:$0xff] %vm2597, %v2554
        %2625 = vst.msk [vmem:[#allocation2 + $0x1b0] sm:$0xff] %vm2597, %v2556
        %2626 = vst.msk [vmem:[#allocation2 + $0x1c0] sm:$0xff] %vm2597, %v2558
        %2627 = vst.msk [vmem:[#allocation2 + $0x1d0] sm:$0xff] %vm2597, %v2560
        %2628 = vst.msk [vmem:[#allocation2 + $0x1e0] sm:$0xff] %vm2597, %v2562
        %2629 = vst.msk [vmem:[#allocation2 + $0x1f0] sm:$0xff] %vm2597, %v2564
        %v2631 = vrot.slane %v199, 2
        %v2632 = vrot.slane %v200, 2
        %v2633 = vsel %vm396, %v2631, %v2632
        %v2634 = vrot.slane %v201, 2
        %v2635 = vsel %vm396, %v2632, %v2634
        %2668 = vst.msk [vmem:[#allocation2 + $0x8] sm:$0xff] %vm363, %v414
        %2669 = vst.msk [vmem:[#allocation2 + $0x18] sm:$0xff] %vm363, %v416
        %2670 = vst.msk [vmem:[#allocation2 + $0x28] sm:$0xff] %vm363, %v419
        %2671 = vst.msk [vmem:[#allocation2 + $0x38] sm:$0xff] %vm363, %v421
        %2672 = vst.msk [vmem:[#allocation2 + $0x48] sm:$0xff] %vm363, %v424
        %2673 = vst.msk [vmem:[#allocation2 + $0x58] sm:$0xff] %vm363, %v426
        %2674 = vst.msk [vmem:[#allocation2 + $0x68] sm:$0xff] %vm363, %v429
        %2675 = vst.msk [vmem:[#allocation2 + $0x78] sm:$0xff] %vm363, %v431
        %2676 = vst.msk [vmem:[#allocation2 + $0x88] sm:$0xff] %vm363, %v434
        %2677 = vst.msk [vmem:[#allocation2 + $0x98] sm:$0xff] %vm363, %v436
        %2678 = vst.msk [vmem:[#allocation2 + $0xa8] sm:$0xff] %vm363, %v439
        %2679 = vst.msk [vmem:[#allocation2 + $0xb8] sm:$0xff] %vm363, %v441
        %2680 = vst.msk [vmem:[#allocation2 + $0xc8] sm:$0xff] %vm363, %v444
        %2681 = vst.msk [vmem:[#allocation2 + $0xd8] sm:$0xff] %vm363, %v446
        %2682 = vst.msk [vmem:[#allocation2 + $0xe8] sm:$0xff] %vm363, %v449
        %2683 = vst.msk [vmem:[#allocation2 + $0xf8] sm:$0xff] %vm363, %v451
        %2684 = vst.msk [vmem:[#allocation2 + $0x108] sm:$0xff] %vm363, %v454
        %2685 = vst.msk [vmem:[#allocation2 + $0x118] sm:$0xff] %vm363, %v456
        %2686 = vst.msk [vmem:[#allocation2 + $0x128] sm:$0xff] %vm363, %v459
        %2687 = vst.msk [vmem:[#allocation2 + $0x138] sm:$0xff] %vm363, %v461
        %2688 = vst.msk [vmem:[#allocation2 + $0x148] sm:$0xff] %vm363, %v464
        %2689 = vst.msk [vmem:[#allocation2 + $0x158] sm:$0xff] %vm363, %v466
        %2690 = vst.msk [vmem:[#allocation2 + $0x168] sm:$0xff] %vm363, %v469
        %2691 = vst.msk [vmem:[#allocation2 + $0x178] sm:$0xff] %vm363, %v471
        %2692 = vst.msk [vmem:[#allocation2 + $0x188] sm:$0xff] %vm363, %v474
        %2693 = vst.msk [vmem:[#allocation2 + $0x198] sm:$0xff] %vm363, %v476
        %2694 = vst.msk [vmem:[#allocation2 + $0x1a8] sm:$0xff] %vm363, %v955
        %2695 = vst.msk [vmem:[#allocation2 + $0x1b8] sm:$0xff] %vm363, %v957
        %2696 = vst.msk [vmem:[#allocation2 + $0x1c8] sm:$0xff] %vm363, %v1360
        %2697 = vst.msk [vmem:[#allocation2 + $0x1d8] sm:$0xff] %vm363, %v1362
        %2698 = vst.msk [vmem:[#allocation2 + $0x1e8] sm:$0xff] %vm363, %v2633
        %2699 = vst.msk [vmem:[#allocation2 + $0x1f8] sm:$0xff] %vm363, %v2635
        %v2700 = vrot.slane %v196, 4
        %v2701 = vrot.slane %v197, 4
        %v2702 = vsel %vm1892, %v2700, %v2701
        %v2703 = vrot.slane %v198, 4
        %v2704 = vsel %vm1892, %v2701, %v2703
        %v2705 = vrot.slane %v199, 4
        %v2706 = vrot.slane %v200, 4
        %v2707 = vsel %vm1892, %v2705, %v2706
        %v2708 = vrot.slane %v201, 4
        %v2709 = vsel %vm1892, %v2706, %v2708
        %2710 = vrot.lane.b32.xlu0 %v1915, 8
        %v2711 = vpop.permute.xlu0 %2710
        %2712 = vrot.lane.b32.xlu0 %v1917, 8
        %v2713 = vpop.permute.xlu0 %2712
        %2714 = vrot.lane.b32.xlu0 %v1920, 8
        %v2715 = vpop.permute.xlu0 %2714
        %2716 = vrot.lane.b32.xlu0 %v1922, 8
        %v2717 = vpop.permute.xlu0 %2716
        %2718 = vrot.lane.b32.xlu0 %v1925, 8
        %v2719 = vpop.permute.xlu0 %2718
        %2720 = vrot.lane.b32.xlu0 %v1927, 8
        %v2721 = vpop.permute.xlu0 %2720
        %2722 = vrot.lane.b32.xlu0 %v1930, 8
        %v2723 = vpop.permute.xlu0 %2722
        %2724 = vrot.lane.b32.xlu0 %v1932, 8
        %v2725 = vpop.permute.xlu0 %2724
        %2726 = vrot.lane.b32.xlu0 %v1935, 8
        %v2727 = vpop.permute.xlu0 %2726
        %2728 = vrot.lane.b32.xlu0 %v1937, 8
        %v2729 = vpop.permute.xlu0 %2728
        %2730 = vrot.lane.b32.xlu0 %v1940, 8
        %v2731 = vpop.permute.xlu0 %2730
        %2732 = vrot.lane.b32.xlu0 %v1942, 8
        %v2733 = vpop.permute.xlu0 %2732
        %2734 = vrot.lane.b32.xlu0 %v1945, 8
        %v2735 = vpop.permute.xlu0 %2734
        %2736 = vrot.lane.b32.xlu0 %v1947, 8
        %v2737 = vpop.permute.xlu0 %2736
        %2738 = vrot.lane.b32.xlu0 %v1950, 8
        %v2739 = vpop.permute.xlu0 %2738
        %2740 = vrot.lane.b32.xlu0 %v1952, 8
        %v2741 = vpop.permute.xlu0 %2740
        %2742 = vrot.lane.b32.xlu0 %v1955, 8
        %v2743 = vpop.permute.xlu0 %2742
        %2744 = vrot.lane.b32.xlu0 %v1957, 8
        %v2745 = vpop.permute.xlu0 %2744
        %2746 = vrot.lane.b32.xlu0 %v1960, 8
        %v2747 = vpop.permute.xlu0 %2746
        %2748 = vrot.lane.b32.xlu0 %v1962, 8
        %v2749 = vpop.permute.xlu0 %2748
        %2750 = vrot.lane.b32.xlu0 %v1965, 8
        %v2751 = vpop.permute.xlu0 %2750
        %2752 = vrot.lane.b32.xlu0 %v1967, 8
        %v2753 = vpop.permute.xlu0 %2752
        %2754 = vrot.lane.b32.xlu0 %v1970, 8
        %v2755 = vpop.permute.xlu0 %2754
        %2756 = vrot.lane.b32.xlu0 %v1972, 8
        %v2757 = vpop.permute.xlu0 %2756
        %2758 = vrot.lane.b32.xlu0 %v2362, 8
        %v2759 = vpop.permute.xlu0 %2758
        %2760 = vrot.lane.b32.xlu0 %v2364, 8
        %v2761 = vpop.permute.xlu0 %2760
        %2762 = vrot.lane.b32.xlu0 %v2367, 8
        %v2763 = vpop.permute.xlu0 %2762
        %2764 = vrot.lane.b32.xlu0 %v2369, 8
        %v2765 = vpop.permute.xlu0 %2764
        %2766 = vrot.lane.b32.xlu0 %v2702, 8
        %v2767 = vpop.permute.xlu0 %2766
        %2768 = vrot.lane.b32.xlu0 %v2704, 8
        %v2769 = vpop.permute.xlu0 %2768
        %2770 = vrot.lane.b32.xlu0 %v2707, 8
        %v2771 = vpop.permute.xlu0 %2770
        %2772 = vrot.lane.b32.xlu0 %v2709, 8
        %v2773 = vpop.permute.xlu0 %2772
        %2806 = vst.msk [vmem:[#allocation2 + $0x8] sm:$0xff] %vm573, %v2711
        %2807 = vst.msk [vmem:[#allocation2 + $0x18] sm:$0xff] %vm573, %v2713
        %2808 = vst.msk [vmem:[#allocation2 + $0x28] sm:$0xff] %vm573, %v2715
        %2809 = vst.msk [vmem:[#allocation2 + $0x38] sm:$0xff] %vm573, %v2717
        %2810 = vst.msk [vmem:[#allocation2 + $0x48] sm:$0xff] %vm573, %v2719
        %2811 = vst.msk [vmem:[#allocation2 + $0x58] sm:$0xff] %vm573, %v2721
        %2812 = vst.msk [vmem:[#allocation2 + $0x68] sm:$0xff] %vm573, %v2723
        %2813 = vst.msk [vmem:[#allocation2 + $0x78] sm:$0xff] %vm573, %v2725
        %2814 = vst.msk [vmem:[#allocation2 + $0x88] sm:$0xff] %vm573, %v2727
        %2815 = vst.msk [vmem:[#allocation2 + $0x98] sm:$0xff] %vm573, %v2729
        %2816 = vst.msk [vmem:[#allocation2 + $0xa8] sm:$0xff] %vm573, %v2731
        %2817 = vst.msk [vmem:[#allocation2 + $0xb8] sm:$0xff] %vm573, %v2733
        %2818 = vst.msk [vmem:[#allocation2 + $0xc8] sm:$0xff] %vm573, %v2735
        %2819 = vst.msk [vmem:[#allocation2 + $0xd8] sm:$0xff] %vm573, %v2737
        %2820 = vst.msk [vmem:[#allocation2 + $0xe8] sm:$0xff] %vm573, %v2739
        %2821 = vst.msk [vmem:[#allocation2 + $0xf8] sm:$0xff] %vm573, %v2741
        %2822 = vst.msk [vmem:[#allocation2 + $0x108] sm:$0xff] %vm573, %v2743
        %2823 = vst.msk [vmem:[#allocation2 + $0x118] sm:$0xff] %vm573, %v2745
        %2824 = vst.msk [vmem:[#allocation2 + $0x128] sm:$0xff] %vm573, %v2747
        %2825 = vst.msk [vmem:[#allocation2 + $0x138] sm:$0xff] %vm573, %v2749
        %2826 = vst.msk [vmem:[#allocation2 + $0x148] sm:$0xff] %vm573, %v2751
        %2827 = vst.msk [vmem:[#allocation2 + $0x158] sm:$0xff] %vm573, %v2753
        %2828 = vst.msk [vmem:[#allocation2 + $0x168] sm:$0xff] %vm573, %v2755
        %2829 = vst.msk [vmem:[#allocation2 + $0x178] sm:$0xff] %vm573, %v2757
        %2830 = vst.msk [vmem:[#allocation2 + $0x188] sm:$0xff] %vm573, %v2759
        %2831 = vst.msk [vmem:[#allocation2 + $0x198] sm:$0xff] %vm573, %v2761
        %2832 = vst.msk [vmem:[#allocation2 + $0x1a8] sm:$0xff] %vm573, %v2763
        %2833 = vst.msk [vmem:[#allocation2 + $0x1b8] sm:$0xff] %vm573, %v2765
        %2834 = vst.msk [vmem:[#allocation2 + $0x1c8] sm:$0xff] %vm573, %v2767
        %2835 = vst.msk [vmem:[#allocation2 + $0x1d8] sm:$0xff] %vm573, %v2769
        %2836 = vst.msk [vmem:[#allocation2 + $0x1e8] sm:$0xff] %vm573, %v2771
        %2837 = vst.msk [vmem:[#allocation2 + $0x1f8] sm:$0xff] %vm573, %v2773
        %v2838 = vld [vmem:[#allocation2] sm:$0xff]
        %v2839 = vld [vmem:[#allocation2 + $0x8] sm:$0xff]
        %v2840 = vld [vmem:[#allocation2 + $0x10] sm:$0xff]
        %v2841 = vld [vmem:[#allocation2 + $0x18] sm:$0xff]
        %v2842 = vld [vmem:[#allocation2 + $0x20] sm:$0xff]
        %v2843 = vld [vmem:[#allocation2 + $0x28] sm:$0xff]
        %v2844 = vld [vmem:[#allocation2 + $0x30] sm:$0xff]
        %v2845 = vld [vmem:[#allocation2 + $0x38] sm:$0xff]
        %v2846 = vld [vmem:[#allocation2 + $0x40] sm:$0xff]
        %v2847 = vld [vmem:[#allocation2 + $0x48] sm:$0xff]
        %v2848 = vld [vmem:[#allocation2 + $0x50] sm:$0xff]
        %v2849 = vld [vmem:[#allocation2 + $0x58] sm:$0xff]
        %v2850 = vld [vmem:[#allocation2 + $0x60] sm:$0xff]
        %v2851 = vld [vmem:[#allocation2 + $0x68] sm:$0xff]
        %v2852 = vld [vmem:[#allocation2 + $0x70] sm:$0xff]
        %v2853 = vld [vmem:[#allocation2 + $0x78] sm:$0xff]
        %v2854 = vld [vmem:[#allocation2 + $0x80] sm:$0xff]
        %v2855 = vld [vmem:[#allocation2 + $0x88] sm:$0xff]
        %v2856 = vld [vmem:[#allocation2 + $0x90] sm:$0xff]
        %v2857 = vld [vmem:[#allocation2 + $0x98] sm:$0xff]
        %v2858 = vld [vmem:[#allocation2 + $0xa0] sm:$0xff]
        %v2859 = vld [vmem:[#allocation2 + $0xa8] sm:$0xff]
        %v2860 = vld [vmem:[#allocation2 + $0xb0] sm:$0xff]
        %v2861 = vld [vmem:[#allocation2 + $0xb8] sm:$0xff]
        %v2862 = vld [vmem:[#allocation2 + $0xc0] sm:$0xff]
        %v2863 = vld [vmem:[#allocation2 + $0xc8] sm:$0xff]
        %v2864 = vld [vmem:[#allocation2 + $0xd0] sm:$0xff]
        %v2865 = vld [vmem:[#allocation2 + $0xd8] sm:$0xff]
        %v2866 = vld [vmem:[#allocation2 + $0xe0] sm:$0xff]
        %v2867 = vld [vmem:[#allocation2 + $0xe8] sm:$0xff]
        %v2868 = vld [vmem:[#allocation2 + $0xf0] sm:$0xff]
        %v2869 = vld [vmem:[#allocation2 + $0xf8] sm:$0xff]
        %v2870 = vld [vmem:[#allocation2 + $0x100] sm:$0xff]
        %v2871 = vld [vmem:[#allocation2 + $0x108] sm:$0xff]
        %v2872 = vld [vmem:[#allocation2 + $0x110] sm:$0xff]
        %v2873 = vld [vmem:[#allocation2 + $0x118] sm:$0xff]
        %v2874 = vld [vmem:[#allocation2 + $0x120] sm:$0xff]
        %v2875 = vld [vmem:[#allocation2 + $0x128] sm:$0xff]
        %v2876 = vld [vmem:[#allocation2 + $0x130] sm:$0xff]
        %v2877 = vld [vmem:[#allocation2 + $0x138] sm:$0xff]
        %v2878 = vld [vmem:[#allocation2 + $0x140] sm:$0xff]
        %v2879 = vld [vmem:[#allocation2 + $0x148] sm:$0xff]
        %v2880 = vld [vmem:[#allocation2 + $0x150] sm:$0xff]
        %v2881 = vld [vmem:[#allocation2 + $0x158] sm:$0xff]
        %v2882 = vld [vmem:[#allocation2 + $0x160] sm:$0xff]
        %v2883 = vld [vmem:[#allocation2 + $0x168] sm:$0xff]
        %v2884 = vld [vmem:[#allocation2 + $0x170] sm:$0xff]
        %v2885 = vld [vmem:[#allocation2 + $0x178] sm:$0xff]
        %v2886 = vld [vmem:[#allocation2 + $0x180] sm:$0xff]
        %v2887 = vld [vmem:[#allocation2 + $0x188] sm:$0xff]
        %v2888 = vld [vmem:[#allocation2 + $0x190] sm:$0xff]
        %v2889 = vld [vmem:[#allocation2 + $0x198] sm:$0xff]
        %v2890 = vld [vmem:[#allocation2 + $0x1a0] sm:$0xff]
        %v2891 = vld [vmem:[#allocation2 + $0x1a8] sm:$0xff]
        %v2892 = vld [vmem:[#allocation2 + $0x1b0] sm:$0xff]
        %v2893 = vld [vmem:[#allocation2 + $0x1b8] sm:$0xff]
        %v2894 = vld [vmem:[#allocation2 + $0x1c0] sm:$0xff]
        %v2895 = vld [vmem:[#allocation2 + $0x1c8] sm:$0xff]
        %v2896 = vld [vmem:[#allocation2 + $0x1d0] sm:$0xff]
        %v2897 = vld [vmem:[#allocation2 + $0x1d8] sm:$0xff]
        %v2898 = vld [vmem:[#allocation2 + $0x1e0] sm:$0xff]
        %v2899 = vld [vmem:[#allocation2 + $0x1e8] sm:$0xff]
        %v2900 = vld [vmem:[#allocation2 + $0x1f0] sm:$0xff]
        %v2901 = vld [vmem:[#allocation2 + $0x1f8] sm:$0xff]
        %v2902 = vld [vmem:[%s1] sm:$0xff]
        %v2903 = vld [vmem:[%s1 + $0x8] sm:$0xff]
        %v2904 = vld [vmem:[%s1 + $0x10] sm:$0xff]
        %v2905 = vld [vmem:[%s1 + $0x18] sm:$0xff]
        %v2906 = vld [vmem:[%s1 + $0x20] sm:$0xff]
        %v2907 = vld [vmem:[%s1 + $0x28] sm:$0xff]
        %v2908 = vld [vmem:[%s1 + $0x30] sm:$0xff]
        %v2909 = vld [vmem:[%s1 + $0x38] sm:$0xff]
        %v2910 = vld [vmem:[%s1 + $0x40] sm:$0xff]
        %v2911 = vld [vmem:[%s1 + $0x48] sm:$0xff]
        %v2912 = vld [vmem:[%s1 + $0x50] sm:$0xff]
        %v2913 = vld [vmem:[%s1 + $0x58] sm:$0xff]
        %v2914 = vld [vmem:[%s1 + $0x60] sm:$0xff]
        %v2915 = vld [vmem:[%s1 + $0x68] sm:$0xff]
        %v2916 = vld [vmem:[%s1 + $0x70] sm:$0xff]
        %v2917 = vld [vmem:[%s1 + $0x78] sm:$0xff]
        %v2918 = vld [vmem:[%s1 + $0x80] sm:$0xff]
        %v2919 = vld [vmem:[%s1 + $0x88] sm:$0xff]
        %vm2920 = vcmask 130048
        %v2922 = vsel %vm2920, %v2839, 0
        %v2925 = vsel %vm2920, %v2841, 0
        %v2928 = vsel %vm2920, %v2843, 0
        %v2931 = vsel %vm2920, %v2845, 0
        %v2934 = vsel %vm2920, %v2847, 0
        %v2937 = vsel %vm2920, %v2849, 0
        %v2940 = vsel %vm2920, %v2851, 0
        %v2943 = vsel %vm2920, %v2853, 0
        %v2946 = vsel %vm2920, %v2855, 0
        %v2949 = vsel %vm2920, %v2857, 0
        %v2952 = vsel %vm2920, %v2859, 0
        %v2955 = vsel %vm2920, %v2861, 0
        %v2958 = vsel %vm2920, %v2863, 0
        %v2961 = vsel %vm2920, %v2865, 0
        %v2964 = vsel %vm2920, %v2867, 0
        %v2967 = vsel %vm2920, %v2869, 0
        %v2970 = vsel %vm2920, %v2871, 0
        %v2973 = vsel %vm2920, %v2873, 0
        %v2976 = vsel %vm2920, %v2875, 0
        %v2979 = vsel %vm2920, %v2877, 0
        %v2982 = vsel %vm2920, %v2879, 0
        %v2985 = vsel %vm2920, %v2881, 0
        %v2988 = vsel %vm2920, %v2883, 0
        %v2991 = vsel %vm2920, %v2885, 0
        %v2994 = vsel %vm2920, %v2887, 0
        %v2997 = vsel %vm2920, %v2889, 0
        %v3000 = vsel %vm2920, %v2891, 0
        %v3003 = vsel %vm2920, %v2893, 0
        %v3006 = vsel %vm2920, %v2895, 0
        %v3009 = vsel %vm2920, %v2897, 0
        %v3012 = vsel %vm2920, %v2899, 0
        %v3015 = vsel %vm2920, %v2901, 0
        %3017 = vmatprep.subr.mxu0 0.0
        %3018 = vmatpush1.msra.mxu0 %v2902
        %3019 = vmatprep.subr.mxu0 0.0
        %3020 = vmatpush1.msra.mxu0 %v2903
        %3021 = vmatprep.subr.mxu0 0.0
        %3022 = vmatpush1.msra.mxu0 %v2904
        %3023 = vmatprep.subr.mxu0 0.0
        %3024 = vmatpush1.msra.mxu0 %v2905
        %3025 = vmatprep.subr.mxu0 0.0
        %3026 = vmatpush1.msra.mxu0 %v2906
        %3027 = vmatprep.subr.mxu0 0.0
        %3028 = vmatpush1.msra.mxu0 %v2907
        %3029 = vmatprep.subr.mxu0 0.0
        %3030 = vmatpush1.msra.mxu0 %v2908
        %3031 = vmatprep.subr.mxu0 0.0
        %3032 = vmatpush1.msra.mxu0 %v2909
        %3033 = vmatprep.subr.mxu0 0.0
        %3034 = vmatpush1.msra.mxu0 %v2910
        %3035 = vmatprep.subr.mxu0 0.0
        %3036 = vmatpush1.msra.mxu0 %v2911
        %3037 = vmatprep.subr.mxu0 0.0
        %3038 = vmatpush1.msra.mxu0 %v2912
        %3039 = vmatprep.subr.mxu0 0.0
        %3040 = vmatpush1.msra.mxu0 %v2913
        %3041 = vmatprep.subr.mxu0 0.0
        %3042 = vmatpush1.msra.mxu0 %v2914
        %3043 = vmatprep.subr.mxu0 0.0
        %3044 = vmatpush1.msra.mxu0 %v2915
        %3045 = vmatprep.subr.mxu0 0.0
        %3046 = vmatpush1.msra.mxu0 %v2916
        %3047 = vmatprep.subr.mxu0 0.0
        %3048 = vmatpush1.msra.mxu0 %v2917
        %3049 = vmatprep.subr.mxu0 0.0
        %3050 = vmatpush1.msra.mxu0 %v2918
        %3051 = vmatprep.subr.mxu0 0.0
        %3052 = vmatpush1.msra.mxu0 %v2919
        %3053 = vmatprep.subr.mxu0 0.0
        %3054 = vmatpush1.msra.mxu0 0.0
        %3055 = vmatprep.subr.mxu0 0.0
        %3056 = vmatpush1.msra.mxu0 0.0
        %3057 = vmatprep.subr.mxu0 0.0
        %3058 = vmatpush1.msra.mxu0 0.0
        %3059 = vmatprep.subr.mxu0 0.0
        %3060 = vmatpush1.msra.mxu0 0.0
        %3061 = vmatprep.subr.mxu0 0.0
        %3062 = vmatpush1.msra.mxu0 0.0
        %3063 = vmatprep.subr.mxu0 0.0
        %3064 = vmatpush1.msra.mxu0 0.0
        %3065 = vmatprep.subr.mxu0 0.0
        %3066 = vmatpush1.msra.mxu0 0.0
        %3067 = vmatprep.subr.mxu0 0.0
        %3068 = vmatpush1.msra.mxu0 0.0
        %3069 = vmatprep.subr.mxu0 0.0
        %3070 = vmatpush1.msra.mxu0 0.0
        %3071 = vmatprep.subr.mxu0 0.0
        %3072 = vmatpush1.msra.mxu0 0.0
        %3073 = vmatprep.subr.mxu0 0.0
        %3074 = vmatpush1.msra.mxu0 0.0
        %3075 = vmatprep.subr.mxu0 0.0
        %3076 = vmatpush1.msra.mxu0 0.0
        %3077 = vmatprep.subr.mxu0 0.0
        %3078 = vmatpush1.msra.mxu0 0.0
        %3079 = vmatprep.subr.mxu0 0.0
        %3080 = vmatpush1.msra.mxu0 0.0
        %3081 = vmatprep.mubr.f32.mxu0 %v2922
        %3082 = vmatmul.mubr.f32.gmra.mrb[0].mxu0 %v2838
        %v3083 = vpop.f32.mrb[0].mxu0
        %v3084 = vadd.f32 0.0, %v3083
        %v3085 = vpop.f32.mrb[0].mxu0
        %3086 = vmatprep.mubr.f32.mxu0 %v2925
        %3087 = vmatmul.mubr.f32.gmra.mrb[0].mxu0 %v2840
        %v3088 = vpop.f32.mrb[0].mxu0
        %v3089 = vadd.f32 0.0, %v3088
        %v3090 = vpop.f32.mrb[0].mxu0
        %3091 = vmatprep.mubr.f32.mxu0 %v2928
        %3092 = vmatmul.mubr.f32.gmra.mrb[0].mxu0 %v2842
        %v3093 = vpop.f32.mrb[0].mxu0
        %v3094 = vadd.f32 0.0, %v3093
        %v3095 = vpop.f32.mrb[0].mxu0
        %3096 = vmatprep.mubr.f32.mxu0 %v2931
        %3097 = vmatmul.mubr.f32.gmra.mrb[0].mxu0 %v2844
        %v3098 = vpop.f32.mrb[0].mxu0
        %v3099 = vadd.f32 0.0, %v3098
        %v3100 = vpop.f32.mrb[0].mxu0
        %3101 = vmatprep.mubr.f32.mxu0 %v2934
        %3102 = vmatmul.mubr.f32.gmra.mrb[0].mxu0 %v2846
        %v3103 = vpop.f32.mrb[0].mxu0
        %v3104 = vadd.f32 0.0, %v3103
        %v3105 = vpop.f32.mrb[0].mxu0
        %3106 = vmatprep.mubr.f32.mxu0 %v2937
        %3107 = vmatmul.mubr.f32.gmra.mrb[0].mxu0 %v2848
        %v3108 = vpop.f32.mrb[0].mxu0
        %v3109 = vadd.f32 0.0, %v3108
        %v3110 = vpop.f32.mrb[0].mxu0
        %3111 = vmatprep.mubr.f32.mxu0 %v2940
        %3112 = vmatmul.mubr.f32.gmra.mrb[0].mxu0 %v2850
        %v3113 = vpop.f32.mrb[0].mxu0
        %v3114 = vadd.f32 0.0, %v3113
        %v3115 = vpop.f32.mrb[0].mxu0
        %3116 = vmatprep.mubr.f32.mxu0 %v2943
        %3117 = vmatmul.mubr.f32.gmra.mrb[0].mxu0 %v2852
        %v3118 = vpop.f32.mrb[0].mxu0
        %v3119 = vadd.f32 0.0, %v3118
        %v3120 = vpop.f32.mrb[0].mxu0
        %3121 = vmatprep.mubr.f32.mxu0 %v2946
        %3122 = vmatmul.mubr.f32.gmra.mrb[0].mxu0 %v2854
        %v3123 = vpop.f32.mrb[0].mxu0
        %v3124 = vadd.f32 0.0, %v3123
        %v3125 = vpop.f32.mrb[0].mxu0
        %3126 = vmatprep.mubr.f32.mxu0 %v2949
        %3127 = vmatmul.mubr.f32.gmra.mrb[0].mxu0 %v2856
        %v3128 = vpop.f32.mrb[0].mxu0
        %v3129 = vadd.f32 0.0, %v3128
        %v3130 = vpop.f32.mrb[0].mxu0
        %3131 = vmatprep.mubr.f32.mxu0 %v2952
        %3132 = vmatmul.mubr.f32.gmra.mrb[0].mxu0 %v2858
        %v3133 = vpop.f32.mrb[0].mxu0
        %v3134 = vadd.f32 0.0, %v3133
        %v3135 = vpop.f32.mrb[0].mxu0
        %3136 = vmatprep.mubr.f32.mxu0 %v2955
        %3137 = vmatmul.mubr.f32.gmra.mrb[0].mxu0 %v2860
        %v3138 = vpop.f32.mrb[0].mxu0
        %v3139 = vadd.f32 0.0, %v3138
        %v3140 = vpop.f32.mrb[0].mxu0
        %3141 = vmatprep.mubr.f32.mxu0 %v2958
        %3142 = vmatmul.mubr.f32.gmra.mrb[0].mxu0 %v2862
        %v3143 = vpop.f32.mrb[0].mxu0
        %v3144 = vadd.f32 0.0, %v3143
        %v3145 = vpop.f32.mrb[0].mxu0
        %3146 = vmatprep.mubr.f32.mxu0 %v2961
        %3147 = vmatmul.mubr.f32.gmra.mrb[0].mxu0 %v2864
        %v3148 = vpop.f32.mrb[0].mxu0
        %v3149 = vadd.f32 0.0, %v3148
        %v3150 = vpop.f32.mrb[0].mxu0
        %3151 = vmatprep.mubr.f32.mxu0 %v2964
        %3152 = vmatmul.mubr.f32.gmra.mrb[0].mxu0 %v2866
        %v3153 = vpop.f32.mrb[0].mxu0
        %v3154 = vadd.f32 0.0, %v3153
        %v3155 = vpop.f32.mrb[0].mxu0
        %3156 = vmatprep.mubr.f32.mxu0 %v2967
        %3157 = vmatmul.mubr.f32.gmra.mrb[0].mxu0 %v2868
        %v3158 = vpop.f32.mrb[0].mxu0
        %v3159 = vadd.f32 0.0, %v3158
        %v3160 = vpop.f32.mrb[0].mxu0
        %3161 = vmatprep.mubr.f32.mxu0 %v2970
        %3162 = vmatmul.mubr.f32.gmra.mrb[0].mxu0 %v2870
        %v3163 = vpop.f32.mrb[0].mxu0
        %v3164 = vadd.f32 0.0, %v3163
        %v3165 = vpop.f32.mrb[0].mxu0
        %3166 = vmatprep.mubr.f32.mxu0 %v2973
        %3167 = vmatmul.mubr.f32.gmra.mrb[0].mxu0 %v2872
        %v3168 = vpop.f32.mrb[0].mxu0
        %v3169 = vadd.f32 0.0, %v3168
        %v3170 = vpop.f32.mrb[0].mxu0
        %3171 = vmatprep.mubr.f32.mxu0 %v2976
        %3172 = vmatmul.mubr.f32.gmra.mrb[0].mxu0 %v2874
        %v3173 = vpop.f32.mrb[0].mxu0
        %v3174 = vadd.f32 0.0, %v3173
        %v3175 = vpop.f32.mrb[0].mxu0
        %3176 = vmatprep.mubr.f32.mxu0 %v2979
        %3177 = vmatmul.mubr.f32.gmra.mrb[0].mxu0 %v2876
        %v3178 = vpop.f32.mrb[0].mxu0
        %v3179 = vadd.f32 0.0, %v3178
        %v3180 = vpop.f32.mrb[0].mxu0
        %3181 = vmatprep.mubr.f32.mxu0 %v2982
        %3182 = vmatmul.mubr.f32.gmra.mrb[0].mxu0 %v2878
        %v3183 = vpop.f32.mrb[0].mxu0
        %v3184 = vadd.f32 0.0, %v3183
        %v3185 = vpop.f32.mrb[0].mxu0
        %3186 = vmatprep.mubr.f32.mxu0 %v2985
        %3187 = vmatmul.mubr.f32.gmra.mrb[0].mxu0 %v2880
        %v3188 = vpop.f32.mrb[0].mxu0
        %v3189 = vadd.f32 0.0, %v3188
        %v3190 = vpop.f32.mrb[0].mxu0
        %3191 = vmatprep.mubr.f32.mxu0 %v2988
        %3192 = vmatmul.mubr.f32.gmra.mrb[0].mxu0 %v2882
        %v3193 = vpop.f32.mrb[0].mxu0
        %v3194 = vadd.f32 0.0, %v3193
        %v3195 = vpop.f32.mrb[0].mxu0
        %3196 = vmatprep.mubr.f32.mxu0 %v2991
        %3197 = vmatmul.mubr.f32.gmra.mrb[0].mxu0 %v2884
        %v3198 = vpop.f32.mrb[0].mxu0
        %v3199 = vadd.f32 0.0, %v3198
        %v3200 = vpop.f32.mrb[0].mxu0
        %3201 = vmatprep.mubr.f32.mxu0 %v2994
        %3202 = vmatmul.mubr.f32.gmra.mrb[0].mxu0 %v2886
        %v3203 = vpop.f32.mrb[0].mxu0
        %v3204 = vadd.f32 0.0, %v3203
        %v3205 = vpop.f32.mrb[0].mxu0
        %3206 = vmatprep.mubr.f32.mxu0 %v2997
        %3207 = vmatmul.mubr.f32.gmra.mrb[0].mxu0 %v2888
        %v3208 = vpop.f32.mrb[0].mxu0
        %v3209 = vadd.f32 0.0, %v3208
        %v3210 = vpop.f32.mrb[0].mxu0
        %3211 = vmatprep.mubr.f32.mxu0 %v3000
        %3212 = vmatmul.mubr.f32.gmra.mrb[0].mxu0 %v2890
        %v3213 = vpop.f32.mrb[0].mxu0
        %v3214 = vadd.f32 0.0, %v3213
        %v3215 = vpop.f32.mrb[0].mxu0
        %3216 = vmatprep.mubr.f32.mxu0 %v3003
        %3217 = vmatmul.mubr.f32.gmra.mrb[0].mxu0 %v2892
        %v3218 = vpop.f32.mrb[0].mxu0
        %v3219 = vadd.f32 0.0, %v3218
        %v3220 = vpop.f32.mrb[0].mxu0
        %3221 = vmatprep.mubr.f32.mxu0 %v3006
        %3222 = vmatmul.mubr.f32.gmra.mrb[0].mxu0 %v2894
        %v3223 = vpop.f32.mrb[0].mxu0
        %v3224 = vadd.f32 0.0, %v3223
        %v3225 = vpop.f32.mrb[0].mxu0
        %3226 = vmatprep.mubr.f32.mxu0 %v3009
        %3227 = vmatmul.mubr.f32.gmra.mrb[0].mxu0 %v2896
        %v3228 = vpop.f32.mrb[0].mxu0
        %v3229 = vadd.f32 0.0, %v3228
        %v3230 = vpop.f32.mrb[0].mxu0
        %3231 = vmatprep.mubr.f32.mxu0 %v3012
        %3232 = vmatmul.mubr.f32.gmra.mrb[0].mxu0 %v2898
        %v3233 = vpop.f32.mrb[0].mxu0
        %v3234 = vadd.f32 0.0, %v3233
        %v3235 = vpop.f32.mrb[0].mxu0
        %3236 = vmatprep.mubr.f32.mxu0 %v3015
        %3237 = vmatmul.mubr.f32.gmra.mrb[0].mxu0 %v2900
        %v3238 = vpop.f32.mrb[0].mxu0
        %v3239 = vadd.f32 0.0, %v3238
        %v3240 = vpop.f32.mrb[0].mxu0
        %3241 = vdwg.mxu0
        %3242 = vxpose.xlu0.b32.start [1/16] %v3084, 128
        %3243 = vxpose.xlu0.b32.cont [2/16] %v3089, 128
        %3244 = vxpose.xlu0.b32.cont [3/16] %v3094, 128
        %3245 = vxpose.xlu0.b32.cont [4/16] %v3099, 128
        %3246 = vxpose.xlu0.b32.cont [5/16] %v3104, 128
        %3247 = vxpose.xlu0.b32.cont [6/16] %v3109, 128
        %3248 = vxpose.xlu0.b32.cont [7/16] %v3114, 128
        %3249 = vxpose.xlu0.b32.cont [8/16] %v3119, 128
        %3250 = vxpose.xlu0.b32.cont [9/16] %v3124, 128
        %3251 = vxpose.xlu0.b32.cont [10/16] %v3129, 128
        %3252 = vxpose.xlu0.b32.cont [11/16] %v3134, 128
        %3253 = vxpose.xlu0.b32.cont [12/16] %v3139, 128
        %3254 = vxpose.xlu0.b32.cont [13/16] %v3144, 128
        %3255 = vxpose.xlu0.b32.cont [14/16] %v3149, 128
        %3256 = vxpose.xlu0.b32.cont [15/16] %v3154, 128
        %3257 = vxpose.xlu0.b32.end [16/16] %v3159, 128
        %v3258 = vpop.trf.xlu0
        %v3259 = vpop.trf.xlu0
        %v3260 = vpop.trf.xlu0
        %v3261 = vpop.trf.xlu0
        %v3262 = vpop.trf.xlu0
        %v3263 = vpop.trf.xlu0
        %v3264 = vpop.trf.xlu0
        %v3265 = vpop.trf.xlu0
        %v3266 = vpop.trf.xlu0
        %v3267 = vpop.trf.xlu0
        %v3268 = vpop.trf.xlu0
        %v3269 = vpop.trf.xlu0
        %v3270 = vpop.trf.xlu0
        %v3271 = vpop.trf.xlu0
        %v3272 = vpop.trf.xlu0
        %v3273 = vpop.trf.xlu0
        %3274 = vxpose.xlu0.b32.start [1/16] %v3164, 128
        %3275 = vxpose.xlu0.b32.cont [2/16] %v3169, 128
        %3276 = vxpose.xlu0.b32.cont [3/16] %v3174, 128
        %3277 = vxpose.xlu0.b32.cont [4/16] %v3179, 128
        %3278 = vxpose.xlu0.b32.cont [5/16] %v3184, 128
        %3279 = vxpose.xlu0.b32.cont [6/16] %v3189, 128
        %3280 = vxpose.xlu0.b32.cont [7/16] %v3194, 128
        %3281 = vxpose.xlu0.b32.cont [8/16] %v3199, 128
        %3282 = vxpose.xlu0.b32.cont [9/16] %v3204, 128
        %3283 = vxpose.xlu0.b32.cont [10/16] %v3209, 128
        %3284 = vxpose.xlu0.b32.cont [11/16] %v3214, 128
        %3285 = vxpose.xlu0.b32.cont [12/16] %v3219, 128
        %3286 = vxpose.xlu0.b32.cont [13/16] %v3224, 128
        %3287 = vxpose.xlu0.b32.cont [14/16] %v3229, 128
        %3288 = vxpose.xlu0.b32.cont [15/16] %v3234, 128
        %3289 = vxpose.xlu0.b32.end [16/16] %v3239, 128
        %v3290 = vpop.trf.xlu0
        %v3291 = vpop.trf.xlu0
        %v3292 = vpop.trf.xlu0
        %v3293 = vpop.trf.xlu0
        %v3294 = vpop.trf.xlu0
        %v3295 = vpop.trf.xlu0
        %v3296 = vpop.trf.xlu0
        %v3297 = vpop.trf.xlu0
        %v3298 = vpop.trf.xlu0
        %v3299 = vpop.trf.xlu0
        %v3300 = vpop.trf.xlu0
        %v3301 = vpop.trf.xlu0
        %v3302 = vpop.trf.xlu0
        %v3303 = vpop.trf.xlu0
        %v3304 = vpop.trf.xlu0
        %v3305 = vpop.trf.xlu0
        %3306 = vst [vmem:[%s136] sm:$0xff] %v3258
        %3307 = vst [vmem:[%s136 + $0x8] sm:$0xff] %v3290
        %s3308 = sand.u32 %s71, 1
        %s3309 = scalar_lea.sflag [#allocation4], %s3308
        %s3310 = sand.u32 %s71, 1
        %s3311 = smul.addr %s3310, 16
        %s3312 = scalar_lea.vmem [#allocation3], %s3311
        // Predicated region
        $region29: #{tpu_custom_call.1} parent=27 // pred_check
          %p3313 = pneg %p81
        $region30: #{tpu_custom_call.1} parent=27 // pred_check_branch
          %3315 = sbr.rel (%p3313) target = $region32
        $region31: #{tpu_custom_call.1} parent=27 // pred_region
          %s3317 = ssub.s32 256, 256
          %3318 = vsyncadd %s3309, %s3317
          %s3319 = smul.addr %s16, 2
          %s3320 = smul.addr %s3319, 128
          %s3321 = scalar_lea.hbm %s2, %s3320
          %s3323 = sshll.u32 %s3312, 4
          %s3324 = int_to_ptr.vmem [resolvable:$true] %s3323
          %3326 = dma.vmem_to_hbm [thread:$0]  %s3324, 256, %s3321, %s3309
        $region32: #{tpu_custom_call.1} parent=27 // pred_fallthru
          _
      $region28: #{tpu_custom_call.1} parent=5 // pred_fallthru
        _
      %p3327 = scmp.le.s32.totalorder 2, %s11
      // Predicated region
      $region33: #{tpu_custom_call.1} parent=5 // pred_check
        %p3328 = pneg %p3327
      $region34: #{tpu_custom_call.1} parent=5 // pred_check_branch
        %3330 = sbr.rel (%p3328) target = $region36
      $region35: #{tpu_custom_call.1} parent=5 // pred_region
        %s3331 = ssub.s32 %s11, 2
        // Predicated region
        $region37: #{tpu_custom_call.1} parent=35 // pred_check
          %p3332 = pneg %p87
        $region38: #{tpu_custom_call.1} parent=35 // pred_check_branch
          %3334 = sbr.rel (%p3332) target = $region40
        $region39: #{tpu_custom_call.1} parent=35 // pred_region
          %s3335 = sand.u32 %s72, 1
          %s3336 = scalar_lea.sflag [#allocation4], %s3335
          %s3337 = sand.u32 %s72, 1
          %s3338 = smul.addr %s3337, 16
          %s3339 = scalar_lea.vmem [#allocation3], %s3338
          %3340 = dma.done %s3336, 256
        $region40: #{tpu_custom_call.1} parent=35 // pred_fallthru
          _
      $region36: #{tpu_custom_call.1} parent=5 // pred_fallthru
        _
    $region6: #{tpu_custom_call.1} parent=1 // loop_footer
      %s15 = sadd.s32 1, %s11
    $region7: #{tpu_custom_call.1} parent=1 // loop_footer_branch
      %10 = sbr.rel target = $region3
    $region8: #{tpu_custom_call.1} parent=1 // loop_exit
      _
    %3341 = vsyncpa [#allocation4], 1
    %s3342 = scalar_lea.sflag [#allocation4], 1
    %3343 = vsyncpa %s3342, 1

</llo_original>
